<compile_context>
chip_gen: v6e
topology: v6e:2x2x1
jax: 0.10.0
libtpu: 0.0.40
codegen_flags: <defaults>
</compile_context>

<pallas_src>
from functools import partial

import jax
import jax.numpy as jnp
from jax.experimental import pallas as pl
from jax.experimental.pallas import tpu as pltpu


# ----------------------------- Pallas kernels ------------------------------

def _encoder_kernel(emb2d_ref, wih_f_ref, whh_f_ref, b_f_ref,
                    wih_b_ref, whh_b_ref, b_b_ref,
                    fc_h_w_ref, fc_h_b_ref, fc_c_w_ref, fc_c_b_ref,
                    encf_ref, encb_ref, hid_ref, cell_ref):
    # emb2d: (S*NP, E); enc{f,b}: (S, NP, H); hid/cell: (NP, H)
    S, NP, H = encf_ref.shape

    # Hoisted input projections: one batched matmul per direction over all steps.
    emb2d = emb2d_ref[...]
    xf = jnp.dot(emb2d, wih_f_ref[...], preferred_element_type=jnp.float32) + b_f_ref[...]
    xb = jnp.dot(emb2d, wih_b_ref[...], preferred_element_type=jnp.float32) + b_b_ref[...]
    whh_f = whh_f_ref[...]
    whh_b = whh_b_ref[...]

    def lstm_step(x_proj, h, c, whh):
        # PyTorch gate order (i, f, g, o); 4H = 128 keeps gates in one lane tile.
        gates = x_proj + jnp.dot(h, whh, preferred_element_type=jnp.float32)
        i = jax.nn.sigmoid(gates[:, 0 * H:1 * H])
        f = jax.nn.sigmoid(gates[:, 1 * H:2 * H])
        g = jnp.tanh(gates[:, 2 * H:3 * H])
        o = jax.nn.sigmoid(gates[:, 3 * H:4 * H])
        c_new = f * c + i * g
        return o * jnp.tanh(c_new), c_new

    z = jnp.zeros((NP, H), jnp.float32)
    h_f, c_f, h_b, c_b = z, z, z, z
    for t in range(S):                       # short static trip count -> full unroll
        tb = S - 1 - t
        h_f, c_f = lstm_step(xf[t * NP:(t + 1) * NP, :], h_f, c_f, whh_f)
        h_b, c_b = lstm_step(xb[tb * NP:(tb + 1) * NP, :], h_b, c_b, whh_b)
        encf_ref[t] = h_f
        encb_ref[tb] = h_b

    # hidden/cell bridge: fc over concat(final forward, final backward) state.
    h_cat = jnp.concatenate([h_f, h_b], axis=1)
    c_cat = jnp.concatenate([c_f, c_b], axis=1)
    hid_ref[...] = (jnp.dot(h_cat, fc_h_w_ref[...], preferred_element_type=jnp.float32)
                    + fc_h_b_ref[...])
    cell_ref[...] = (jnp.dot(c_cat, fc_c_w_ref[...], preferred_element_type=jnp.float32)
                     + fc_c_b_ref[...])


def _decoder_kernel(use_tf_ref, be_ref, tgt_oh_ref, encf_ref, encb_ref,
                    h0_ref, c0_ref, emb_ref, w_stk_ref, b_ref,
                    weh_ref, weef_ref, weebk_ref, fcw_ref, fcb_ref,
                    out_ref, *, valid_vocab):
    # out: (T, NP, VP); enc{f,b}: (S, NP, H); all decoder weights VMEM-resident.
    T, NP, VP = out_ref.shape
    S, _, H = encf_ref.shape

    # ---- one-time hoisted loads / step-invariant precomputation ----
    enc_f = encf_ref[...]
    enc_b = encb_ref[...]
    be = be_ref[0, 0]
    wee_f = weef_ref[...].reshape(1, 1, H)
    wee_bk = weebk_ref[...].reshape(1, 1, H)
    # encoder-side part of the additive-attention energy (independent of step t)
    e_score = (jnp.sum(enc_f * wee_f, axis=2, keepdims=True)
               + jnp.sum(enc_b * wee_bk, axis=2, keepdims=True) + be)    # (S, NP, 1)
    weh = jnp.broadcast_to(weh_ref[...], (NP, H))
    emb_w = emb_ref[...]                                                 # (VP, E)
    w_stk = w_stk_ref[...]                                               # (2H+E+H, 4H)
    b_full = jnp.broadcast_to(b_ref[...], (NP, 4 * H))
    fc_w = fcw_ref[...]                                                  # (H, VP)
    fc_b = jnp.broadcast_to(fcb_ref[...], (NP, VP))
    col_i = jax.lax.broadcasted_iota(jnp.int32, (NP, VP), 1)
    col_f = col_i.astype(jnp.float32)
    valid = col_i < valid_vocab
    neg = jnp.float32(-1e30)

    out_ref[0] = jnp.zeros((NP, VP), jnp.float32)            # outputs[0] stays zero

    hidden = h0_ref[...]
    cell = c0_ref[...]
    x_oh = tgt_oh_ref[0]                                      # x = target[0] (one-hot)

    for t in range(1, T):                    # short static trip count -> full unroll
        # --- additive attention over encoder states ---
        h_score = jnp.sum(hidden * weh, axis=1, keepdims=True)          # (NP, 1)
        energy = jnp.maximum(e_score + h_score[None, :, :], 0.0)        # (S, NP, 1)
        m = jnp.max(energy, axis=0, keepdims=True)
        p = jnp.exp(energy - m)
        denom = jnp.sum(p, axis=0, keepdims=True)
        attn = p * pl.reciprocal(denom, approx=True)                    # (S, NP, 1)
        ctx_f = jnp.sum(attn * enc_f, axis=0)                           # (NP, H)
        ctx_b = jnp.sum(attn * enc_b, axis=0)                           # (NP, H)

        # --- embedding of current input token via one-hot matmul (no gather) ---
        emb_x = jnp.dot(x_oh, emb_w, preferred_element_type=jnp.float32)  # (NP, E)

        # --- decoder LSTM cell: single fused matmul over [ctx, emb, hidden] ---
        xh = jnp.concatenate([ctx_f, ctx_b, emb_x, hidden], axis=1)     # (NP, 2H+E+H)
        gates = jnp.dot(xh, w_stk, preferred_element_type=jnp.float32) + b_full
        i = jax.nn.sigmoid(gates[:, 0 * H:1 * H])
        f = jax.nn.sigmoid(gates[:, 1 * H:2 * H])
        g = jnp.tanh(gates[:, 2 * H:3 * H])
        o = jax.nn.sigmoid(gates[:, 3 * H:4 * H])
        cell = f * cell + i * g
        hidden = o * jnp.tanh(cell)

        # --- output projection (lane-dense: vocab padded to multiple of 128) ---
        logits = jnp.dot(hidden, fc_w, preferred_element_type=jnp.float32) + fc_b
        out_ref[t] = logits

        # --- greedy best guess (first-occurrence argmax over valid columns) ---
        masked = jnp.where(valid, logits, neg)
        mmax = jnp.max(masked, axis=1, keepdims=True)
        is_max = jnp.logical_and(masked == mmax, valid)
        first_idx = jnp.min(jnp.where(is_max, col_f, jnp.float32(VP)),
                            axis=1, keepdims=True)                      # (NP, 1)
        best_oh = (col_f == first_idx).astype(jnp.float32)              # (NP, VP)

        # --- teacher forcing select (scalar coin per step, from SMEM) ---
        tf = (use_tf_ref[t] > 0).astype(jnp.float32)
        x_oh = tf * tgt_oh_ref[t] + (1.0 - tf) * best_oh


# ----------------------------- wrappers / model ------------------------------

def _vmem():
    return pl.BlockSpec(memory_space=pltpu.MemorySpace.VMEM)


def _smem():
    return pl.BlockSpec(memory_space=pltpu.MemorySpace.SMEM)


def _round_up(x, m):
    return ((x + m - 1) // m) * m


def init_params(key, input_vocab, output_vocab, E, H):
    ks = jax.random.split(key, 20)
    u = lambda k, shape: jax.random.uniform(k, shape, jnp.float32, -0.1, 0.1)
    return dict(
        # encoder
        emb_enc=u(ks[0], (input_vocab, E)),
        enc_wih_f=u(ks[1], (E, 4 * H)), enc_whh_f=u(ks[2], (H, 4 * H)), enc_b_f=u(ks[3], (1, 4 * H)),
        enc_wih_b=u(ks[4], (E, 4 * H)), enc_whh_b=u(ks[5], (H, 4 * H)), enc_b_b=u(ks[6], (1, 4 * H)),
        fc_hidden_w=u(ks[7], (2 * H, H)), fc_hidden_b=u(ks[8], (1, H)),
        fc_cell_w=u(ks[9], (2 * H, H)), fc_cell_b=u(ks[10], (1, H)),
        # decoder
        emb_dec=u(ks[11], (output_vocab, E)),
        dec_wih=u(ks[12], (2 * H + E, 4 * H)), dec_whh=u(ks[13], (H, 4 * H)), dec_b=u(ks[14], (1, 4 * H)),
        weh=u(ks[15], (1, H)),        # energy weight columns acting on decoder hidden
        wee=u(ks[16], (1, 2 * H)),    # energy weight columns acting on encoder states
        be=u(ks[17], (1, 1)),         # energy bias (scalar, SMEM)
        fc_w=u(ks[18], (H, output_vocab)), fc_b=u(ks[19], (1, output_vocab)),
    )


@partial(jax.jit, static_argnames=("target_vocab_size", "teacher_force_ratio"))
def seq2seq_forward(params, source, target, target_vocab_size,
                    teacher_force_ratio=0.5, key=None):
    S, N = source.shape
    T, _ = target.shape
    H = params["fc_hidden_w"].shape[1]
    E = params["emb_enc"].shape[1]
    V = target_vocab_size
    NP = _round_up(max(N, 8), 8)          # pad batch to a full f32 sublane tile
    VP = _round_up(V, 128)                # pad vocab to lane-dense multiple of 128

    src_p = jnp.pad(source, ((0, 0), (0, NP - N)))
    tgt_p = jnp.pad(target, ((0, 0), (0, NP - N)))

    # ---- fused bidirectional encoder: one pallas_call for the whole recurrence ----
    emb2d = params["emb_enc"][src_p].reshape(S * NP, E)        # dropout = identity
    enc_f, enc_b, hidden, cell = pl.pallas_call(
        _encoder_kernel,
        out_shape=(jax.ShapeDtypeStruct((S, NP, H), jnp.float32),
                   jax.ShapeDtypeStruct((S, NP, H), jnp.float32),
                   jax.ShapeDtypeStruct((NP, H), jnp.float32),
                   jax.ShapeDtypeStruct((NP, H), jnp.float32)),
        in_specs=[_vmem()] * 11,
        out_specs=(_vmem(), _vmem(), _vmem(), _vmem()),
    )(emb2d,
      params["enc_wih_f"], params["enc_whh_f"], params["enc_b_f"],
      params["enc_wih_b"], params["enc_whh_b"], params["enc_b_b"],
      params["fc_hidden_w"], params["fc_hidden_b"],
      params["fc_cell_w"], params["fc_cell_b"])

    # ---- one-time decoder prep (outside the recurrence) ----
    coin = jax.random.uniform(key, (T,))
    use_tf = (coin < teacher_force_ratio).astype(jnp.int32)
    tgt_oh = jax.nn.one_hot(tgt_p, VP, dtype=jnp.float32)                 # (T, NP, VP)
    emb_dec_pad = jnp.pad(params["emb_dec"], ((0, VP - V), (0, 0)))       # (VP, E)
    w_stk = jnp.concatenate([params["dec_wih"], params["dec_whh"]], axis=0)
    fc_w_pad = jnp.pad(params["fc_w"], ((0, 0), (0, VP - V)))
    fc_b_pad = jnp.pad(params["fc_b"], ((0, 0), (0, VP - V)))
    wee_f = params["wee"][:, :H]
    wee_bk = params["wee"][:, H:]

    # ---- fused decoder: attention + LSTM + projection + argmax + TF select ----
    out_pad = pl.pallas_call(
        partial(_decoder_kernel, valid_vocab=V),
        out_shape=jax.ShapeDtypeStruct((T, NP, VP), jnp.float32),
        in_specs=[_smem(), _smem()] + [_vmem()] * 13,
        out_specs=_vmem(),
    )(use_tf, params["be"], tgt_oh, enc_f, enc_b, hidden, cell,
      emb_dec_pad, w_stk, params["dec_b"], params["weh"], wee_f, wee_bk,
      fc_w_pad, fc_b_pad)

    return out_pad[:, :N, :V]


# ----------------------------------- main -----------------------------------

if __name__ == "__main__":
    key = jax.random.PRNGKey(0)
    k_params, k_src, k_tgt, k_coin = jax.random.split(key, 4)

    INPUT_VOCAB = 24
    OUTPUT_VOCAB = 20          # target_vocab_size
    EMB = 16
    HIDDEN = 32
    SRC_LEN, TGT_LEN, BATCH = 8, 6, 2

    params = init_params(k_params, INPUT_VOCAB, OUTPUT_VOCAB, EMB, HIDDEN)
    source = jax.random.randint(k_src, (SRC_LEN, BATCH), 0, INPUT_VOCAB, dtype=jnp.int32)
    target = jax.random.randint(k_tgt, (TGT_LEN, BATCH), 0, OUTPUT_VOCAB, dtype=jnp.int32)

    outputs = seq2seq_forward(params, source, target,
                              target_vocab_size=OUTPUT_VOCAB,
                              teacher_force_ratio=0.5, key=k_coin)
    jax.block_until_ready(outputs)

    assert outputs.shape == (TGT_LEN, BATCH, OUTPUT_VOCAB)
    assert bool(jnp.all(jnp.isfinite(outputs)))
    print("KERNEL_OK")
</pallas_src>

<mosaic_0001>
module attributes {stable_mosaic.version = 11 : i64} {
  func.func @_decoder_kernel(%arg0: memref<6xi32, #tpu.memory_space<smem>>, %arg1: memref<1x1xf32, #tpu.memory_space<smem>>, %arg2: memref<6x8x128xf32, #tpu.memory_space<vmem>>, %arg3: memref<8x8x32xf32, #tpu.memory_space<vmem>>, %arg4: memref<8x8x32xf32, #tpu.memory_space<vmem>>, %arg5: memref<8x32xf32, #tpu.memory_space<vmem>>, %arg6: memref<8x32xf32, #tpu.memory_space<vmem>>, %arg7: memref<128x16xf32, #tpu.memory_space<vmem>>, %arg8: memref<112x128xf32, #tpu.memory_space<vmem>>, %arg9: memref<1x128xf32, #tpu.memory_space<vmem>>, %arg10: memref<1x32xf32, #tpu.memory_space<vmem>>, %arg11: memref<1x32xf32, #tpu.memory_space<vmem>>, %arg12: memref<1x32xf32, #tpu.memory_space<vmem>>, %arg13: memref<32x128xf32, #tpu.memory_space<vmem>>, %arg14: memref<1x128xf32, #tpu.memory_space<vmem>>, %arg15: memref<6x8x128xf32, #tpu.memory_space<vmem>>) attributes {dimension_semantics = [], scalar_prefetch = 0 : i64, scratch_operands = 0 : i64, tpu.core_type = #tpu.core_type<tc>} {
    %c0 = arith.constant 0 : index
    %c0_0 = arith.constant 0 : index
    %c0_1 = arith.constant 0 : index
    %0 = vector.load %arg3[%c0, %c0_0, %c0_1] : memref<8x8x32xf32, #tpu.memory_space<vmem>>, vector<8x8x32xf32>
    %c0_2 = arith.constant 0 : index
    %c0_3 = arith.constant 0 : index
    %c0_4 = arith.constant 0 : index
    %1 = vector.load %arg4[%c0_2, %c0_3, %c0_4] : memref<8x8x32xf32, #tpu.memory_space<vmem>>, vector<8x8x32xf32>
    %c0_5 = arith.constant 0 : index
    %c0_6 = arith.constant 0 : index
    %2 = memref.load %arg1[%c0_5, %c0_6] : memref<1x1xf32, #tpu.memory_space<smem>>
    %c0_7 = arith.constant 0 : index
    %c0_8 = arith.constant 0 : index
    %3 = vector.load %arg11[%c0_7, %c0_8] : memref<1x32xf32, #tpu.memory_space<vmem>>, vector<1x32xf32>
    %4 = vector.shape_cast %3 : vector<1x32xf32> to vector<1x1x32xf32>
    %c0_9 = arith.constant 0 : index
    %c0_10 = arith.constant 0 : index
    %5 = vector.load %arg12[%c0_9, %c0_10] : memref<1x32xf32, #tpu.memory_space<vmem>>, vector<1x32xf32>
    %6 = vector.shape_cast %5 : vector<1x32xf32> to vector<1x1x32xf32>
    %7 = vector.broadcast %4 : vector<1x1x32xf32> to vector<8x8x32xf32>
    %8 = arith.mulf %0, %7 : vector<8x8x32xf32>
    %cst = arith.constant dense<0.000000e+00> : vector<8x8xf32>
    %9 = vector.multi_reduction <add>, %8, %cst [2] : vector<8x8x32xf32> to vector<8x8xf32>
    %10 = vector.shape_cast %9 : vector<8x8xf32> to vector<8x8x1xf32>
    %11 = vector.broadcast %6 : vector<1x1x32xf32> to vector<8x8x32xf32>
    %12 = arith.mulf %1, %11 : vector<8x8x32xf32>
    %cst_11 = arith.constant dense<0.000000e+00> : vector<8x8xf32>
    %13 = vector.multi_reduction <add>, %12, %cst_11 [2] : vector<8x8x32xf32> to vector<8x8xf32>
    %14 = vector.shape_cast %13 : vector<8x8xf32> to vector<8x8x1xf32>
    %15 = arith.addf %10, %14 : vector<8x8x1xf32>
    %16 = vector.broadcast %2 : f32 to vector<8x8x1xf32>
    %17 = arith.addf %15, %16 : vector<8x8x1xf32>
    %c0_12 = arith.constant 0 : index
    %c0_13 = arith.constant 0 : index
    %18 = vector.load %arg10[%c0_12, %c0_13] : memref<1x32xf32, #tpu.memory_space<vmem>>, vector<1x32xf32>
    %19 = vector.shape_cast %18 : vector<1x32xf32> to vector<1x32xf32>
    %20 = vector.broadcast %19 : vector<1x32xf32> to vector<8x32xf32>
    %c0_14 = arith.constant 0 : index
    %c0_15 = arith.constant 0 : index
    %21 = vector.load %arg7[%c0_14, %c0_15] : memref<128x16xf32, #tpu.memory_space<vmem>>, vector<128x16xf32>
    %c0_16 = arith.constant 0 : index
    %c0_17 = arith.constant 0 : index
    %22 = vector.load %arg8[%c0_16, %c0_17] : memref<112x128xf32, #tpu.memory_space<vmem>>, vector<112x128xf32>
    %c0_18 = arith.constant 0 : index
    %c0_19 = arith.constant 0 : index
    %23 = vector.load %arg9[%c0_18, %c0_19] : memref<1x128xf32, #tpu.memory_space<vmem>>, vector<1x128xf32>
    %24 = vector.shape_cast %23 : vector<1x128xf32> to vector<1x128xf32>
    %25 = vector.broadcast %24 : vector<1x128xf32> to vector<8x128xf32>
    %c0_20 = arith.constant 0 : index
    %c0_21 = arith.constant 0 : index
    %26 = vector.load %arg13[%c0_20, %c0_21] : memref<32x128xf32, #tpu.memory_space<vmem>>, vector<32x128xf32>
    %c0_22 = arith.constant 0 : index
    %c0_23 = arith.constant 0 : index
    %27 = vector.load %arg14[%c0_22, %c0_23] : memref<1x128xf32, #tpu.memory_space<vmem>>, vector<1x128xf32>
    %28 = vector.shape_cast %27 : vector<1x128xf32> to vector<1x128xf32>
    %29 = vector.broadcast %28 : vector<1x128xf32> to vector<8x128xf32>
    %30 = tpu.iota {dimensions = array<i32: 1>} : vector<8x128xi32>
    %31 = arith.sitofp %30 : vector<8x128xi32> to vector<8x128xf32>
    %c20_i32 = arith.constant 20 : i32
    %32 = vector.broadcast %c20_i32 : i32 to vector<8x128xi32>
    %33 = arith.cmpi slt, %30, %32 : vector<8x128xi32>
    %cst_24 = arith.constant 0.000000e+00 : f32
    %34 = vector.broadcast %cst_24 : f32 to vector<8x128xf32>
    %c0_25 = arith.constant 0 : index
    %c0_26 = arith.constant 0 : index
    %c0_27 = arith.constant 0 : index
    %35 = vector.load %arg15[%c0_25, %c0_26, %c0_27] : memref<6x8x128xf32, #tpu.memory_space<vmem>>, vector<1x8x128xf32>
    %36 = vector.shape_cast %35 : vector<1x8x128xf32> to vector<8x128xf32>
    %37 = vector.shape_cast %34 : vector<8x128xf32> to vector<1x8x128xf32>
    tpu.vector_store %arg15[%c0_25, %c0_26, %c0_27], %37 {strides = array<i32>} : memref<6x8x128xf32, #tpu.memory_space<vmem>>, vector<1x8x128xf32>,
    %c0_28 = arith.constant 0 : index
    %c0_29 = arith.constant 0 : index
    %38 = vector.load %arg5[%c0_28, %c0_29] : memref<8x32xf32, #tpu.memory_space<vmem>>, vector<8x32xf32>
    %c0_30 = arith.constant 0 : index
    %c0_31 = arith.constant 0 : index
    %39 = vector.load %arg6[%c0_30, %c0_31] : memref<8x32xf32, #tpu.memory_space<vmem>>, vector<8x32xf32>
    %c0_32 = arith.constant 0 : index
    %c0_33 = arith.constant 0 : index
    %c0_34 = arith.constant 0 : index
    %40 = vector.load %arg2[%c0_32, %c0_33, %c0_34] : memref<6x8x128xf32, #tpu.memory_space<vmem>>, vector<1x8x128xf32>
    %41 = vector.shape_cast %40 : vector<1x8x128xf32> to vector<8x128xf32>
    %42 = arith.mulf %38, %20 : vector<8x32xf32>
    %cst_35 = arith.constant dense<0.000000e+00> : vector<8xf32>
    %43 = vector.multi_reduction <add>, %42, %cst_35 [1] : vector<8x32xf32> to vector<8xf32>
    %44 = vector.shape_cast %43 : vector<8xf32> to vector<8x1xf32>
    %45 = vector.shape_cast %44 : vector<8x1xf32> to vector<1x8x1xf32>
    %46 = vector.broadcast %45 : vector<1x8x1xf32> to vector<8x8x1xf32>
    %47 = arith.addf %17, %46 : vector<8x8x1xf32>
    %cst_36 = arith.constant 0.000000e+00 : f32
    %48 = vector.broadcast %cst_36 : f32 to vector<8x8x1xf32>
    %49 = arith.maximumf %47, %48 : vector<8x8x1xf32>
    %cst_37 = arith.constant dense<0xFF800000> : vector<8x1xf32>
    %50 = vector.multi_reduction <maximumf>, %49, %cst_37 [0] : vector<8x8x1xf32> to vector<8x1xf32>
    %51 = vector.shape_cast %50 : vector<8x1xf32> to vector<1x8x1xf32>
    %52 = vector.broadcast %51 : vector<1x8x1xf32> to vector<8x8x1xf32>
    %53 = arith.subf %49, %52 : vector<8x8x1xf32>
    %54 = math.exp %53 : vector<8x8x1xf32>
    %cst_38 = arith.constant dense<0.000000e+00> : vector<8x1xf32>
    %55 = vector.multi_reduction <add>, %54, %cst_38 [0] : vector<8x8x1xf32> to vector<8x1xf32>
    %56 = vector.shape_cast %55 : vector<8x1xf32> to vector<1x8x1xf32>
    %57 = tpu.reciprocal %56 {approx = true} : vector<1x8x1xf32> -> vector<1x8x1xf32>
    %58 = vector.broadcast %57 : vector<1x8x1xf32> to vector<8x8x1xf32>
    %59 = arith.mulf %54, %58 : vector<8x8x1xf32>
    %60 = vector.broadcast %59 : vector<8x8x1xf32> to vector<8x8x32xf32>
    %61 = arith.mulf %60, %0 : vector<8x8x32xf32>
    %cst_39 = arith.constant dense<0.000000e+00> : vector<8x32xf32>
    %62 = vector.multi_reduction <add>, %61, %cst_39 [0] : vector<8x8x32xf32> to vector<8x32xf32>
    %63 = vector.broadcast %59 : vector<8x8x1xf32> to vector<8x8x32xf32>
    %64 = arith.mulf %63, %1 : vector<8x8x32xf32>
    %cst_40 = arith.constant dense<0.000000e+00> : vector<8x32xf32>
    %65 = vector.multi_reduction <add>, %64, %cst_40 [0] : vector<8x8x32xf32> to vector<8x32xf32>
    %cst_41 = arith.constant dense<0.000000e+00> : vector<8x16xf32>
    %66 = tpu.matmul %41, %21, %cst_41 {dimension_numbers = #tpu.dot_dimension_numbers<[1], [0], [0], [1], [0, 0, 1, 1], [], []>} : vector<8x128xf32>, vector<128x16xf32>, vector<8x16xf32> -> vector<8x16xf32>
    %67 = tpu.concatenate %62, %65, %66, %38 in 1 : vector<8x32xf32>, vector<8x32xf32>, vector<8x16xf32>, vector<8x32xf32> -> vector<8x112xf32>
    %cst_42 = arith.constant dense<0.000000e+00> : vector<8x128xf32>
    %68 = tpu.matmul %67, %22, %cst_42 {dimension_numbers = #tpu.dot_dimension_numbers<[1], [0], [0], [1], [0, 0, 1, 1], [], []>} : vector<8x112xf32>, vector<112x128xf32>, vector<8x128xf32> -> vector<8x128xf32>
    %69 = arith.addf %68, %25 : vector<8x128xf32>
    %70 = vector.extract_strided_slice %69 {offsets = [0, 0], sizes = [8, 32], strides = [1, 1]} : vector<8x128xf32> to vector<8x32xf32>
    %71 = arith.negf %70 : vector<8x32xf32>
    %72 = math.exp %71 : vector<8x32xf32>
    %cst_43 = arith.constant 1.000000e+00 : f32
    %73 = vector.broadcast %cst_43 : f32 to vector<8x32xf32>
    %74 = arith.addf %73, %72 : vector<8x32xf32>
    %75 = arith.divf %73, %74 : vector<8x32xf32>
    %76 = vector.extract_strided_slice %69 {offsets = [0, 32], sizes = [8, 32], strides = [1, 1]} : vector<8x128xf32> to vector<8x32xf32>
    %77 = arith.negf %76 : vector<8x32xf32>
    %78 = math.exp %77 : vector<8x32xf32>
    %cst_44 = arith.constant 1.000000e+00 : f32
    %79 = vector.broadcast %cst_44 : f32 to vector<8x32xf32>
    %80 = arith.addf %79, %78 : vector<8x32xf32>
    %81 = arith.divf %79, %80 : vector<8x32xf32>
    %82 = vector.extract_strided_slice %69 {offsets = [0, 64], sizes = [8, 32], strides = [1, 1]} : vector<8x128xf32> to vector<8x32xf32>
    %83 = math.tanh %82 : vector<8x32xf32>
    %84 = vector.extract_strided_slice %69 {offsets = [0, 96], sizes = [8, 32], strides = [1, 1]} : vector<8x128xf32> to vector<8x32xf32>
    %85 = arith.negf %84 : vector<8x32xf32>
    %86 = math.exp %85 : vector<8x32xf32>
    %cst_45 = arith.constant 1.000000e+00 : f32
    %87 = vector.broadcast %cst_45 : f32 to vector<8x32xf32>
    %88 = arith.addf %87, %86 : vector<8x32xf32>
    %89 = arith.divf %87, %88 : vector<8x32xf32>
    %90 = arith.mulf %81, %39 : vector<8x32xf32>
    %91 = arith.mulf %75, %83 : vector<8x32xf32>
    %92 = arith.addf %90, %91 : vector<8x32xf32>
    %93 = math.tanh %92 : vector<8x32xf32>
    %94 = arith.mulf %89, %93 : vector<8x32xf32>
    %cst_46 = arith.constant dense<0.000000e+00> : vector<8x128xf32>
    %95 = tpu.matmul %94, %26, %cst_46 {dimension_numbers = #tpu.dot_dimension_numbers<[1], [0], [0], [1], [0, 0, 1, 1], [], []>} : vector<8x32xf32>, vector<32x128xf32>, vector<8x128xf32> -> vector<8x128xf32>
    %96 = arith.addf %95, %29 : vector<8x128xf32>
    %c1 = arith.constant 1 : index
    %c0_47 = arith.constant 0 : index
    %c0_48 = arith.constant 0 : index
    %97 = vector.load %arg15[%c1, %c0_47, %c0_48] : memref<6x8x128xf32, #tpu.memory_space<vmem>>, vector<1x8x128xf32>
    %98 = vector.shape_cast %97 : vector<1x8x128xf32> to vector<8x128xf32>
    %99 = vector.shape_cast %96 : vector<8x128xf32> to vector<1x8x128xf32>
    tpu.vector_store %arg15[%c1, %c0_47, %c0_48], %99 {strides = array<i32>} : memref<6x8x128xf32, #tpu.memory_space<vmem>>, vector<1x8x128xf32>,
    %cst_49 = arith.constant -1.000000e+30 : f32
    %100 = vector.broadcast %cst_49 : f32 to vector<8x128xf32>
    %101 = arith.select %33, %96, %100 : vector<8x128xi1>, vector<8x128xf32>
    %cst_50 = arith.constant dense<0xFF800000> : vector<8xf32>
    %102 = vector.multi_reduction <maximumf>, %101, %cst_50 [1] : vector<8x128xf32> to vector<8xf32>
    %103 = vector.shape_cast %102 : vector<8xf32> to vector<8x1xf32>
    %104 = vector.broadcast %103 : vector<8x1xf32> to vector<8x128xf32>
    %105 = arith.cmpf oeq, %101, %104 : vector<8x128xf32>
    %106 = arith.andi %105, %33 : vector<8x128xi1>
    %cst_51 = arith.constant 1.280000e+02 : f32
    %107 = vector.broadcast %cst_51 : f32 to vector<8x128xf32>
    %108 = arith.select %106, %31, %107 : vector<8x128xi1>, vector<8x128xf32>
    %cst_52 = arith.constant dense<0x7F800000> : vector<8xf32>
    %109 = vector.multi_reduction <minimumf>, %108, %cst_52 [1] : vector<8x128xf32> to vector<8xf32>
    %110 = vector.shape_cast %109 : vector<8xf32> to vector<8x1xf32>
    %111 = vector.broadcast %110 : vector<8x1xf32> to vector<8x128xf32>
    %112 = arith.cmpf oeq, %31, %111 : vector<8x128xf32>
    %113 = arith.extui %112 : vector<8x128xi1> to vector<8x128xi32>
    %114 = arith.sitofp %113 : vector<8x128xi32> to vector<8x128xf32>
    %c1_53 = arith.constant 1 : index
    %115 = memref.load %arg0[%c1_53] : memref<6xi32, #tpu.memory_space<smem>>
    %c0_i32 = arith.constant 0 : i32
    %116 = arith.cmpi sgt, %115, %c0_i32 : i32
    %117 = arith.extui %116 : i1 to i32
    %118 = arith.sitofp %117 : i32 to f32
    %c1_54 = arith.constant 1 : index
    %c0_55 = arith.constant 0 : index
    %c0_56 = arith.constant 0 : index
    %119 = vector.load %arg2[%c1_54, %c0_55, %c0_56] : memref<6x8x128xf32, #tpu.memory_space<vmem>>, vector<1x8x128xf32>
    %120 = vector.shape_cast %119 : vector<1x8x128xf32> to vector<8x128xf32>
    %121 = vector.broadcast %118 : f32 to vector<8x128xf32>
    %122 = arith.mulf %121, %120 : vector<8x128xf32>
    %cst_57 = arith.constant 1.000000e+00 : f32
    %123 = arith.subf %cst_57, %118 : f32
    %124 = vector.broadcast %123 : f32 to vector<8x128xf32>
    %125 = arith.mulf %124, %114 : vector<8x128xf32>
    %126 = arith.addf %122, %125 : vector<8x128xf32>
    %127 = arith.mulf %94, %20 : vector<8x32xf32>
    %cst_58 = arith.constant dense<0.000000e+00> : vector<8xf32>
    %128 = vector.multi_reduction <add>, %127, %cst_58 [1] : vector<8x32xf32> to vector<8xf32>
    %129 = vector.shape_cast %128 : vector<8xf32> to vector<8x1xf32>
    %130 = vector.shape_cast %129 : vector<8x1xf32> to vector<1x8x1xf32>
    %131 = vector.broadcast %130 : vector<1x8x1xf32> to vector<8x8x1xf32>
    %132 = arith.addf %17, %131 : vector<8x8x1xf32>
    %cst_59 = arith.constant 0.000000e+00 : f32
    %133 = vector.broadcast %cst_59 : f32 to vector<8x8x1xf32>
    %134 = arith.maximumf %132, %133 : vector<8x8x1xf32>
    %cst_60 = arith.constant dense<0xFF800000> : vector<8x1xf32>
    %135 = vector.multi_reduction <maximumf>, %134, %cst_60 [0] : vector<8x8x1xf32> to vector<8x1xf32>
    %136 = vector.shape_cast %135 : vector<8x1xf32> to vector<1x8x1xf32>
    %137 = vector.broadcast %136 : vector<1x8x1xf32> to vector<8x8x1xf32>
    %138 = arith.subf %134, %137 : vector<8x8x1xf32>
    %139 = math.exp %138 : vector<8x8x1xf32>
    %cst_61 = arith.constant dense<0.000000e+00> : vector<8x1xf32>
    %140 = vector.multi_reduction <add>, %139, %cst_61 [0] : vector<8x8x1xf32> to vector<8x1xf32>
    %141 = vector.shape_cast %140 : vector<8x1xf32> to vector<1x8x1xf32>
    %142 = tpu.reciprocal %141 {approx = true} : vector<1x8x1xf32> -> vector<1x8x1xf32>
    %143 = vector.broadcast %142 : vector<1x8x1xf32> to vector<8x8x1xf32>
    %144 = arith.mulf %139, %143 : vector<8x8x1xf32>
    %145 = vector.broadcast %144 : vector<8x8x1xf32> to vector<8x8x32xf32>
    %146 = arith.mulf %145, %0 : vector<8x8x32xf32>
    %cst_62 = arith.constant dense<0.000000e+00> : vector<8x32xf32>
    %147 = vector.multi_reduction <add>, %146, %cst_62 [0] : vector<8x8x32xf32> to vector<8x32xf32>
    %148 = vector.broadcast %144 : vector<8x8x1xf32> to vector<8x8x32xf32>
    %149 = arith.mulf %148, %1 : vector<8x8x32xf32>
    %cst_63 = arith.constant dense<0.000000e+00> : vector<8x32xf32>
    %150 = vector.multi_reduction <add>, %149, %cst_63 [0] : vector<8x8x32xf32> to vector<8x32xf32>
    %cst_64 = arith.constant dense<0.000000e+00> : vector<8x16xf32>
    %151 = tpu.matmul %126, %21, %cst_64 {dimension_numbers = #tpu.dot_dimension_numbers<[1], [0], [0], [1], [0, 0, 1, 1], [], []>} : vector<8x128xf32>, vector<128x16xf32>, vector<8x16xf32> -> vector<8x16xf32>
    %152 = tpu.concatenate %147, %150, %151, %94 in 1 : vector<8x32xf32>, vector<8x32xf32>, vector<8x16xf32>, vector<8x32xf32> -> vector<8x112xf32>
    %cst_65 = arith.constant dense<0.000000e+00> : vector<8x128xf32>
    %153 = tpu.matmul %152, %22, %cst_65 {dimension_numbers = #tpu.dot_dimension_numbers<[1], [0], [0], [1], [0, 0, 1, 1], [], []>} : vector<8x112xf32>, vector<112x128xf32>, vector<8x128xf32> -> vector<8x128xf32>
    %154 = arith.addf %153, %25 : vector<8x128xf32>
    %155 = vector.extract_strided_slice %154 {offsets = [0, 0], sizes = [8, 32], strides = [1, 1]} : vector<8x128xf32> to vector<8x32xf32>
    %156 = arith.negf %155 : vector<8x32xf32>
    %157 = math.exp %156 : vector<8x32xf32>
    %cst_66 = arith.constant 1.000000e+00 : f32
    %158 = vector.broadcast %cst_66 : f32 to vector<8x32xf32>
    %159 = arith.addf %158, %157 : vector<8x32xf32>
    %160 = arith.divf %158, %159 : vector<8x32xf32>
    %161 = vector.extract_strided_slice %154 {offsets = [0, 32], sizes = [8, 32], strides = [1, 1]} : vector<8x128xf32> to vector<8x32xf32>
    %162 = arith.negf %161 : vector<8x32xf32>
    %163 = math.exp %162 : vector<8x32xf32>
    %cst_67 = arith.constant 1.000000e+00 : f32
    %164 = vector.broadcast %cst_67 : f32 to vector<8x32xf32>
    %165 = arith.addf %164, %163 : vector<8x32xf32>
    %166 = arith.divf %164, %165 : vector<8x32xf32>
    %167 = vector.extract_strided_slice %154 {offsets = [0, 64], sizes = [8, 32], strides = [1, 1]} : vector<8x128xf32> to vector<8x32xf32>
    %168 = math.tanh %167 : vector<8x32xf32>
    %169 = vector.extract_strided_slice %154 {offsets = [0, 96], sizes = [8, 32], strides = [1, 1]} : vector<8x128xf32> to vector<8x32xf32>
    %170 = arith.negf %169 : vector<8x32xf32>
    %171 = math.exp %170 : vector<8x32xf32>
    %cst_68 = arith.constant 1.000000e+00 : f32
    %172 = vector.broadcast %cst_68 : f32 to vector<8x32xf32>
    %173 = arith.addf %172, %171 : vector<8x32xf32>
    %174 = arith.divf %172, %173 : vector<8x32xf32>
    %175 = arith.mulf %166, %92 : vector<8x32xf32>
    %176 = arith.mulf %160, %168 : vector<8x32xf32>
    %177 = arith.addf %175, %176 : vector<8x32xf32>
    %178 = math.tanh %177 : vector<8x32xf32>
    %179 = arith.mulf %174, %178 : vector<8x32xf32>
    %cst_69 = arith.constant dense<0.000000e+00> : vector<8x128xf32>
    %180 = tpu.matmul %179, %26, %cst_69 {dimension_numbers = #tpu.dot_dimension_numbers<[1], [0], [0], [1], [0, 0, 1, 1], [], []>} : vector<8x32xf32>, vector<32x128xf32>, vector<8x128xf32> -> vector<8x128xf32>
    %181 = arith.addf %180, %29 : vector<8x128xf32>
    %c2 = arith.constant 2 : index
    %c0_70 = arith.constant 0 : index
    %c0_71 = arith.constant 0 : index
    %182 = vector.load %arg15[%c2, %c0_70, %c0_71] : memref<6x8x128xf32, #tpu.memory_space<vmem>>, vector<1x8x128xf32>
    %183 = vector.shape_cast %182 : vector<1x8x128xf32> to vector<8x128xf32>
    %184 = vector.shape_cast %181 : vector<8x128xf32> to vector<1x8x128xf32>
    tpu.vector_store %arg15[%c2, %c0_70, %c0_71], %184 {strides = array<i32>} : memref<6x8x128xf32, #tpu.memory_space<vmem>>, vector<1x8x128xf32>,
    %cst_72 = arith.constant -1.000000e+30 : f32
    %185 = vector.broadcast %cst_72 : f32 to vector<8x128xf32>
    %186 = arith.select %33, %181, %185 : vector<8x128xi1>, vector<8x128xf32>
    %cst_73 = arith.constant dense<0xFF800000> : vector<8xf32>
    %187 = vector.multi_reduction <maximumf>, %186, %cst_73 [1] : vector<8x128xf32> to vector<8xf32>
    %188 = vector.shape_cast %187 : vector<8xf32> to vector<8x1xf32>
    %189 = vector.broadcast %188 : vector<8x1xf32> to vector<8x128xf32>
    %190 = arith.cmpf oeq, %186, %189 : vector<8x128xf32>
    %191 = arith.andi %190, %33 : vector<8x128xi1>
    %cst_74 = arith.constant 1.280000e+02 : f32
    %192 = vector.broadcast %cst_74 : f32 to vector<8x128xf32>
    %193 = arith.select %191, %31, %192 : vector<8x128xi1>, vector<8x128xf32>
    %cst_75 = arith.constant dense<0x7F800000> : vector<8xf32>
    %194 = vector.multi_reduction <minimumf>, %193, %cst_75 [1] : vector<8x128xf32> to vector<8xf32>
    %195 = vector.shape_cast %194 : vector<8xf32> to vector<8x1xf32>
    %196 = vector.broadcast %195 : vector<8x1xf32> to vector<8x128xf32>
    %197 = arith.cmpf oeq, %31, %196 : vector<8x128xf32>
    %198 = arith.extui %197 : vector<8x128xi1> to vector<8x128xi32>
    %199 = arith.sitofp %198 : vector<8x128xi32> to vector<8x128xf32>
    %c2_76 = arith.constant 2 : index
    %200 = memref.load %arg0[%c2_76] : memref<6xi32, #tpu.memory_space<smem>>
    %c0_i32_77 = arith.constant 0 : i32
    %201 = arith.cmpi sgt, %200, %c0_i32_77 : i32
    %202 = arith.extui %201 : i1 to i32
    %203 = arith.sitofp %202 : i32 to f32
    %c2_78 = arith.constant 2 : index
    %c0_79 = arith.constant 0 : index
    %c0_80 = arith.constant 0 : index
    %204 = vector.load %arg2[%c2_78, %c0_79, %c0_80] : memref<6x8x128xf32, #tpu.memory_space<vmem>>, vector<1x8x128xf32>
    %205 = vector.shape_cast %204 : vector<1x8x128xf32> to vector<8x128xf32>
    %206 = vector.broadcast %203 : f32 to vector<8x128xf32>
    %207 = arith.mulf %206, %205 : vector<8x128xf32>
    %cst_81 = arith.constant 1.000000e+00 : f32
    %208 = arith.subf %cst_81, %203 : f32
    %209 = vector.broadcast %208 : f32 to vector<8x128xf32>
    %210 = arith.mulf %209, %199 : vector<8x128xf32>
    %211 = arith.addf %207, %210 : vector<8x128xf32>
    %212 = arith.mulf %179, %20 : vector<8x32xf32>
    %cst_82 = arith.constant dense<0.000000e+00> : vector<8xf32>
    %213 = vector.multi_reduction <add>, %212, %cst_82 [1] : vector<8x32xf32> to vector<8xf32>
    %214 = vector.shape_cast %213 : vector<8xf32> to vector<8x1xf32>
    %215 = vector.shape_cast %214 : vector<8x1xf32> to vector<1x8x1xf32>
    %216 = vector.broadcast %215 : vector<1x8x1xf32> to vector<8x8x1xf32>
    %217 = arith.addf %17, %216 : vector<8x8x1xf32>
    %cst_83 = arith.constant 0.000000e+00 : f32
    %218 = vector.broadcast %cst_83 : f32 to vector<8x8x1xf32>
    %219 = arith.maximumf %217, %218 : vector<8x8x1xf32>
    %cst_84 = arith.constant dense<0xFF800000> : vector<8x1xf32>
    %220 = vector.multi_reduction <maximumf>, %219, %cst_84 [0] : vector<8x8x1xf32> to vector<8x1xf32>
    %221 = vector.shape_cast %220 : vector<8x1xf32> to vector<1x8x1xf32>
    %222 = vector.broadcast %221 : vector<1x8x1xf32> to vector<8x8x1xf32>
    %223 = arith.subf %219, %222 : vector<8x8x1xf32>
    %224 = math.exp %223 : vector<8x8x1xf32>
    %cst_85 = arith.constant dense<0.000000e+00> : vector<8x1xf32>
    %225 = vector.multi_reduction <add>, %224, %cst_85 [0] : vector<8x8x1xf32> to vector<8x1xf32>
    %226 = vector.shape_cast %225 : vector<8x1xf32> to vector<1x8x1xf32>
    %227 = tpu.reciprocal %226 {approx = true} : vector<1x8x1xf32> -> vector<1x8x1xf32>
    %228 = vector.broadcast %227 : vector<1x8x1xf32> to vector<8x8x1xf32>
    %229 = arith.mulf %224, %228 : vector<8x8x1xf32>
    %230 = vector.broadcast %229 : vector<8x8x1xf32> to vector<8x8x32xf32>
    %231 = arith.mulf %230, %0 : vector<8x8x32xf32>
    %cst_86 = arith.constant dense<0.000000e+00> : vector<8x32xf32>
    %232 = vector.multi_reduction <add>, %231, %cst_86 [0] : vector<8x8x32xf32> to vector<8x32xf32>
    %233 = vector.broadcast %229 : vector<8x8x1xf32> to vector<8x8x32xf32>
    %234 = arith.mulf %233, %1 : vector<8x8x32xf32>
    %cst_87 = arith.constant dense<0.000000e+00> : vector<8x32xf32>
    %235 = vector.multi_reduction <add>, %234, %cst_87 [0] : vector<8x8x32xf32> to vector<8x32xf32>
    %cst_88 = arith.constant dense<0.000000e+00> : vector<8x16xf32>
    %236 = tpu.matmul %211, %21, %cst_88 {dimension_numbers = #tpu.dot_dimension_numbers<[1], [0], [0], [1], [0, 0, 1, 1], [], []>} : vector<8x128xf32>, vector<128x16xf32>, vector<8x16xf32> -> vector<8x16xf32>
    %237 = tpu.concatenate %232, %235, %236, %179 in 1 : vector<8x32xf32>, vector<8x32xf32>, vector<8x16xf32>, vector<8x32xf32> -> vector<8x112xf32>
    %cst_89 = arith.constant dense<0.000000e+00> : vector<8x128xf32>
    %238 = tpu.matmul %237, %22, %cst_89 {dimension_numbers = #tpu.dot_dimension_numbers<[1], [0], [0], [1], [0, 0, 1, 1], [], []>} : vector<8x112xf32>, vector<112x128xf32>, vector<8x128xf32> -> vector<8x128xf32>
    %239 = arith.addf %238, %25 : vector<8x128xf32>
    %240 = vector.extract_strided_slice %239 {offsets = [0, 0], sizes = [8, 32], strides = [1, 1]} : vector<8x128xf32> to vector<8x32xf32>
    %241 = arith.negf %240 : vector<8x32xf32>
    %242 = math.exp %241 : vector<8x32xf32>
    %cst_90 = arith.constant 1.000000e+00 : f32
    %243 = vector.broadcast %cst_90 : f32 to vector<8x32xf32>
    %244 = arith.addf %243, %242 : vector<8x32xf32>
    %245 = arith.divf %243, %244 : vector<8x32xf32>
    %246 = vector.extract_strided_slice %239 {offsets = [0, 32], sizes = [8, 32], strides = [1, 1]} : vector<8x128xf32> to vector<8x32xf32>
    %247 = arith.negf %246 : vector<8x32xf32>
    %248 = math.exp %247 : vector<8x32xf32>
    %cst_91 = arith.constant 1.000000e+00 : f32
    %249 = vector.broadcast %cst_91 : f32 to vector<8x32xf32>
    %250 = arith.addf %249, %248 : vector<8x32xf32>
    %251 = arith.divf %249, %250 : vector<8x32xf32>
    %252 = vector.extract_strided_slice %239 {offsets = [0, 64], sizes = [8, 32], strides = [1, 1]} : vector<8x128xf32> to vector<8x32xf32>
    %253 = math.tanh %252 : vector<8x32xf32>
    %254 = vector.extract_strided_slice %239 {offsets = [0, 96], sizes = [8, 32], strides = [1, 1]} : vector<8x128xf32> to vector<8x32xf32>
    %255 = arith.negf %254 : vector<8x32xf32>
    %256 = math.exp %255 : vector<8x32xf32>
    %cst_92 = arith.constant 1.000000e+00 : f32
    %257 = vector.broadcast %cst_92 : f32 to vector<8x32xf32>
    %258 = arith.addf %257, %256 : vector<8x32xf32>
    %259 = arith.divf %257, %258 : vector<8x32xf32>
    %260 = arith.mulf %251, %177 : vector<8x32xf32>
    %261 = arith.mulf %245, %253 : vector<8x32xf32>
    %262 = arith.addf %260, %261 : vector<8x32xf32>
    %263 = math.tanh %262 : vector<8x32xf32>
    %264 = arith.mulf %259, %263 : vector<8x32xf32>
    %cst_93 = arith.constant dense<0.000000e+00> : vector<8x128xf32>
    %265 = tpu.matmul %264, %26, %cst_93 {dimension_numbers = #tpu.dot_dimension_numbers<[1], [0], [0], [1], [0, 0, 1, 1], [], []>} : vector<8x32xf32>, vector<32x128xf32>, vector<8x128xf32> -> vector<8x128xf32>
    %266 = arith.addf %265, %29 : vector<8x128xf32>
    %c3 = arith.constant 3 : index
    %c0_94 = arith.constant 0 : index
    %c0_95 = arith.constant 0 : index
    %267 = vector.load %arg15[%c3, %c0_94, %c0_95] : memref<6x8x128xf32, #tpu.memory_space<vmem>>, vector<1x8x128xf32>
    %268 = vector.shape_cast %267 : vector<1x8x128xf32> to vector<8x128xf32>
    %269 = vector.shape_cast %266 : vector<8x128xf32> to vector<1x8x128xf32>
    tpu.vector_store %arg15[%c3, %c0_94, %c0_95], %269 {strides = array<i32>} : memref<6x8x128xf32, #tpu.memory_space<vmem>>, vector<1x8x128xf32>,
    %cst_96 = arith.constant -1.000000e+30 : f32
    %270 = vector.broadcast %cst_96 : f32 to vector<8x128xf32>
    %271 = arith.select %33, %266, %270 : vector<8x128xi1>, vector<8x128xf32>
    %cst_97 = arith.constant dense<0xFF800000> : vector<8xf32>
    %272 = vector.multi_reduction <maximumf>, %271, %cst_97 [1] : vector<8x128xf32> to vector<8xf32>
    %273 = vector.shape_cast %272 : vector<8xf32> to vector<8x1xf32>
    %274 = vector.broadcast %273 : vector<8x1xf32> to vector<8x128xf32>
    %275 = arith.cmpf oeq, %271, %274 : vector<8x128xf32>
    %276 = arith.andi %275, %33 : vector<8x128xi1>
    %cst_98 = arith.constant 1.280000e+02 : f32
    %277 = vector.broadcast %cst_98 : f32 to vector<8x128xf32>
    %278 = arith.select %276, %31, %277 : vector<8x128xi1>, vector<8x128xf32>
    %cst_99 = arith.constant dense<0x7F800000> : vector<8xf32>
    %279 = vector.multi_reduction <minimumf>, %278, %cst_99 [1] : vector<8x128xf32> to vector<8xf32>
    %280 = vector.shape_cast %279 : vector<8xf32> to vector<8x1xf32>
    %281 = vector.broadcast %280 : vector<8x1xf32> to vector<8x128xf32>
    %282 = arith.cmpf oeq, %31, %281 : vector<8x128xf32>
    %283 = arith.extui %282 : vector<8x128xi1> to vector<8x128xi32>
    %284 = arith.sitofp %283 : vector<8x128xi32> to vector<8x128xf32>
    %c3_100 = arith.constant 3 : index
    %285 = memref.load %arg0[%c3_100] : memref<6xi32, #tpu.memory_space<smem>>
    %c0_i32_101 = arith.constant 0 : i32
    %286 = arith.cmpi sgt, %285, %c0_i32_101 : i32
    %287 = arith.extui %286 : i1 to i32
    %288 = arith.sitofp %287 : i32 to f32
    %c3_102 = arith.constant 3 : index
    %c0_103 = arith.constant 0 : index
    %c0_104 = arith.constant 0 : index
    %289 = vector.load %arg2[%c3_102, %c0_103, %c0_104] : memref<6x8x128xf32, #tpu.memory_space<vmem>>, vector<1x8x128xf32>
    %290 = vector.shape_cast %289 : vector<1x8x128xf32> to vector<8x128xf32>
    %291 = vector.broadcast %288 : f32 to vector<8x128xf32>
    %292 = arith.mulf %291, %290 : vector<8x128xf32>
    %cst_105 = arith.constant 1.000000e+00 : f32
    %293 = arith.subf %cst_105, %288 : f32
    %294 = vector.broadcast %293 : f32 to vector<8x128xf32>
    %295 = arith.mulf %294, %284 : vector<8x128xf32>
    %296 = arith.addf %292, %295 : vector<8x128xf32>
    %297 = arith.mulf %264, %20 : vector<8x32xf32>
    %cst_106 = arith.constant dense<0.000000e+00> : vector<8xf32>
    %298 = vector.multi_reduction <add>, %297, %cst_106 [1] : vector<8x32xf32> to vector<8xf32>
    %299 = vector.shape_cast %298 : vector<8xf32> to vector<8x1xf32>
    %300 = vector.shape_cast %299 : vector<8x1xf32> to vector<1x8x1xf32>
    %301 = vector.broadcast %300 : vector<1x8x1xf32> to vector<8x8x1xf32>
    %302 = arith.addf %17, %301 : vector<8x8x1xf32>
    %cst_107 = arith.constant 0.000000e+00 : f32
    %303 = vector.broadcast %cst_107 : f32 to vector<8x8x1xf32>
    %304 = arith.maximumf %302, %303 : vector<8x8x1xf32>
    %cst_108 = arith.constant dense<0xFF800000> : vector<8x1xf32>
    %305 = vector.multi_reduction <maximumf>, %304, %cst_108 [0] : vector<8x8x1xf32> to vector<8x1xf32>
    %306 = vector.shape_cast %305 : vector<8x1xf32> to vector<1x8x1xf32>
    %307 = vector.broadcast %306 : vector<1x8x1xf32> to vector<8x8x1xf32>
    %308 = arith.subf %304, %307 : vector<8x8x1xf32>
    %309 = math.exp %308 : vector<8x8x1xf32>
    %cst_109 = arith.constant dense<0.000000e+00> : vector<8x1xf32>
    %310 = vector.multi_reduction <add>, %309, %cst_109 [0] : vector<8x8x1xf32> to vector<8x1xf32>
    %311 = vector.shape_cast %310 : vector<8x1xf32> to vector<1x8x1xf32>
    %312 = tpu.reciprocal %311 {approx = true} : vector<1x8x1xf32> -> vector<1x8x1xf32>
    %313 = vector.broadcast %312 : vector<1x8x1xf32> to vector<8x8x1xf32>
    %314 = arith.mulf %309, %313 : vector<8x8x1xf32>
    %315 = vector.broadcast %314 : vector<8x8x1xf32> to vector<8x8x32xf32>
    %316 = arith.mulf %315, %0 : vector<8x8x32xf32>
    %cst_110 = arith.constant dense<0.000000e+00> : vector<8x32xf32>
    %317 = vector.multi_reduction <add>, %316, %cst_110 [0] : vector<8x8x32xf32> to vector<8x32xf32>
    %318 = vector.broadcast %314 : vector<8x8x1xf32> to vector<8x8x32xf32>
    %319 = arith.mulf %318, %1 : vector<8x8x32xf32>
    %cst_111 = arith.constant dense<0.000000e+00> : vector<8x32xf32>
    %320 = vector.multi_reduction <add>, %319, %cst_111 [0] : vector<8x8x32xf32> to vector<8x32xf32>
    %cst_112 = arith.constant dense<0.000000e+00> : vector<8x16xf32>
    %321 = tpu.matmul %296, %21, %cst_112 {dimension_numbers = #tpu.dot_dimension_numbers<[1], [0], [0], [1], [0, 0, 1, 1], [], []>} : vector<8x128xf32>, vector<128x16xf32>, vector<8x16xf32> -> vector<8x16xf32>
    %322 = tpu.concatenate %317, %320, %321, %264 in 1 : vector<8x32xf32>, vector<8x32xf32>, vector<8x16xf32>, vector<8x32xf32> -> vector<8x112xf32>
    %cst_113 = arith.constant dense<0.000000e+00> : vector<8x128xf32>
    %323 = tpu.matmul %322, %22, %cst_113 {dimension_numbers = #tpu.dot_dimension_numbers<[1], [0], [0], [1], [0, 0, 1, 1], [], []>} : vector<8x112xf32>, vector<112x128xf32>, vector<8x128xf32> -> vector<8x128xf32>
    %324 = arith.addf %323, %25 : vector<8x128xf32>
    %325 = vector.extract_strided_slice %324 {offsets = [0, 0], sizes = [8, 32], strides = [1, 1]} : vector<8x128xf32> to vector<8x32xf32>
    %326 = arith.negf %325 : vector<8x32xf32>
    %327 = math.exp %326 : vector<8x32xf32>
    %cst_114 = arith.constant 1.000000e+00 : f32
    %328 = vector.broadcast %cst_114 : f32 to vector<8x32xf32>
    %329 = arith.addf %328, %327 : vector<8x32xf32>
    %330 = arith.divf %328, %329 : vector<8x32xf32>
    %331 = vector.extract_strided_slice %324 {offsets = [0, 32], sizes = [8, 32], strides = [1, 1]} : vector<8x128xf32> to vector<8x32xf32>
    %332 = arith.negf %331 : vector<8x32xf32>
    %333 = math.exp %332 : vector<8x32xf32>
    %cst_115 = arith.constant 1.000000e+00 : f32
    %334 = vector.broadcast %cst_115 : f32 to vector<8x32xf32>
    %335 = arith.addf %334, %333 : vector<8x32xf32>
    %336 = arith.divf %334, %335 : vector<8x32xf32>
    %337 = vector.extract_strided_slice %324 {offsets = [0, 64], sizes = [8, 32], strides = [1, 1]} : vector<8x128xf32> to vector<8x32xf32>
    %338 = math.tanh %337 : vector<8x32xf32>
    %339 = vector.extract_strided_slice %324 {offsets = [0, 96], sizes = [8, 32], strides = [1, 1]} : vector<8x128xf32> to vector<8x32xf32>
    %340 = arith.negf %339 : vector<8x32xf32>
    %341 = math.exp %340 : vector<8x32xf32>
    %cst_116 = arith.constant 1.000000e+00 : f32
    %342 = vector.broadcast %cst_116 : f32 to vector<8x32xf32>
    %343 = arith.addf %342, %341 : vector<8x32xf32>
    %344 = arith.divf %342, %343 : vector<8x32xf32>
    %345 = arith.mulf %336, %262 : vector<8x32xf32>
    %346 = arith.mulf %330, %338 : vector<8x32xf32>
    %347 = arith.addf %345, %346 : vector<8x32xf32>
    %348 = math.tanh %347 : vector<8x32xf32>
    %349 = arith.mulf %344, %348 : vector<8x32xf32>
    %cst_117 = arith.constant dense<0.000000e+00> : vector<8x128xf32>
    %350 = tpu.matmul %349, %26, %cst_117 {dimension_numbers = #tpu.dot_dimension_numbers<[1], [0], [0], [1], [0, 0, 1, 1], [], []>} : vector<8x32xf32>, vector<32x128xf32>, vector<8x128xf32> -> vector<8x128xf32>
    %351 = arith.addf %350, %29 : vector<8x128xf32>
    %c4 = arith.constant 4 : index
    %c0_118 = arith.constant 0 : index
    %c0_119 = arith.constant 0 : index
    %352 = vector.load %arg15[%c4, %c0_118, %c0_119] : memref<6x8x128xf32, #tpu.memory_space<vmem>>, vector<1x8x128xf32>
    %353 = vector.shape_cast %352 : vector<1x8x128xf32> to vector<8x128xf32>
    %354 = vector.shape_cast %351 : vector<8x128xf32> to vector<1x8x128xf32>
    tpu.vector_store %arg15[%c4, %c0_118, %c0_119], %354 {strides = array<i32>} : memref<6x8x128xf32, #tpu.memory_space<vmem>>, vector<1x8x128xf32>,
    %cst_120 = arith.constant -1.000000e+30 : f32
    %355 = vector.broadcast %cst_120 : f32 to vector<8x128xf32>
    %356 = arith.select %33, %351, %355 : vector<8x128xi1>, vector<8x128xf32>
    %cst_121 = arith.constant dense<0xFF800000> : vector<8xf32>
    %357 = vector.multi_reduction <maximumf>, %356, %cst_121 [1] : vector<8x128xf32> to vector<8xf32>
    %358 = vector.shape_cast %357 : vector<8xf32> to vector<8x1xf32>
    %359 = vector.broadcast %358 : vector<8x1xf32> to vector<8x128xf32>
    %360 = arith.cmpf oeq, %356, %359 : vector<8x128xf32>
    %361 = arith.andi %360, %33 : vector<8x128xi1>
    %cst_122 = arith.constant 1.280000e+02 : f32
    %362 = vector.broadcast %cst_122 : f32 to vector<8x128xf32>
    %363 = arith.select %361, %31, %362 : vector<8x128xi1>, vector<8x128xf32>
    %cst_123 = arith.constant dense<0x7F800000> : vector<8xf32>
    %364 = vector.multi_reduction <minimumf>, %363, %cst_123 [1] : vector<8x128xf32> to vector<8xf32>
    %365 = vector.shape_cast %364 : vector<8xf32> to vector<8x1xf32>
    %366 = vector.broadcast %365 : vector<8x1xf32> to vector<8x128xf32>
    %367 = arith.cmpf oeq, %31, %366 : vector<8x128xf32>
    %368 = arith.extui %367 : vector<8x128xi1> to vector<8x128xi32>
    %369 = arith.sitofp %368 : vector<8x128xi32> to vector<8x128xf32>
    %c4_124 = arith.constant 4 : index
    %370 = memref.load %arg0[%c4_124] : memref<6xi32, #tpu.memory_space<smem>>
    %c0_i32_125 = arith.constant 0 : i32
    %371 = arith.cmpi sgt, %370, %c0_i32_125 : i32
    %372 = arith.extui %371 : i1 to i32
    %373 = arith.sitofp %372 : i32 to f32
    %c4_126 = arith.constant 4 : index
    %c0_127 = arith.constant 0 : index
    %c0_128 = arith.constant 0 : index
    %374 = vector.load %arg2[%c4_126, %c0_127, %c0_128] : memref<6x8x128xf32, #tpu.memory_space<vmem>>, vector<1x8x128xf32>
    %375 = vector.shape_cast %374 : vector<1x8x128xf32> to vector<8x128xf32>
    %376 = vector.broadcast %373 : f32 to vector<8x128xf32>
    %377 = arith.mulf %376, %375 : vector<8x128xf32>
    %cst_129 = arith.constant 1.000000e+00 : f32
    %378 = arith.subf %cst_129, %373 : f32
    %379 = vector.broadcast %378 : f32 to vector<8x128xf32>
    %380 = arith.mulf %379, %369 : vector<8x128xf32>
    %381 = arith.addf %377, %380 : vector<8x128xf32>
    %382 = arith.mulf %349, %20 : vector<8x32xf32>
    %cst_130 = arith.constant dense<0.000000e+00> : vector<8xf32>
    %383 = vector.multi_reduction <add>, %382, %cst_130 [1] : vector<8x32xf32> to vector<8xf32>
    %384 = vector.shape_cast %383 : vector<8xf32> to vector<8x1xf32>
    %385 = vector.shape_cast %384 : vector<8x1xf32> to vector<1x8x1xf32>
    %386 = vector.broadcast %385 : vector<1x8x1xf32> to vector<8x8x1xf32>
    %387 = arith.addf %17, %386 : vector<8x8x1xf32>
    %cst_131 = arith.constant 0.000000e+00 : f32
    %388 = vector.broadcast %cst_131 : f32 to vector<8x8x1xf32>
    %389 = arith.maximumf %387, %388 : vector<8x8x1xf32>
    %cst_132 = arith.constant dense<0xFF800000> : vector<8x1xf32>
    %390 = vector.multi_reduction <maximumf>, %389, %cst_132 [0] : vector<8x8x1xf32> to vector<8x1xf32>
    %391 = vector.shape_cast %390 : vector<8x1xf32> to vector<1x8x1xf32>
    %392 = vector.broadcast %391 : vector<1x8x1xf32> to vector<8x8x1xf32>
    %393 = arith.subf %389, %392 : vector<8x8x1xf32>
    %394 = math.exp %393 : vector<8x8x1xf32>
    %cst_133 = arith.constant dense<0.000000e+00> : vector<8x1xf32>
    %395 = vector.multi_reduction <add>, %394, %cst_133 [0] : vector<8x8x1xf32> to vector<8x1xf32>
    %396 = vector.shape_cast %395 : vector<8x1xf32> to vector<1x8x1xf32>
    %397 = tpu.reciprocal %396 {approx = true} : vector<1x8x1xf32> -> vector<1x8x1xf32>
    %398 = vector.broadcast %397 : vector<1x8x1xf32> to vector<8x8x1xf32>
    %399 = arith.mulf %394, %398 : vector<8x8x1xf32>
    %400 = vector.broadcast %399 : vector<8x8x1xf32> to vector<8x8x32xf32>
    %401 = arith.mulf %400, %0 : vector<8x8x32xf32>
    %cst_134 = arith.constant dense<0.000000e+00> : vector<8x32xf32>
    %402 = vector.multi_reduction <add>, %401, %cst_134 [0] : vector<8x8x32xf32> to vector<8x32xf32>
    %403 = vector.broadcast %399 : vector<8x8x1xf32> to vector<8x8x32xf32>
    %404 = arith.mulf %403, %1 : vector<8x8x32xf32>
    %cst_135 = arith.constant dense<0.000000e+00> : vector<8x32xf32>
    %405 = vector.multi_reduction <add>, %404, %cst_135 [0] : vector<8x8x32xf32> to vector<8x32xf32>
    %cst_136 = arith.constant dense<0.000000e+00> : vector<8x16xf32>
    %406 = tpu.matmul %381, %21, %cst_136 {dimension_numbers = #tpu.dot_dimension_numbers<[1], [0], [0], [1], [0, 0, 1, 1], [], []>} : vector<8x128xf32>, vector<128x16xf32>, vector<8x16xf32> -> vector<8x16xf32>
    %407 = tpu.concatenate %402, %405, %406, %349 in 1 : vector<8x32xf32>, vector<8x32xf32>, vector<8x16xf32>, vector<8x32xf32> -> vector<8x112xf32>
    %cst_137 = arith.constant dense<0.000000e+00> : vector<8x128xf32>
    %408 = tpu.matmul %407, %22, %cst_137 {dimension_numbers = #tpu.dot_dimension_numbers<[1], [0], [0], [1], [0, 0, 1, 1], [], []>} : vector<8x112xf32>, vector<112x128xf32>, vector<8x128xf32> -> vector<8x128xf32>
    %409 = arith.addf %408, %25 : vector<8x128xf32>
    %410 = vector.extract_strided_slice %409 {offsets = [0, 0], sizes = [8, 32], strides = [1, 1]} : vector<8x128xf32> to vector<8x32xf32>
    %411 = arith.negf %410 : vector<8x32xf32>
    %412 = math.exp %411 : vector<8x32xf32>
    %cst_138 = arith.constant 1.000000e+00 : f32
    %413 = vector.broadcast %cst_138 : f32 to vector<8x32xf32>
    %414 = arith.addf %413, %412 : vector<8x32xf32>
    %415 = arith.divf %413, %414 : vector<8x32xf32>
    %416 = vector.extract_strided_slice %409 {offsets = [0, 32], sizes = [8, 32], strides = [1, 1]} : vector<8x128xf32> to vector<8x32xf32>
    %417 = arith.negf %416 : vector<8x32xf32>
    %418 = math.exp %417 : vector<8x32xf32>
    %cst_139 = arith.constant 1.000000e+00 : f32
    %419 = vector.broadcast %cst_139 : f32 to vector<8x32xf32>
    %420 = arith.addf %419, %418 : vector<8x32xf32>
    %421 = arith.divf %419, %420 : vector<8x32xf32>
    %422 = vector.extract_strided_slice %409 {offsets = [0, 64], sizes = [8, 32], strides = [1, 1]} : vector<8x128xf32> to vector<8x32xf32>
    %423 = math.tanh %422 : vector<8x32xf32>
    %424 = vector.extract_strided_slice %409 {offsets = [0, 96], sizes = [8, 32], strides = [1, 1]} : vector<8x128xf32> to vector<8x32xf32>
    %425 = arith.negf %424 : vector<8x32xf32>
    %426 = math.exp %425 : vector<8x32xf32>
    %cst_140 = arith.constant 1.000000e+00 : f32
    %427 = vector.broadcast %cst_140 : f32 to vector<8x32xf32>
    %428 = arith.addf %427, %426 : vector<8x32xf32>
    %429 = arith.divf %427, %428 : vector<8x32xf32>
    %430 = arith.mulf %421, %347 : vector<8x32xf32>
    %431 = arith.mulf %415, %423 : vector<8x32xf32>
    %432 = arith.addf %430, %431 : vector<8x32xf32>
    %433 = math.tanh %432 : vector<8x32xf32>
    %434 = arith.mulf %429, %433 : vector<8x32xf32>
    %cst_141 = arith.constant dense<0.000000e+00> : vector<8x128xf32>
    %435 = tpu.matmul %434, %26, %cst_141 {dimension_numbers = #tpu.dot_dimension_numbers<[1], [0], [0], [1], [0, 0, 1, 1], [], []>} : vector<8x32xf32>, vector<32x128xf32>, vector<8x128xf32> -> vector<8x128xf32>
    %436 = arith.addf %435, %29 : vector<8x128xf32>
    %c5 = arith.constant 5 : index
    %c0_142 = arith.constant 0 : index
    %c0_143 = arith.constant 0 : index
    %437 = vector.load %arg15[%c5, %c0_142, %c0_143] : memref<6x8x128xf32, #tpu.memory_space<vmem>>, vector<1x8x128xf32>
    %438 = vector.shape_cast %437 : vector<1x8x128xf32> to vector<8x128xf32>
    %439 = vector.shape_cast %436 : vector<8x128xf32> to vector<1x8x128xf32>
    tpu.vector_store %arg15[%c5, %c0_142, %c0_143], %439 {strides = array<i32>} : memref<6x8x128xf32, #tpu.memory_space<vmem>>, vector<1x8x128xf32>,
    return
  }
}

module attributes {stable_mosaic.version = 11 : i64} {
  func.func @_encoder_kernel(%arg0: memref<64x16xf32, #tpu.memory_space<vmem>>, %arg1: memref<16x128xf32, #tpu.memory_space<vmem>>, %arg2: memref<32x128xf32, #tpu.memory_space<vmem>>, %arg3: memref<1x128xf32, #tpu.memory_space<vmem>>, %arg4: memref<16x128xf32, #tpu.memory_space<vmem>>, %arg5: memref<32x128xf32, #tpu.memory_space<vmem>>, %arg6: memref<1x128xf32, #tpu.memory_space<vmem>>, %arg7: memref<64x32xf32, #tpu.memory_space<vmem>>, %arg8: memref<1x32xf32, #tpu.memory_space<vmem>>, %arg9: memref<64x32xf32, #tpu.memory_space<vmem>>, %arg10: memref<1x32xf32, #tpu.memory_space<vmem>>, %arg11: memref<8x8x32xf32, #tpu.memory_space<vmem>>, %arg12: memref<8x8x32xf32, #tpu.memory_space<vmem>>, %arg13: memref<8x32xf32, #tpu.memory_space<vmem>>, %arg14: memref<8x32xf32, #tpu.memory_space<vmem>>) attributes {dimension_semantics = [], scalar_prefetch = 0 : i64, scratch_operands = 0 : i64, tpu.core_type = #tpu.core_type<tc>} {
    %c0 = arith.constant 0 : index
    %c0_0 = arith.constant 0 : index
    %0 = vector.load %arg0[%c0, %c0_0] : memref<64x16xf32, #tpu.memory_space<vmem>>, vector<64x16xf32>
    %c0_1 = arith.constant 0 : index
    %c0_2 = arith.constant 0 : index
    %1 = vector.load %arg1[%c0_1, %c0_2] : memref<16x128xf32, #tpu.memory_space<vmem>>, vector<16x128xf32>
    %cst = arith.constant dense<0.000000e+00> : vector<64x128xf32>
    %2 = tpu.matmul %0, %1, %cst {dimension_numbers = #tpu.dot_dimension_numbers<[1], [0], [0], [1], [0, 0, 1, 1], [], []>} : vector<64x16xf32>, vector<16x128xf32>, vector<64x128xf32> -> vector<64x128xf32>
    %c0_3 = arith.constant 0 : index
    %c0_4 = arith.constant 0 : index
    %3 = vector.load %arg3[%c0_3, %c0_4] : memref<1x128xf32, #tpu.memory_space<vmem>>, vector<1x128xf32>
    %4 = vector.broadcast %3 : vector<1x128xf32> to vector<64x128xf32>
    %5 = arith.addf %2, %4 : vector<64x128xf32>
    %c0_5 = arith.constant 0 : index
    %c0_6 = arith.constant 0 : index
    %6 = vector.load %arg4[%c0_5, %c0_6] : memref<16x128xf32, #tpu.memory_space<vmem>>, vector<16x128xf32>
    %cst_7 = arith.constant dense<0.000000e+00> : vector<64x128xf32>
    %7 = tpu.matmul %0, %6, %cst_7 {dimension_numbers = #tpu.dot_dimension_numbers<[1], [0], [0], [1], [0, 0, 1, 1], [], []>} : vector<64x16xf32>, vector<16x128xf32>, vector<64x128xf32> -> vector<64x128xf32>
    %c0_8 = arith.constant 0 : index
    %c0_9 = arith.constant 0 : index
    %8 = vector.load %arg6[%c0_8, %c0_9] : memref<1x128xf32, #tpu.memory_space<vmem>>, vector<1x128xf32>
    %9 = vector.broadcast %8 : vector<1x128xf32> to vector<64x128xf32>
    %10 = arith.addf %7, %9 : vector<64x128xf32>
    %c0_10 = arith.constant 0 : index
    %c0_11 = arith.constant 0 : index
    %11 = vector.load %arg2[%c0_10, %c0_11] : memref<32x128xf32, #tpu.memory_space<vmem>>, vector<32x128xf32>
    %c0_12 = arith.constant 0 : index
    %c0_13 = arith.constant 0 : index
    %12 = vector.load %arg5[%c0_12, %c0_13] : memref<32x128xf32, #tpu.memory_space<vmem>>, vector<32x128xf32>
    %cst_14 = arith.constant 0.000000e+00 : f32
    %13 = vector.broadcast %cst_14 : f32 to vector<8x32xf32>
    %14 = vector.extract_strided_slice %5 {offsets = [0, 0], sizes = [8, 128], strides = [1, 1]} : vector<64x128xf32> to vector<8x128xf32>
    %cst_15 = arith.constant dense<0.000000e+00> : vector<8x128xf32>
    %15 = tpu.matmul %13, %11, %cst_15 {dimension_numbers = #tpu.dot_dimension_numbers<[1], [0], [0], [1], [0, 0, 1, 1], [], []>} : vector<8x32xf32>, vector<32x128xf32>, vector<8x128xf32> -> vector<8x128xf32>
    %16 = arith.addf %14, %15 : vector<8x128xf32>
    %17 = vector.extract_strided_slice %16 {offsets = [0, 0], sizes = [8, 32], strides = [1, 1]} : vector<8x128xf32> to vector<8x32xf32>
    %18 = arith.negf %17 : vector<8x32xf32>
    %19 = math.exp %18 : vector<8x32xf32>
    %cst_16 = arith.constant 1.000000e+00 : f32
    %20 = vector.broadcast %cst_16 : f32 to vector<8x32xf32>
    %21 = arith.addf %20, %19 : vector<8x32xf32>
    %22 = arith.divf %20, %21 : vector<8x32xf32>
    %23 = vector.extract_strided_slice %16 {offsets = [0, 32], sizes = [8, 32], strides = [1, 1]} : vector<8x128xf32> to vector<8x32xf32>
    %24 = arith.negf %23 : vector<8x32xf32>
    %25 = math.exp %24 : vector<8x32xf32>
    %cst_17 = arith.constant 1.000000e+00 : f32
    %26 = vector.broadcast %cst_17 : f32 to vector<8x32xf32>
    %27 = arith.addf %26, %25 : vector<8x32xf32>
    %28 = arith.divf %26, %27 : vector<8x32xf32>
    %29 = vector.extract_strided_slice %16 {offsets = [0, 64], sizes = [8, 32], strides = [1, 1]} : vector<8x128xf32> to vector<8x32xf32>
    %30 = math.tanh %29 : vector<8x32xf32>
    %31 = vector.extract_strided_slice %16 {offsets = [0, 96], sizes = [8, 32], strides = [1, 1]} : vector<8x128xf32> to vector<8x32xf32>
    %32 = arith.negf %31 : vector<8x32xf32>
    %33 = math.exp %32 : vector<8x32xf32>
    %cst_18 = arith.constant 1.000000e+00 : f32
    %34 = vector.broadcast %cst_18 : f32 to vector<8x32xf32>
    %35 = arith.addf %34, %33 : vector<8x32xf32>
    %36 = arith.divf %34, %35 : vector<8x32xf32>
    %37 = arith.mulf %28, %13 : vector<8x32xf32>
    %38 = arith.mulf %22, %30 : vector<8x32xf32>
    %39 = arith.addf %37, %38 : vector<8x32xf32>
    %40 = math.tanh %39 : vector<8x32xf32>
    %41 = arith.mulf %36, %40 : vector<8x32xf32>
    %42 = vector.extract_strided_slice %10 {offsets = [56, 0], sizes = [8, 128], strides = [1, 1]} : vector<64x128xf32> to vector<8x128xf32>
    %cst_19 = arith.constant dense<0.000000e+00> : vector<8x128xf32>
    %43 = tpu.matmul %13, %12, %cst_19 {dimension_numbers = #tpu.dot_dimension_numbers<[1], [0], [0], [1], [0, 0, 1, 1], [], []>} : vector<8x32xf32>, vector<32x128xf32>, vector<8x128xf32> -> vector<8x128xf32>
    %44 = arith.addf %42, %43 : vector<8x128xf32>
    %45 = vector.extract_strided_slice %44 {offsets = [0, 0], sizes = [8, 32], strides = [1, 1]} : vector<8x128xf32> to vector<8x32xf32>
    %46 = arith.negf %45 : vector<8x32xf32>
    %47 = math.exp %46 : vector<8x32xf32>
    %cst_20 = arith.constant 1.000000e+00 : f32
    %48 = vector.broadcast %cst_20 : f32 to vector<8x32xf32>
    %49 = arith.addf %48, %47 : vector<8x32xf32>
    %50 = arith.divf %48, %49 : vector<8x32xf32>
    %51 = vector.extract_strided_slice %44 {offsets = [0, 32], sizes = [8, 32], strides = [1, 1]} : vector<8x128xf32> to vector<8x32xf32>
    %52 = arith.negf %51 : vector<8x32xf32>
    %53 = math.exp %52 : vector<8x32xf32>
    %cst_21 = arith.constant 1.000000e+00 : f32
    %54 = vector.broadcast %cst_21 : f32 to vector<8x32xf32>
    %55 = arith.addf %54, %53 : vector<8x32xf32>
    %56 = arith.divf %54, %55 : vector<8x32xf32>
    %57 = vector.extract_strided_slice %44 {offsets = [0, 64], sizes = [8, 32], strides = [1, 1]} : vector<8x128xf32> to vector<8x32xf32>
    %58 = math.tanh %57 : vector<8x32xf32>
    %59 = vector.extract_strided_slice %44 {offsets = [0, 96], sizes = [8, 32], strides = [1, 1]} : vector<8x128xf32> to vector<8x32xf32>
    %60 = arith.negf %59 : vector<8x32xf32>
    %61 = math.exp %60 : vector<8x32xf32>
    %cst_22 = arith.constant 1.000000e+00 : f32
    %62 = vector.broadcast %cst_22 : f32 to vector<8x32xf32>
    %63 = arith.addf %62, %61 : vector<8x32xf32>
    %64 = arith.divf %62, %63 : vector<8x32xf32>
    %65 = arith.mulf %56, %13 : vector<8x32xf32>
    %66 = arith.mulf %50, %58 : vector<8x32xf32>
    %67 = arith.addf %65, %66 : vector<8x32xf32>
    %68 = math.tanh %67 : vector<8x32xf32>
    %69 = arith.mulf %64, %68 : vector<8x32xf32>
    %c0_23 = arith.constant 0 : index
    %c0_24 = arith.constant 0 : index
    %c0_25 = arith.constant 0 : index
    %70 = vector.load %arg11[%c0_23, %c0_24, %c0_25] : memref<8x8x32xf32, #tpu.memory_space<vmem>>, vector<1x8x32xf32>
    %71 = vector.shape_cast %70 : vector<1x8x32xf32> to vector<8x32xf32>
    %72 = vector.shape_cast %41 : vector<8x32xf32> to vector<1x8x32xf32>
    tpu.vector_store %arg11[%c0_23, %c0_24, %c0_25], %72 {strides = array<i32>} : memref<8x8x32xf32, #tpu.memory_space<vmem>>, vector<1x8x32xf32>,
    %c7 = arith.constant 7 : index
    %c0_26 = arith.constant 0 : index
    %c0_27 = arith.constant 0 : index
    %73 = vector.load %arg12[%c7, %c0_26, %c0_27] : memref<8x8x32xf32, #tpu.memory_space<vmem>>, vector<1x8x32xf32>
    %74 = vector.shape_cast %73 : vector<1x8x32xf32> to vector<8x32xf32>
    %75 = vector.shape_cast %69 : vector<8x32xf32> to vector<1x8x32xf32>
    tpu.vector_store %arg12[%c7, %c0_26, %c0_27], %75 {strides = array<i32>} : memref<8x8x32xf32, #tpu.memory_space<vmem>>, vector<1x8x32xf32>,
    %76 = vector.extract_strided_slice %5 {offsets = [8, 0], sizes = [8, 128], strides = [1, 1]} : vector<64x128xf32> to vector<8x128xf32>
    %cst_28 = arith.constant dense<0.000000e+00> : vector<8x128xf32>
    %77 = tpu.matmul %41, %11, %cst_28 {dimension_numbers = #tpu.dot_dimension_numbers<[1], [0], [0], [1], [0, 0, 1, 1], [], []>} : vector<8x32xf32>, vector<32x128xf32>, vector<8x128xf32> -> vector<8x128xf32>
    %78 = arith.addf %76, %77 : vector<8x128xf32>
    %79 = vector.extract_strided_slice %78 {offsets = [0, 0], sizes = [8, 32], strides = [1, 1]} : vector<8x128xf32> to vector<8x32xf32>
    %80 = arith.negf %79 : vector<8x32xf32>
    %81 = math.exp %80 : vector<8x32xf32>
    %cst_29 = arith.constant 1.000000e+00 : f32
    %82 = vector.broadcast %cst_29 : f32 to vector<8x32xf32>
    %83 = arith.addf %82, %81 : vector<8x32xf32>
    %84 = arith.divf %82, %83 : vector<8x32xf32>
    %85 = vector.extract_strided_slice %78 {offsets = [0, 32], sizes = [8, 32], strides = [1, 1]} : vector<8x128xf32> to vector<8x32xf32>
    %86 = arith.negf %85 : vector<8x32xf32>
    %87 = math.exp %86 : vector<8x32xf32>
    %cst_30 = arith.constant 1.000000e+00 : f32
    %88 = vector.broadcast %cst_30 : f32 to vector<8x32xf32>
    %89 = arith.addf %88, %87 : vector<8x32xf32>
    %90 = arith.divf %88, %89 : vector<8x32xf32>
    %91 = vector.extract_strided_slice %78 {offsets = [0, 64], sizes = [8, 32], strides = [1, 1]} : vector<8x128xf32> to vector<8x32xf32>
    %92 = math.tanh %91 : vector<8x32xf32>
    %93 = vector.extract_strided_slice %78 {offsets = [0, 96], sizes = [8, 32], strides = [1, 1]} : vector<8x128xf32> to vector<8x32xf32>
    %94 = arith.negf %93 : vector<8x32xf32>
    %95 = math.exp %94 : vector<8x32xf32>
    %cst_31 = arith.constant 1.000000e+00 : f32
    %96 = vector.broadcast %cst_31 : f32 to vector<8x32xf32>
    %97 = arith.addf %96, %95 : vector<8x32xf32>
    %98 = arith.divf %96, %97 : vector<8x32xf32>
    %99 = arith.mulf %90, %39 : vector<8x32xf32>
    %100 = arith.mulf %84, %92 : vector<8x32xf32>
    %101 = arith.addf %99, %100 : vector<8x32xf32>
    %102 = math.tanh %101 : vector<8x32xf32>
    %103 = arith.mulf %98, %102 : vector<8x32xf32>
    %104 = vector.extract_strided_slice %10 {offsets = [48, 0], sizes = [8, 128], strides = [1, 1]} : vector<64x128xf32> to vector<8x128xf32>
    %cst_32 = arith.constant dense<0.000000e+00> : vector<8x128xf32>
    %105 = tpu.matmul %69, %12, %cst_32 {dimension_numbers = #tpu.dot_dimension_numbers<[1], [0], [0], [1], [0, 0, 1, 1], [], []>} : vector<8x32xf32>, vector<32x128xf32>, vector<8x128xf32> -> vector<8x128xf32>
    %106 = arith.addf %104, %105 : vector<8x128xf32>
    %107 = vector.extract_strided_slice %106 {offsets = [0, 0], sizes = [8, 32], strides = [1, 1]} : vector<8x128xf32> to vector<8x32xf32>
    %108 = arith.negf %107 : vector<8x32xf32>
    %109 = math.exp %108 : vector<8x32xf32>
    %cst_33 = arith.constant 1.000000e+00 : f32
    %110 = vector.broadcast %cst_33 : f32 to vector<8x32xf32>
    %111 = arith.addf %110, %109 : vector<8x32xf32>
    %112 = arith.divf %110, %111 : vector<8x32xf32>
    %113 = vector.extract_strided_slice %106 {offsets = [0, 32], sizes = [8, 32], strides = [1, 1]} : vector<8x128xf32> to vector<8x32xf32>
    %114 = arith.negf %113 : vector<8x32xf32>
    %115 = math.exp %114 : vector<8x32xf32>
    %cst_34 = arith.constant 1.000000e+00 : f32
    %116 = vector.broadcast %cst_34 : f32 to vector<8x32xf32>
    %117 = arith.addf %116, %115 : vector<8x32xf32>
    %118 = arith.divf %116, %117 : vector<8x32xf32>
    %119 = vector.extract_strided_slice %106 {offsets = [0, 64], sizes = [8, 32], strides = [1, 1]} : vector<8x128xf32> to vector<8x32xf32>
    %120 = math.tanh %119 : vector<8x32xf32>
    %121 = vector.extract_strided_slice %106 {offsets = [0, 96], sizes = [8, 32], strides = [1, 1]} : vector<8x128xf32> to vector<8x32xf32>
    %122 = arith.negf %121 : vector<8x32xf32>
    %123 = math.exp %122 : vector<8x32xf32>
    %cst_35 = arith.constant 1.000000e+00 : f32
    %124 = vector.broadcast %cst_35 : f32 to vector<8x32xf32>
    %125 = arith.addf %124, %123 : vector<8x32xf32>
    %126 = arith.divf %124, %125 : vector<8x32xf32>
    %127 = arith.mulf %118, %67 : vector<8x32xf32>
    %128 = arith.mulf %112, %120 : vector<8x32xf32>
    %129 = arith.addf %127, %128 : vector<8x32xf32>
    %130 = math.tanh %129 : vector<8x32xf32>
    %131 = arith.mulf %126, %130 : vector<8x32xf32>
    %c1 = arith.constant 1 : index
    %c0_36 = arith.constant 0 : index
    %c0_37 = arith.constant 0 : index
    %132 = vector.load %arg11[%c1, %c0_36, %c0_37] : memref<8x8x32xf32, #tpu.memory_space<vmem>>, vector<1x8x32xf32>
    %133 = vector.shape_cast %132 : vector<1x8x32xf32> to vector<8x32xf32>
    %134 = vector.shape_cast %103 : vector<8x32xf32> to vector<1x8x32xf32>
    tpu.vector_store %arg11[%c1, %c0_36, %c0_37], %134 {strides = array<i32>} : memref<8x8x32xf32, #tpu.memory_space<vmem>>, vector<1x8x32xf32>,
    %c6 = arith.constant 6 : index
    %c0_38 = arith.constant 0 : index
    %c0_39 = arith.constant 0 : index
    %135 = vector.load %arg12[%c6, %c0_38, %c0_39] : memref<8x8x32xf32, #tpu.memory_space<vmem>>, vector<1x8x32xf32>
    %136 = vector.shape_cast %135 : vector<1x8x32xf32> to vector<8x32xf32>
    %137 = vector.shape_cast %131 : vector<8x32xf32> to vector<1x8x32xf32>
    tpu.vector_store %arg12[%c6, %c0_38, %c0_39], %137 {strides = array<i32>} : memref<8x8x32xf32, #tpu.memory_space<vmem>>, vector<1x8x32xf32>,
    %138 = vector.extract_strided_slice %5 {offsets = [16, 0], sizes = [8, 128], strides = [1, 1]} : vector<64x128xf32> to vector<8x128xf32>
    %cst_40 = arith.constant dense<0.000000e+00> : vector<8x128xf32>
    %139 = tpu.matmul %103, %11, %cst_40 {dimension_numbers = #tpu.dot_dimension_numbers<[1], [0], [0], [1], [0, 0, 1, 1], [], []>} : vector<8x32xf32>, vector<32x128xf32>, vector<8x128xf32> -> vector<8x128xf32>
    %140 = arith.addf %138, %139 : vector<8x128xf32>
    %141 = vector.extract_strided_slice %140 {offsets = [0, 0], sizes = [8, 32], strides = [1, 1]} : vector<8x128xf32> to vector<8x32xf32>
    %142 = arith.negf %141 : vector<8x32xf32>
    %143 = math.exp %142 : vector<8x32xf32>
    %cst_41 = arith.constant 1.000000e+00 : f32
    %144 = vector.broadcast %cst_41 : f32 to vector<8x32xf32>
    %145 = arith.addf %144, %143 : vector<8x32xf32>
    %146 = arith.divf %144, %145 : vector<8x32xf32>
    %147 = vector.extract_strided_slice %140 {offsets = [0, 32], sizes = [8, 32], strides = [1, 1]} : vector<8x128xf32> to vector<8x32xf32>
    %148 = arith.negf %147 : vector<8x32xf32>
    %149 = math.exp %148 : vector<8x32xf32>
    %cst_42 = arith.constant 1.000000e+00 : f32
    %150 = vector.broadcast %cst_42 : f32 to vector<8x32xf32>
    %151 = arith.addf %150, %149 : vector<8x32xf32>
    %152 = arith.divf %150, %151 : vector<8x32xf32>
    %153 = vector.extract_strided_slice %140 {offsets = [0, 64], sizes = [8, 32], strides = [1, 1]} : vector<8x128xf32> to vector<8x32xf32>
    %154 = math.tanh %153 : vector<8x32xf32>
    %155 = vector.extract_strided_slice %140 {offsets = [0, 96], sizes = [8, 32], strides = [1, 1]} : vector<8x128xf32> to vector<8x32xf32>
    %156 = arith.negf %155 : vector<8x32xf32>
    %157 = math.exp %156 : vector<8x32xf32>
    %cst_43 = arith.constant 1.000000e+00 : f32
    %158 = vector.broadcast %cst_43 : f32 to vector<8x32xf32>
    %159 = arith.addf %158, %157 : vector<8x32xf32>
    %160 = arith.divf %158, %159 : vector<8x32xf32>
    %161 = arith.mulf %152, %101 : vector<8x32xf32>
    %162 = arith.mulf %146, %154 : vector<8x32xf32>
    %163 = arith.addf %161, %162 : vector<8x32xf32>
    %164 = math.tanh %163 : vector<8x32xf32>
    %165 = arith.mulf %160, %164 : vector<8x32xf32>
    %166 = vector.extract_strided_slice %10 {offsets = [40, 0], sizes = [8, 128], strides = [1, 1]} : vector<64x128xf32> to vector<8x128xf32>
    %cst_44 = arith.constant dense<0.000000e+00> : vector<8x128xf32>
    %167 = tpu.matmul %131, %12, %cst_44 {dimension_numbers = #tpu.dot_dimension_numbers<[1], [0], [0], [1], [0, 0, 1, 1], [], []>} : vector<8x32xf32>, vector<32x128xf32>, vector<8x128xf32> -> vector<8x128xf32>
    %168 = arith.addf %166, %167 : vector<8x128xf32>
    %169 = vector.extract_strided_slice %168 {offsets = [0, 0], sizes = [8, 32], strides = [1, 1]} : vector<8x128xf32> to vector<8x32xf32>
    %170 = arith.negf %169 : vector<8x32xf32>
    %171 = math.exp %170 : vector<8x32xf32>
    %cst_45 = arith.constant 1.000000e+00 : f32
    %172 = vector.broadcast %cst_45 : f32 to vector<8x32xf32>
    %173 = arith.addf %172, %171 : vector<8x32xf32>
    %174 = arith.divf %172, %173 : vector<8x32xf32>
    %175 = vector.extract_strided_slice %168 {offsets = [0, 32], sizes = [8, 32], strides = [1, 1]} : vector<8x128xf32> to vector<8x32xf32>
    %176 = arith.negf %175 : vector<8x32xf32>
    %177 = math.exp %176 : vector<8x32xf32>
    %cst_46 = arith.constant 1.000000e+00 : f32
    %178 = vector.broadcast %cst_46 : f32 to vector<8x32xf32>
    %179 = arith.addf %178, %177 : vector<8x32xf32>
    %180 = arith.divf %178, %179 : vector<8x32xf32>
    %181 = vector.extract_strided_slice %168 {offsets = [0, 64], sizes = [8, 32], strides = [1, 1]} : vector<8x128xf32> to vector<8x32xf32>
    %182 = math.tanh %181 : vector<8x32xf32>
    %183 = vector.extract_strided_slice %168 {offsets = [0, 96], sizes = [8, 32], strides = [1, 1]} : vector<8x128xf32> to vector<8x32xf32>
    %184 = arith.negf %183 : vector<8x32xf32>
    %185 = math.exp %184 : vector<8x32xf32>
    %cst_47 = arith.constant 1.000000e+00 : f32
    %186 = vector.broadcast %cst_47 : f32 to vector<8x32xf32>
    %187 = arith.addf %186, %185 : vector<8x32xf32>
    %188 = arith.divf %186, %187 : vector<8x32xf32>
    %189 = arith.mulf %180, %129 : vector<8x32xf32>
    %190 = arith.mulf %174, %182 : vector<8x32xf32>
    %191 = arith.addf %189, %190 : vector<8x32xf32>
    %192 = math.tanh %191 : vector<8x32xf32>
    %193 = arith.mulf %188, %192 : vector<8x32xf32>
    %c2 = arith.constant 2 : index
    %c0_48 = arith.constant 0 : index
    %c0_49 = arith.constant 0 : index
    %194 = vector.load %arg11[%c2, %c0_48, %c0_49] : memref<8x8x32xf32, #tpu.memory_space<vmem>>, vector<1x8x32xf32>
    %195 = vector.shape_cast %194 : vector<1x8x32xf32> to vector<8x32xf32>
    %196 = vector.shape_cast %165 : vector<8x32xf32> to vector<1x8x32xf32>
    tpu.vector_store %arg11[%c2, %c0_48, %c0_49], %196 {strides = array<i32>} : memref<8x8x32xf32, #tpu.memory_space<vmem>>, vector<1x8x32xf32>,
    %c5 = arith.constant 5 : index
    %c0_50 = arith.constant 0 : index
    %c0_51 = arith.constant 0 : index
    %197 = vector.load %arg12[%c5, %c0_50, %c0_51] : memref<8x8x32xf32, #tpu.memory_space<vmem>>, vector<1x8x32xf32>
    %198 = vector.shape_cast %197 : vector<1x8x32xf32> to vector<8x32xf32>
    %199 = vector.shape_cast %193 : vector<8x32xf32> to vector<1x8x32xf32>
    tpu.vector_store %arg12[%c5, %c0_50, %c0_51], %199 {strides = array<i32>} : memref<8x8x32xf32, #tpu.memory_space<vmem>>, vector<1x8x32xf32>,
    %200 = vector.extract_strided_slice %5 {offsets = [24, 0], sizes = [8, 128], strides = [1, 1]} : vector<64x128xf32> to vector<8x128xf32>
    %cst_52 = arith.constant dense<0.000000e+00> : vector<8x128xf32>
    %201 = tpu.matmul %165, %11, %cst_52 {dimension_numbers = #tpu.dot_dimension_numbers<[1], [0], [0], [1], [0, 0, 1, 1], [], []>} : vector<8x32xf32>, vector<32x128xf32>, vector<8x128xf32> -> vector<8x128xf32>
    %202 = arith.addf %200, %201 : vector<8x128xf32>
    %203 = vector.extract_strided_slice %202 {offsets = [0, 0], sizes = [8, 32], strides = [1, 1]} : vector<8x128xf32> to vector<8x32xf32>
    %204 = arith.negf %203 : vector<8x32xf32>
    %205 = math.exp %204 : vector<8x32xf32>
    %cst_53 = arith.constant 1.000000e+00 : f32
    %206 = vector.broadcast %cst_53 : f32 to vector<8x32xf32>
    %207 = arith.addf %206, %205 : vector<8x32xf32>
    %208 = arith.divf %206, %207 : vector<8x32xf32>
    %209 = vector.extract_strided_slice %202 {offsets = [0, 32], sizes = [8, 32], strides = [1, 1]} : vector<8x128xf32> to vector<8x32xf32>
    %210 = arith.negf %209 : vector<8x32xf32>
    %211 = math.exp %210 : vector<8x32xf32>
    %cst_54 = arith.constant 1.000000e+00 : f32
    %212 = vector.broadcast %cst_54 : f32 to vector<8x32xf32>
    %213 = arith.addf %212, %211 : vector<8x32xf32>
    %214 = arith.divf %212, %213 : vector<8x32xf32>
    %215 = vector.extract_strided_slice %202 {offsets = [0, 64], sizes = [8, 32], strides = [1, 1]} : vector<8x128xf32> to vector<8x32xf32>
    %216 = math.tanh %215 : vector<8x32xf32>
    %217 = vector.extract_strided_slice %202 {offsets = [0, 96], sizes = [8, 32], strides = [1, 1]} : vector<8x128xf32> to vector<8x32xf32>
    %218 = arith.negf %217 : vector<8x32xf32>
    %219 = math.exp %218 : vector<8x32xf32>
    %cst_55 = arith.constant 1.000000e+00 : f32
    %220 = vector.broadcast %cst_55 : f32 to vector<8x32xf32>
    %221 = arith.addf %220, %219 : vector<8x32xf32>
    %222 = arith.divf %220, %221 : vector<8x32xf32>
    %223 = arith.mulf %214, %163 : vector<8x32xf32>
    %224 = arith.mulf %208, %216 : vector<8x32xf32>
    %225 = arith.addf %223, %224 : vector<8x32xf32>
    %226 = math.tanh %225 : vector<8x32xf32>
    %227 = arith.mulf %222, %226 : vector<8x32xf32>
    %228 = vector.extract_strided_slice %10 {offsets = [32, 0], sizes = [8, 128], strides = [1, 1]} : vector<64x128xf32> to vector<8x128xf32>
    %cst_56 = arith.constant dense<0.000000e+00> : vector<8x128xf32>
    %229 = tpu.matmul %193, %12, %cst_56 {dimension_numbers = #tpu.dot_dimension_numbers<[1], [0], [0], [1], [0, 0, 1, 1], [], []>} : vector<8x32xf32>, vector<32x128xf32>, vector<8x128xf32> -> vector<8x128xf32>
    %230 = arith.addf %228, %229 : vector<8x128xf32>
    %231 = vector.extract_strided_slice %230 {offsets = [0, 0], sizes = [8, 32], strides = [1, 1]} : vector<8x128xf32> to vector<8x32xf32>
    %232 = arith.negf %231 : vector<8x32xf32>
    %233 = math.exp %232 : vector<8x32xf32>
    %cst_57 = arith.constant 1.000000e+00 : f32
    %234 = vector.broadcast %cst_57 : f32 to vector<8x32xf32>
    %235 = arith.addf %234, %233 : vector<8x32xf32>
    %236 = arith.divf %234, %235 : vector<8x32xf32>
    %237 = vector.extract_strided_slice %230 {offsets = [0, 32], sizes = [8, 32], strides = [1, 1]} : vector<8x128xf32> to vector<8x32xf32>
    %238 = arith.negf %237 : vector<8x32xf32>
    %239 = math.exp %238 : vector<8x32xf32>
    %cst_58 = arith.constant 1.000000e+00 : f32
    %240 = vector.broadcast %cst_58 : f32 to vector<8x32xf32>
    %241 = arith.addf %240, %239 : vector<8x32xf32>
    %242 = arith.divf %240, %241 : vector<8x32xf32>
    %243 = vector.extract_strided_slice %230 {offsets = [0, 64], sizes = [8, 32], strides = [1, 1]} : vector<8x128xf32> to vector<8x32xf32>
    %244 = math.tanh %243 : vector<8x32xf32>
    %245 = vector.extract_strided_slice %230 {offsets = [0, 96], sizes = [8, 32], strides = [1, 1]} : vector<8x128xf32> to vector<8x32xf32>
    %246 = arith.negf %245 : vector<8x32xf32>
    %247 = math.exp %246 : vector<8x32xf32>
    %cst_59 = arith.constant 1.000000e+00 : f32
    %248 = vector.broadcast %cst_59 : f32 to vector<8x32xf32>
    %249 = arith.addf %248, %247 : vector<8x32xf32>
    %250 = arith.divf %248, %249 : vector<8x32xf32>
    %251 = arith.mulf %242, %191 : vector<8x32xf32>
    %252 = arith.mulf %236, %244 : vector<8x32xf32>
    %253 = arith.addf %251, %252 : vector<8x32xf32>
    %254 = math.tanh %253 : vector<8x32xf32>
    %255 = arith.mulf %250, %254 : vector<8x32xf32>
    %c3 = arith.constant 3 : index
    %c0_60 = arith.constant 0 : index
    %c0_61 = arith.constant 0 : index
    %256 = vector.load %arg11[%c3, %c0_60, %c0_61] : memref<8x8x32xf32, #tpu.memory_space<vmem>>, vector<1x8x32xf32>
    %257 = vector.shape_cast %256 : vector<1x8x32xf32> to vector<8x32xf32>
    %258 = vector.shape_cast %227 : vector<8x32xf32> to vector<1x8x32xf32>
    tpu.vector_store %arg11[%c3, %c0_60, %c0_61], %258 {strides = array<i32>} : memref<8x8x32xf32, #tpu.memory_space<vmem>>, vector<1x8x32xf32>,
    %c4 = arith.constant 4 : index
    %c0_62 = arith.constant 0 : index
    %c0_63 = arith.constant 0 : index
    %259 = vector.load %arg12[%c4, %c0_62, %c0_63] : memref<8x8x32xf32, #tpu.memory_space<vmem>>, vector<1x8x32xf32>
    %260 = vector.shape_cast %259 : vector<1x8x32xf32> to vector<8x32xf32>
    %261 = vector.shape_cast %255 : vector<8x32xf32> to vector<1x8x32xf32>
    tpu.vector_store %arg12[%c4, %c0_62, %c0_63], %261 {strides = array<i32>} : memref<8x8x32xf32, #tpu.memory_space<vmem>>, vector<1x8x32xf32>,
    %262 = vector.extract_strided_slice %5 {offsets = [32, 0], sizes = [8, 128], strides = [1, 1]} : vector<64x128xf32> to vector<8x128xf32>
    %cst_64 = arith.constant dense<0.000000e+00> : vector<8x128xf32>
    %263 = tpu.matmul %227, %11, %cst_64 {dimension_numbers = #tpu.dot_dimension_numbers<[1], [0], [0], [1], [0, 0, 1, 1], [], []>} : vector<8x32xf32>, vector<32x128xf32>, vector<8x128xf32> -> vector<8x128xf32>
    %264 = arith.addf %262, %263 : vector<8x128xf32>
    %265 = vector.extract_strided_slice %264 {offsets = [0, 0], sizes = [8, 32], strides = [1, 1]} : vector<8x128xf32> to vector<8x32xf32>
    %266 = arith.negf %265 : vector<8x32xf32>
    %267 = math.exp %266 : vector<8x32xf32>
    %cst_65 = arith.constant 1.000000e+00 : f32
    %268 = vector.broadcast %cst_65 : f32 to vector<8x32xf32>
    %269 = arith.addf %268, %267 : vector<8x32xf32>
    %270 = arith.divf %268, %269 : vector<8x32xf32>
    %271 = vector.extract_strided_slice %264 {offsets = [0, 32], sizes = [8, 32], strides = [1, 1]} : vector<8x128xf32> to vector<8x32xf32>
    %272 = arith.negf %271 : vector<8x32xf32>
    %273 = math.exp %272 : vector<8x32xf32>
    %cst_66 = arith.constant 1.000000e+00 : f32
    %274 = vector.broadcast %cst_66 : f32 to vector<8x32xf32>
    %275 = arith.addf %274, %273 : vector<8x32xf32>
    %276 = arith.divf %274, %275 : vector<8x32xf32>
    %277 = vector.extract_strided_slice %264 {offsets = [0, 64], sizes = [8, 32], strides = [1, 1]} : vector<8x128xf32> to vector<8x32xf32>
    %278 = math.tanh %277 : vector<8x32xf32>
    %279 = vector.extract_strided_slice %264 {offsets = [0, 96], sizes = [8, 32], strides = [1, 1]} : vector<8x128xf32> to vector<8x32xf32>
    %280 = arith.negf %279 : vector<8x32xf32>
    %281 = math.exp %280 : vector<8x32xf32>
    %cst_67 = arith.constant 1.000000e+00 : f32
    %282 = vector.broadcast %cst_67 : f32 to vector<8x32xf32>
    %283 = arith.addf %282, %281 : vector<8x32xf32>
    %284 = arith.divf %282, %283 : vector<8x32xf32>
    %285 = arith.mulf %276, %225 : vector<8x32xf32>
    %286 = arith.mulf %270, %278 : vector<8x32xf32>
    %287 = arith.addf %285, %286 : vector<8x32xf32>
    %288 = math.tanh %287 : vector<8x32xf32>
    %289 = arith.mulf %284, %288 : vector<8x32xf32>
    %290 = vector.extract_strided_slice %10 {offsets = [24, 0], sizes = [8, 128], strides = [1, 1]} : vector<64x128xf32> to vector<8x128xf32>
    %cst_68 = arith.constant dense<0.000000e+00> : vector<8x128xf32>
    %291 = tpu.matmul %255, %12, %cst_68 {dimension_numbers = #tpu.dot_dimension_numbers<[1], [0], [0], [1], [0, 0, 1, 1], [], []>} : vector<8x32xf32>, vector<32x128xf32>, vector<8x128xf32> -> vector<8x128xf32>
    %292 = arith.addf %290, %291 : vector<8x128xf32>
    %293 = vector.extract_strided_slice %292 {offsets = [0, 0], sizes = [8, 32], strides = [1, 1]} : vector<8x128xf32> to vector<8x32xf32>
    %294 = arith.negf %293 : vector<8x32xf32>
    %295 = math.exp %294 : vector<8x32xf32>
    %cst_69 = arith.constant 1.000000e+00 : f32
    %296 = vector.broadcast %cst_69 : f32 to vector<8x32xf32>
    %297 = arith.addf %296, %295 : vector<8x32xf32>
    %298 = arith.divf %296, %297 : vector<8x32xf32>
    %299 = vector.extract_strided_slice %292 {offsets = [0, 32], sizes = [8, 32], strides = [1, 1]} : vector<8x128xf32> to vector<8x32xf32>
    %300 = arith.negf %299 : vector<8x32xf32>
    %301 = math.exp %300 : vector<8x32xf32>
    %cst_70 = arith.constant 1.000000e+00 : f32
    %302 = vector.broadcast %cst_70 : f32 to vector<8x32xf32>
    %303 = arith.addf %302, %301 : vector<8x32xf32>
    %304 = arith.divf %302, %303 : vector<8x32xf32>
    %305 = vector.extract_strided_slice %292 {offsets = [0, 64], sizes = [8, 32], strides = [1, 1]} : vector<8x128xf32> to vector<8x32xf32>
    %306 = math.tanh %305 : vector<8x32xf32>
    %307 = vector.extract_strided_slice %292 {offsets = [0, 96], sizes = [8, 32], strides = [1, 1]} : vector<8x128xf32> to vector<8x32xf32>
    %308 = arith.negf %307 : vector<8x32xf32>
    %309 = math.exp %308 : vector<8x32xf32>
    %cst_71 = arith.constant 1.000000e+00 : f32
    %310 = vector.broadcast %cst_71 : f32 to vector<8x32xf32>
    %311 = arith.addf %310, %309 : vector<8x32xf32>
    %312 = arith.divf %310, %311 : vector<8x32xf32>
    %313 = arith.mulf %304, %253 : vector<8x32xf32>
    %314 = arith.mulf %298, %306 : vector<8x32xf32>
    %315 = arith.addf %313, %314 : vector<8x32xf32>
    %316 = math.tanh %315 : vector<8x32xf32>
    %317 = arith.mulf %312, %316 : vector<8x32xf32>
    %c4_72 = arith.constant 4 : index
    %c0_73 = arith.constant 0 : index
    %c0_74 = arith.constant 0 : index
    %318 = vector.load %arg11[%c4_72, %c0_73, %c0_74] : memref<8x8x32xf32, #tpu.memory_space<vmem>>, vector<1x8x32xf32>
    %319 = vector.shape_cast %318 : vector<1x8x32xf32> to vector<8x32xf32>
    %320 = vector.shape_cast %289 : vector<8x32xf32> to vector<1x8x32xf32>
    tpu.vector_store %arg11[%c4_72, %c0_73, %c0_74], %320 {strides = array<i32>} : memref<8x8x32xf32, #tpu.memory_space<vmem>>, vector<1x8x32xf32>,
    %c3_75 = arith.constant 3 : index
    %c0_76 = arith.constant 0 : index
    %c0_77 = arith.constant 0 : index
    %321 = vector.load %arg12[%c3_75, %c0_76, %c0_77] : memref<8x8x32xf32, #tpu.memory_space<vmem>>, vector<1x8x32xf32>
    %322 = vector.shape_cast %321 : vector<1x8x32xf32> to vector<8x32xf32>
    %323 = vector.shape_cast %317 : vector<8x32xf32> to vector<1x8x32xf32>
    tpu.vector_store %arg12[%c3_75, %c0_76, %c0_77], %323 {strides = array<i32>} : memref<8x8x32xf32, #tpu.memory_space<vmem>>, vector<1x8x32xf32>,
    %324 = vector.extract_strided_slice %5 {offsets = [40, 0], sizes = [8, 128], strides = [1, 1]} : vector<64x128xf32> to vector<8x128xf32>
    %cst_78 = arith.constant dense<0.000000e+00> : vector<8x128xf32>
    %325 = tpu.matmul %289, %11, %cst_78 {dimension_numbers = #tpu.dot_dimension_numbers<[1], [0], [0], [1], [0, 0, 1, 1], [], []>} : vector<8x32xf32>, vector<32x128xf32>, vector<8x128xf32> -> vector<8x128xf32>
    %326 = arith.addf %324, %325 : vector<8x128xf32>
    %327 = vector.extract_strided_slice %326 {offsets = [0, 0], sizes = [8, 32], strides = [1, 1]} : vector<8x128xf32> to vector<8x32xf32>
    %328 = arith.negf %327 : vector<8x32xf32>
    %329 = math.exp %328 : vector<8x32xf32>
    %cst_79 = arith.constant 1.000000e+00 : f32
    %330 = vector.broadcast %cst_79 : f32 to vector<8x32xf32>
    %331 = arith.addf %330, %329 : vector<8x32xf32>
    %332 = arith.divf %330, %331 : vector<8x32xf32>
    %333 = vector.extract_strided_slice %326 {offsets = [0, 32], sizes = [8, 32], strides = [1, 1]} : vector<8x128xf32> to vector<8x32xf32>
    %334 = arith.negf %333 : vector<8x32xf32>
    %335 = math.exp %334 : vector<8x32xf32>
    %cst_80 = arith.constant 1.000000e+00 : f32
    %336 = vector.broadcast %cst_80 : f32 to vector<8x32xf32>
    %337 = arith.addf %336, %335 : vector<8x32xf32>
    %338 = arith.divf %336, %337 : vector<8x32xf32>
    %339 = vector.extract_strided_slice %326 {offsets = [0, 64], sizes = [8, 32], strides = [1, 1]} : vector<8x128xf32> to vector<8x32xf32>
    %340 = math.tanh %339 : vector<8x32xf32>
    %341 = vector.extract_strided_slice %326 {offsets = [0, 96], sizes = [8, 32], strides = [1, 1]} : vector<8x128xf32> to vector<8x32xf32>
    %342 = arith.negf %341 : vector<8x32xf32>
    %343 = math.exp %342 : vector<8x32xf32>
    %cst_81 = arith.constant 1.000000e+00 : f32
    %344 = vector.broadcast %cst_81 : f32 to vector<8x32xf32>
    %345 = arith.addf %344, %343 : vector<8x32xf32>
    %346 = arith.divf %344, %345 : vector<8x32xf32>
    %347 = arith.mulf %338, %287 : vector<8x32xf32>
    %348 = arith.mulf %332, %340 : vector<8x32xf32>
    %349 = arith.addf %347, %348 : vector<8x32xf32>
    %350 = math.tanh %349 : vector<8x32xf32>
    %351 = arith.mulf %346, %350 : vector<8x32xf32>
    %352 = vector.extract_strided_slice %10 {offsets = [16, 0], sizes = [8, 128], strides = [1, 1]} : vector<64x128xf32> to vector<8x128xf32>
    %cst_82 = arith.constant dense<0.000000e+00> : vector<8x128xf32>
    %353 = tpu.matmul %317, %12, %cst_82 {dimension_numbers = #tpu.dot_dimension_numbers<[1], [0], [0], [1], [0, 0, 1, 1], [], []>} : vector<8x32xf32>, vector<32x128xf32>, vector<8x128xf32> -> vector<8x128xf32>
    %354 = arith.addf %352, %353 : vector<8x128xf32>
    %355 = vector.extract_strided_slice %354 {offsets = [0, 0], sizes = [8, 32], strides = [1, 1]} : vector<8x128xf32> to vector<8x32xf32>
    %356 = arith.negf %355 : vector<8x32xf32>
    %357 = math.exp %356 : vector<8x32xf32>
    %cst_83 = arith.constant 1.000000e+00 : f32
    %358 = vector.broadcast %cst_83 : f32 to vector<8x32xf32>
    %359 = arith.addf %358, %357 : vector<8x32xf32>
    %360 = arith.divf %358, %359 : vector<8x32xf32>
    %361 = vector.extract_strided_slice %354 {offsets = [0, 32], sizes = [8, 32], strides = [1, 1]} : vector<8x128xf32> to vector<8x32xf32>
    %362 = arith.negf %361 : vector<8x32xf32>
    %363 = math.exp %362 : vector<8x32xf32>
    %cst_84 = arith.constant 1.000000e+00 : f32
    %364 = vector.broadcast %cst_84 : f32 to vector<8x32xf32>
    %365 = arith.addf %364, %363 : vector<8x32xf32>
    %366 = arith.divf %364, %365 : vector<8x32xf32>
    %367 = vector.extract_strided_slice %354 {offsets = [0, 64], sizes = [8, 32], strides = [1, 1]} : vector<8x128xf32> to vector<8x32xf32>
    %368 = math.tanh %367 : vector<8x32xf32>
    %369 = vector.extract_strided_slice %354 {offsets = [0, 96], sizes = [8, 32], strides = [1, 1]} : vector<8x128xf32> to vector<8x32xf32>
    %370 = arith.negf %369 : vector<8x32xf32>
    %371 = math.exp %370 : vector<8x32xf32>
    %cst_85 = arith.constant 1.000000e+00 : f32
    %372 = vector.broadcast %cst_85 : f32 to vector<8x32xf32>
    %373 = arith.addf %372, %371 : vector<8x32xf32>
    %374 = arith.divf %372, %373 : vector<8x32xf32>
    %375 = arith.mulf %366, %315 : vector<8x32xf32>
    %376 = arith.mulf %360, %368 : vector<8x32xf32>
    %377 = arith.addf %375, %376 : vector<8x32xf32>
    %378 = math.tanh %377 : vector<8x32xf32>
    %379 = arith.mulf %374, %378 : vector<8x32xf32>
    %c5_86 = arith.constant 5 : index
    %c0_87 = arith.constant 0 : index
    %c0_88 = arith.constant 0 : index
    %380 = vector.load %arg11[%c5_86, %c0_87, %c0_88] : memref<8x8x32xf32, #tpu.memory_space<vmem>>, vector<1x8x32xf32>
    %381 = vector.shape_cast %380 : vector<1x8x32xf32> to vector<8x32xf32>
    %382 = vector.shape_cast %351 : vector<8x32xf32> to vector<1x8x32xf32>
    tpu.vector_store %arg11[%c5_86, %c0_87, %c0_88], %382 {strides = array<i32>} : memref<8x8x32xf32, #tpu.memory_space<vmem>>, vector<1x8x32xf32>,
    %c2_89 = arith.constant 2 : index
    %c0_90 = arith.constant 0 : index
    %c0_91 = arith.constant 0 : index
    %383 = vector.load %arg12[%c2_89, %c0_90, %c0_91] : memref<8x8x32xf32, #tpu.memory_space<vmem>>, vector<1x8x32xf32>
    %384 = vector.shape_cast %383 : vector<1x8x32xf32> to vector<8x32xf32>
    %385 = vector.shape_cast %379 : vector<8x32xf32> to vector<1x8x32xf32>
    tpu.vector_store %arg12[%c2_89, %c0_90, %c0_91], %385 {strides = array<i32>} : memref<8x8x32xf32, #tpu.memory_space<vmem>>, vector<1x8x32xf32>,
    %386 = vector.extract_strided_slice %5 {offsets = [48, 0], sizes = [8, 128], strides = [1, 1]} : vector<64x128xf32> to vector<8x128xf32>
    %cst_92 = arith.constant dense<0.000000e+00> : vector<8x128xf32>
    %387 = tpu.matmul %351, %11, %cst_92 {dimension_numbers = #tpu.dot_dimension_numbers<[1], [0], [0], [1], [0, 0, 1, 1], [], []>} : vector<8x32xf32>, vector<32x128xf32>, vector<8x128xf32> -> vector<8x128xf32>
    %388 = arith.addf %386, %387 : vector<8x128xf32>
    %389 = vector.extract_strided_slice %388 {offsets = [0, 0], sizes = [8, 32], strides = [1, 1]} : vector<8x128xf32> to vector<8x32xf32>
    %390 = arith.negf %389 : vector<8x32xf32>
    %391 = math.exp %390 : vector<8x32xf32>
    %cst_93 = arith.constant 1.000000e+00 : f32
    %392 = vector.broadcast %cst_93 : f32 to vector<8x32xf32>
    %393 = arith.addf %392, %391 : vector<8x32xf32>
    %394 = arith.divf %392, %393 : vector<8x32xf32>
    %395 = vector.extract_strided_slice %388 {offsets = [0, 32], sizes = [8, 32], strides = [1, 1]} : vector<8x128xf32> to vector<8x32xf32>
    %396 = arith.negf %395 : vector<8x32xf32>
    %397 = math.exp %396 : vector<8x32xf32>
    %cst_94 = arith.constant 1.000000e+00 : f32
    %398 = vector.broadcast %cst_94 : f32 to vector<8x32xf32>
    %399 = arith.addf %398, %397 : vector<8x32xf32>
    %400 = arith.divf %398, %399 : vector<8x32xf32>
    %401 = vector.extract_strided_slice %388 {offsets = [0, 64], sizes = [8, 32], strides = [1, 1]} : vector<8x128xf32> to vector<8x32xf32>
    %402 = math.tanh %401 : vector<8x32xf32>
    %403 = vector.extract_strided_slice %388 {offsets = [0, 96], sizes = [8, 32], strides = [1, 1]} : vector<8x128xf32> to vector<8x32xf32>
    %404 = arith.negf %403 : vector<8x32xf32>
    %405 = math.exp %404 : vector<8x32xf32>
    %cst_95 = arith.constant 1.000000e+00 : f32
    %406 = vector.broadcast %cst_95 : f32 to vector<8x32xf32>
    %407 = arith.addf %406, %405 : vector<8x32xf32>
    %408 = arith.divf %406, %407 : vector<8x32xf32>
    %409 = arith.mulf %400, %349 : vector<8x32xf32>
    %410 = arith.mulf %394, %402 : vector<8x32xf32>
    %411 = arith.addf %409, %410 : vector<8x32xf32>
    %412 = math.tanh %411 : vector<8x32xf32>
    %413 = arith.mulf %408, %412 : vector<8x32xf32>
    %414 = vector.extract_strided_slice %10 {offsets = [8, 0], sizes = [8, 128], strides = [1, 1]} : vector<64x128xf32> to vector<8x128xf32>
    %cst_96 = arith.constant dense<0.000000e+00> : vector<8x128xf32>
    %415 = tpu.matmul %379, %12, %cst_96 {dimension_numbers = #tpu.dot_dimension_numbers<[1], [0], [0], [1], [0, 0, 1, 1], [], []>} : vector<8x32xf32>, vector<32x128xf32>, vector<8x128xf32> -> vector<8x128xf32>
    %416 = arith.addf %414, %415 : vector<8x128xf32>
    %417 = vector.extract_strided_slice %416 {offsets = [0, 0], sizes = [8, 32], strides = [1, 1]} : vector<8x128xf32> to vector<8x32xf32>
    %418 = arith.negf %417 : vector<8x32xf32>
    %419 = math.exp %418 : vector<8x32xf32>
    %cst_97 = arith.constant 1.000000e+00 : f32
    %420 = vector.broadcast %cst_97 : f32 to vector<8x32xf32>
    %421 = arith.addf %420, %419 : vector<8x32xf32>
    %422 = arith.divf %420, %421 : vector<8x32xf32>
    %423 = vector.extract_strided_slice %416 {offsets = [0, 32], sizes = [8, 32], strides = [1, 1]} : vector<8x128xf32> to vector<8x32xf32>
    %424 = arith.negf %423 : vector<8x32xf32>
    %425 = math.exp %424 : vector<8x32xf32>
    %cst_98 = arith.constant 1.000000e+00 : f32
    %426 = vector.broadcast %cst_98 : f32 to vector<8x32xf32>
    %427 = arith.addf %426, %425 : vector<8x32xf32>
    %428 = arith.divf %426, %427 : vector<8x32xf32>
    %429 = vector.extract_strided_slice %416 {offsets = [0, 64], sizes = [8, 32], strides = [1, 1]} : vector<8x128xf32> to vector<8x32xf32>
    %430 = math.tanh %429 : vector<8x32xf32>
    %431 = vector.extract_strided_slice %416 {offsets = [0, 96], sizes = [8, 32], strides = [1, 1]} : vector<8x128xf32> to vector<8x32xf32>
    %432 = arith.negf %431 : vector<8x32xf32>
    %433 = math.exp %432 : vector<8x32xf32>
    %cst_99 = arith.constant 1.000000e+00 : f32
    %434 = vector.broadcast %cst_99 : f32 to vector<8x32xf32>
    %435 = arith.addf %434, %433 : vector<8x32xf32>
    %436 = arith.divf %434, %435 : vector<8x32xf32>
    %437 = arith.mulf %428, %377 : vector<8x32xf32>
    %438 = arith.mulf %422, %430 : vector<8x32xf32>
    %439 = arith.addf %437, %438 : vector<8x32xf32>
    %440 = math.tanh %439 : vector<8x32xf32>
    %441 = arith.mulf %436, %440 : vector<8x32xf32>
    %c6_100 = arith.constant 6 : index
    %c0_101 = arith.constant 0 : index
    %c0_102 = arith.constant 0 : index
    %442 = vector.load %arg11[%c6_100, %c0_101, %c0_102] : memref<8x8x32xf32, #tpu.memory_space<vmem>>, vector<1x8x32xf32>
    %443 = vector.shape_cast %442 : vector<1x8x32xf32> to vector<8x32xf32>
    %444 = vector.shape_cast %413 : vector<8x32xf32> to vector<1x8x32xf32>
    tpu.vector_store %arg11[%c6_100, %c0_101, %c0_102], %444 {strides = array<i32>} : memref<8x8x32xf32, #tpu.memory_space<vmem>>, vector<1x8x32xf32>,
    %c1_103 = arith.constant 1 : index
    %c0_104 = arith.constant 0 : index
    %c0_105 = arith.constant 0 : index
    %445 = vector.load %arg12[%c1_103, %c0_104, %c0_105] : memref<8x8x32xf32, #tpu.memory_space<vmem>>, vector<1x8x32xf32>
    %446 = vector.shape_cast %445 : vector<1x8x32xf32> to vector<8x32xf32>
    %447 = vector.shape_cast %441 : vector<8x32xf32> to vector<1x8x32xf32>
    tpu.vector_store %arg12[%c1_103, %c0_104, %c0_105], %447 {strides = array<i32>} : memref<8x8x32xf32, #tpu.memory_space<vmem>>, vector<1x8x32xf32>,
    %448 = vector.extract_strided_slice %5 {offsets = [56, 0], sizes = [8, 128], strides = [1, 1]} : vector<64x128xf32> to vector<8x128xf32>
    %cst_106 = arith.constant dense<0.000000e+00> : vector<8x128xf32>
    %449 = tpu.matmul %413, %11, %cst_106 {dimension_numbers = #tpu.dot_dimension_numbers<[1], [0], [0], [1], [0, 0, 1, 1], [], []>} : vector<8x32xf32>, vector<32x128xf32>, vector<8x128xf32> -> vector<8x128xf32>
    %450 = arith.addf %448, %449 : vector<8x128xf32>
    %451 = vector.extract_strided_slice %450 {offsets = [0, 0], sizes = [8, 32], strides = [1, 1]} : vector<8x128xf32> to vector<8x32xf32>
    %452 = arith.negf %451 : vector<8x32xf32>
    %453 = math.exp %452 : vector<8x32xf32>
    %cst_107 = arith.constant 1.000000e+00 : f32
    %454 = vector.broadcast %cst_107 : f32 to vector<8x32xf32>
    %455 = arith.addf %454, %453 : vector<8x32xf32>
    %456 = arith.divf %454, %455 : vector<8x32xf32>
    %457 = vector.extract_strided_slice %450 {offsets = [0, 32], sizes = [8, 32], strides = [1, 1]} : vector<8x128xf32> to vector<8x32xf32>
    %458 = arith.negf %457 : vector<8x32xf32>
    %459 = math.exp %458 : vector<8x32xf32>
    %cst_108 = arith.constant 1.000000e+00 : f32
    %460 = vector.broadcast %cst_108 : f32 to vector<8x32xf32>
    %461 = arith.addf %460, %459 : vector<8x32xf32>
    %462 = arith.divf %460, %461 : vector<8x32xf32>
    %463 = vector.extract_strided_slice %450 {offsets = [0, 64], sizes = [8, 32], strides = [1, 1]} : vector<8x128xf32> to vector<8x32xf32>
    %464 = math.tanh %463 : vector<8x32xf32>
    %465 = vector.extract_strided_slice %450 {offsets = [0, 96], sizes = [8, 32], strides = [1, 1]} : vector<8x128xf32> to vector<8x32xf32>
    %466 = arith.negf %465 : vector<8x32xf32>
    %467 = math.exp %466 : vector<8x32xf32>
    %cst_109 = arith.constant 1.000000e+00 : f32
    %468 = vector.broadcast %cst_109 : f32 to vector<8x32xf32>
    %469 = arith.addf %468, %467 : vector<8x32xf32>
    %470 = arith.divf %468, %469 : vector<8x32xf32>
    %471 = arith.mulf %462, %411 : vector<8x32xf32>
    %472 = arith.mulf %456, %464 : vector<8x32xf32>
    %473 = arith.addf %471, %472 : vector<8x32xf32>
    %474 = math.tanh %473 : vector<8x32xf32>
    %475 = arith.mulf %470, %474 : vector<8x32xf32>
    %476 = vector.extract_strided_slice %10 {offsets = [0, 0], sizes = [8, 128], strides = [1, 1]} : vector<64x128xf32> to vector<8x128xf32>
    %cst_110 = arith.constant dense<0.000000e+00> : vector<8x128xf32>
    %477 = tpu.matmul %441, %12, %cst_110 {dimension_numbers = #tpu.dot_dimension_numbers<[1], [0], [0], [1], [0, 0, 1, 1], [], []>} : vector<8x32xf32>, vector<32x128xf32>, vector<8x128xf32> -> vector<8x128xf32>
    %478 = arith.addf %476, %477 : vector<8x128xf32>
    %479 = vector.extract_strided_slice %478 {offsets = [0, 0], sizes = [8, 32], strides = [1, 1]} : vector<8x128xf32> to vector<8x32xf32>
    %480 = arith.negf %479 : vector<8x32xf32>
    %481 = math.exp %480 : vector<8x32xf32>
    %cst_111 = arith.constant 1.000000e+00 : f32
    %482 = vector.broadcast %cst_111 : f32 to vector<8x32xf32>
    %483 = arith.addf %482, %481 : vector<8x32xf32>
    %484 = arith.divf %482, %483 : vector<8x32xf32>
    %485 = vector.extract_strided_slice %478 {offsets = [0, 32], sizes = [8, 32], strides = [1, 1]} : vector<8x128xf32> to vector<8x32xf32>
    %486 = arith.negf %485 : vector<8x32xf32>
    %487 = math.exp %486 : vector<8x32xf32>
    %cst_112 = arith.constant 1.000000e+00 : f32
    %488 = vector.broadcast %cst_112 : f32 to vector<8x32xf32>
    %489 = arith.addf %488, %487 : vector<8x32xf32>
    %490 = arith.divf %488, %489 : vector<8x32xf32>
    %491 = vector.extract_strided_slice %478 {offsets = [0, 64], sizes = [8, 32], strides = [1, 1]} : vector<8x128xf32> to vector<8x32xf32>
    %492 = math.tanh %491 : vector<8x32xf32>
    %493 = vector.extract_strided_slice %478 {offsets = [0, 96], sizes = [8, 32], strides = [1, 1]} : vector<8x128xf32> to vector<8x32xf32>
    %494 = arith.negf %493 : vector<8x32xf32>
    %495 = math.exp %494 : vector<8x32xf32>
    %cst_113 = arith.constant 1.000000e+00 : f32
    %496 = vector.broadcast %cst_113 : f32 to vector<8x32xf32>
    %497 = arith.addf %496, %495 : vector<8x32xf32>
    %498 = arith.divf %496, %497 : vector<8x32xf32>
    %499 = arith.mulf %490, %439 : vector<8x32xf32>
    %500 = arith.mulf %484, %492 : vector<8x32xf32>
    %501 = arith.addf %499, %500 : vector<8x32xf32>
    %502 = math.tanh %501 : vector<8x32xf32>
    %503 = arith.mulf %498, %502 : vector<8x32xf32>
    %c7_114 = arith.constant 7 : index
    %c0_115 = arith.constant 0 : index
    %c0_116 = arith.constant 0 : index
    %504 = vector.load %arg11[%c7_114, %c0_115, %c0_116] : memref<8x8x32xf32, #tpu.memory_space<vmem>>, vector<1x8x32xf32>
    %505 = vector.shape_cast %504 : vector<1x8x32xf32> to vector<8x32xf32>
    %506 = vector.shape_cast %475 : vector<8x32xf32> to vector<1x8x32xf32>
    tpu.vector_store %arg11[%c7_114, %c0_115, %c0_116], %506 {strides = array<i32>} : memref<8x8x32xf32, #tpu.memory_space<vmem>>, vector<1x8x32xf32>,
    %c0_117 = arith.constant 0 : index
    %c0_118 = arith.constant 0 : index
    %c0_119 = arith.constant 0 : index
    %507 = vector.load %arg12[%c0_117, %c0_118, %c0_119] : memref<8x8x32xf32, #tpu.memory_space<vmem>>, vector<1x8x32xf32>
    %508 = vector.shape_cast %507 : vector<1x8x32xf32> to vector<8x32xf32>
    %509 = vector.shape_cast %503 : vector<8x32xf32> to vector<1x8x32xf32>
    tpu.vector_store %arg12[%c0_117, %c0_118, %c0_119], %509 {strides = array<i32>} : memref<8x8x32xf32, #tpu.memory_space<vmem>>, vector<1x8x32xf32>,
    %510 = tpu.concatenate %475, %503 in 1 : vector<8x32xf32>, vector<8x32xf32> -> vector<8x64xf32>
    %511 = tpu.concatenate %473, %501 in 1 : vector<8x32xf32>, vector<8x32xf32> -> vector<8x64xf32>
    %c0_120 = arith.constant 0 : index
    %c0_121 = arith.constant 0 : index
    %512 = vector.load %arg7[%c0_120, %c0_121] : memref<64x32xf32, #tpu.memory_space<vmem>>, vector<64x32xf32>
    %cst_122 = arith.constant dense<0.000000e+00> : vector<8x32xf32>
    %513 = tpu.matmul %510, %512, %cst_122 {dimension_numbers = #tpu.dot_dimension_numbers<[1], [0], [0], [1], [0, 0, 1, 1], [], []>} : vector<8x64xf32>, vector<64x32xf32>, vector<8x32xf32> -> vector<8x32xf32>
    %c0_123 = arith.constant 0 : index
    %c0_124 = arith.constant 0 : index
    %514 = vector.load %arg8[%c0_123, %c0_124] : memref<1x32xf32, #tpu.memory_space<vmem>>, vector<1x32xf32>
    %515 = vector.broadcast %514 : vector<1x32xf32> to vector<8x32xf32>
    %516 = arith.addf %513, %515 : vector<8x32xf32>
    %c0_125 = arith.constant 0 : index
    %c0_126 = arith.constant 0 : index
    %517 = vector.load %arg13[%c0_125, %c0_126] : memref<8x32xf32, #tpu.memory_space<vmem>>, vector<8x32xf32>
    tpu.vector_store %arg13[%c0_125, %c0_126], %516 {strides = array<i32>} : memref<8x32xf32, #tpu.memory_space<vmem>>, vector<8x32xf32>,
    %c0_127 = arith.constant 0 : index
    %c0_128 = arith.constant 0 : index
    %518 = vector.load %arg9[%c0_127, %c0_128] : memref<64x32xf32, #tpu.memory_space<vmem>>, vector<64x32xf32>
    %cst_129 = arith.constant dense<0.000000e+00> : vector<8x32xf32>
    %519 = tpu.matmul %511, %518, %cst_129 {dimension_numbers = #tpu.dot_dimension_numbers<[1], [0], [0], [1], [0, 0, 1, 1], [], []>} : vector<8x64xf32>, vector<64x32xf32>, vector<8x32xf32> -> vector<8x32xf32>
    %c0_130 = arith.constant 0 : index
    %c0_131 = arith.constant 0 : index
    %520 = vector.load %arg10[%c0_130, %c0_131] : memref<1x32xf32, #tpu.memory_space<vmem>>, vector<1x32xf32>
    %521 = vector.broadcast %520 : vector<1x32xf32> to vector<8x32xf32>
    %522 = arith.addf %519, %521 : vector<8x32xf32>
    %c0_132 = arith.constant 0 : index
    %c0_133 = arith.constant 0 : index
    %523 = vector.load %arg14[%c0_132, %c0_133] : memref<8x32xf32, #tpu.memory_space<vmem>>, vector<8x32xf32>
    tpu.vector_store %arg14[%c0_132, %c0_133], %522 {strides = array<i32>} : memref<8x32xf32, #tpu.memory_space<vmem>>, vector<8x32xf32>,
    return
  }
}

</mosaic_0001>

<llo_original>
// kernel: seq2seq_forward.2
$region0: #{seq2seq_forward.2}
  #allocation0 [shape = 'u32[]', space=smem, size = 0x4, offset = 0x4, fixed_abs, tag = 'smem constant byte address 0x4 - core index']
  #allocation1 [shape = 'u32[144,128]{1,0:T(1,128)}', space=vmem, size = 0x12000, scoped, tag = 'internal scratch']
  %s0 = inlined_call_operand.vmem [shape: f32[64,16], index: 0, kind: input, shape index: {}]
  %s1 = inlined_call_operand.vmem [shape: f32[16,128], index: 1, kind: input, shape index: {}]
  %s2 = inlined_call_operand.vmem [shape: f32[32,128], index: 2, kind: input, shape index: {}]
  %s3 = inlined_call_operand.vmem [shape: f32[1,128], index: 3, kind: input, shape index: {}]
  %s4 = inlined_call_operand.vmem [shape: f32[16,128], index: 4, kind: input, shape index: {}]
  %s5 = inlined_call_operand.vmem [shape: f32[32,128], index: 5, kind: input, shape index: {}]
  %s6 = inlined_call_operand.vmem [shape: f32[1,128], index: 6, kind: input, shape index: {}]
  %s7 = inlined_call_operand.vmem [shape: f32[64,32], index: 7, kind: input, shape index: {}]
  %s8 = inlined_call_operand.vmem [shape: f32[1,32], index: 8, kind: input, shape index: {}]
  %s9 = inlined_call_operand.vmem [shape: f32[64,32], index: 9, kind: input, shape index: {}]
  %s10 = inlined_call_operand.vmem [shape: f32[1,32], index: 10, kind: input, shape index: {}]
  %s11 = inlined_call_operand.vmem [shape: f32[8,8,32], index: 11, kind: output, shape index: {0}]
  %s12 = inlined_call_operand.vmem [shape: f32[8,8,32], index: 12, kind: output, shape index: {1}]
  %s13 = inlined_call_operand.vmem [shape: f32[8,32], index: 13, kind: output, shape index: {2}]
  %s14 = inlined_call_operand.vmem [shape: f32[8,32], index: 14, kind: output, shape index: {3}]
  %15 = xla_tuple %s11, %s12, %s13, %s14
  %s16 = sld [smem:[#allocation0]]
  $region78: #{seq2seq_forward.2} parent=0
    _
  %s18 = ssub.s32 1, %s16
  %s19 = scalar_select 0, %s18, %s16
  // Predicated region
  $region2: #{seq2seq_forward.2} parent=0 // pred_check
    _
  $region3: #{seq2seq_forward.2} parent=0 // pred_check_branch
    %21 = sbr.rel (0) target = $region5
  $region4: #{seq2seq_forward.2} parent=0 // pred_region
    _
  $region5: #{seq2seq_forward.2} parent=0 // pred_fallthru
    _
  // Predicated region
  $region6: #{seq2seq_forward.2} parent=0 // pred_check
    _
  $region7: #{seq2seq_forward.2} parent=0 // pred_check_branch
    %23 = sbr.rel (0) target = $region9
  $region8: #{seq2seq_forward.2} parent=0 // pred_region
    _
  $region9: #{seq2seq_forward.2} parent=0 // pred_fallthru
    _
  // Predicated region
  $region10: #{seq2seq_forward.2} parent=0 // pred_check
    _
  $region11: #{seq2seq_forward.2} parent=0 // pred_check_branch
    %25 = sbr.rel (0) target = $region13
  $region12: #{seq2seq_forward.2} parent=0 // pred_region
    _
  $region13: #{seq2seq_forward.2} parent=0 // pred_fallthru
    _
  // Predicated region
  $region14: #{seq2seq_forward.2} parent=0 // pred_check
    _
  $region15: #{seq2seq_forward.2} parent=0 // pred_check_branch
    %27 = sbr.rel (0) target = $region17
  $region16: #{seq2seq_forward.2} parent=0 // pred_region
    _
  $region17: #{seq2seq_forward.2} parent=0 // pred_fallthru
    _
  // Predicated region
  $region18: #{seq2seq_forward.2} parent=0 // pred_check
    _
  $region19: #{seq2seq_forward.2} parent=0 // pred_check_branch
    %29 = sbr.rel (0) target = $region21
  $region20: #{seq2seq_forward.2} parent=0 // pred_region
    _
  $region21: #{seq2seq_forward.2} parent=0 // pred_fallthru
    _
  // Predicated region
  $region22: #{seq2seq_forward.2} parent=0 // pred_check
    _
  $region23: #{seq2seq_forward.2} parent=0 // pred_check_branch
    %31 = sbr.rel (0) target = $region25
  $region24: #{seq2seq_forward.2} parent=0 // pred_region
    _
  $region25: #{seq2seq_forward.2} parent=0 // pred_fallthru
    _
  // Predicated region
  $region26: #{seq2seq_forward.2} parent=0 // pred_check
    _
  $region27: #{seq2seq_forward.2} parent=0 // pred_check_branch
    %33 = sbr.rel (0) target = $region29
  $region28: #{seq2seq_forward.2} parent=0 // pred_region
    _
  $region29: #{seq2seq_forward.2} parent=0 // pred_fallthru
    _
  // Predicated region
  $region30: #{seq2seq_forward.2} parent=0 // pred_check
    _
  $region31: #{seq2seq_forward.2} parent=0 // pred_check_branch
    %35 = sbr.rel (0) target = $region33
  $region32: #{seq2seq_forward.2} parent=0 // pred_region
    _
  $region33: #{seq2seq_forward.2} parent=0 // pred_fallthru
    _
  // Predicated region
  $region34: #{seq2seq_forward.2} parent=0 // pred_check
    _
  $region35: #{seq2seq_forward.2} parent=0 // pred_check_branch
    %37 = sbr.rel (0) target = $region37
  $region36: #{seq2seq_forward.2} parent=0 // pred_region
    _
  $region37: #{seq2seq_forward.2} parent=0 // pred_fallthru
    _
  // Predicated region
  $region38: #{seq2seq_forward.2} parent=0 // pred_check
    _
  $region39: #{seq2seq_forward.2} parent=0 // pred_check_branch
    %39 = sbr.rel (0) target = $region41
  $region40: #{seq2seq_forward.2} parent=0 // pred_region
    _
  $region41: #{seq2seq_forward.2} parent=0 // pred_fallthru
    _
  // Predicated region
  $region42: #{seq2seq_forward.2} parent=0 // pred_check
    _
  $region43: #{seq2seq_forward.2} parent=0 // pred_check_branch
    %41 = sbr.rel (0) target = $region45
  $region44: #{seq2seq_forward.2} parent=0 // pred_region
    _
  $region45: #{seq2seq_forward.2} parent=0 // pred_fallthru
    _
  %v42 = vld [vmem:[%s0] sm:$0xff]
  %v43 = vld [vmem:[%s0 + $0x8] sm:$0xff]
  %v44 = vld [vmem:[%s0 + $0x10] sm:$0xff]
  %v45 = vld [vmem:[%s0 + $0x18] sm:$0xff]
  %v46 = vld [vmem:[%s0 + $0x20] sm:$0xff]
  %v47 = vld [vmem:[%s0 + $0x28] sm:$0xff]
  %v48 = vld [vmem:[%s0 + $0x30] sm:$0xff]
  %v49 = vld [vmem:[%s0 + $0x38] sm:$0xff]
  %v50 = vld [vmem:[%s1] sm:$0xff]
  %v51 = vld [vmem:[%s1 + $0x8] sm:$0xff]
  %v52 = vld [vmem:[%s3] sm:$0x1]
  %v54 = vlaneseq
  %v55 = vshrl.u32 %v54, 7
  %v56 = vsub.s32 0, %v55
  %v57 = vrot.slane %v52, %v56
  %vm59 = vcmask 130048
  %v61 = vsel %vm59, %v42, 0
  %v64 = vsel %vm59, %v43, 0
  %v67 = vsel %vm59, %v44, 0
  %v70 = vsel %vm59, %v45, 0
  %v73 = vsel %vm59, %v46, 0
  %v76 = vsel %vm59, %v47, 0
  %v79 = vsel %vm59, %v48, 0
  %v82 = vsel %vm59, %v49, 0
  %84 = vmatprep.subr.mxu0 0.0
  %85 = vmatpush1.msra.mxu0 0.0
  %86 = vmatprep.subr.mxu0 0.0
  %87 = vmatpush1.msra.mxu0 0.0
  %88 = vmatprep.subr.mxu0 0.0
  %89 = vmatpush1.msra.mxu0 0.0
  %90 = vmatprep.subr.mxu0 0.0
  %91 = vmatpush1.msra.mxu0 0.0
  %92 = vmatprep.subr.mxu0 0.0
  %93 = vmatpush1.msra.mxu0 0.0
  %94 = vmatprep.subr.mxu0 0.0
  %95 = vmatpush1.msra.mxu0 0.0
  %96 = vmatprep.subr.mxu0 0.0
  %97 = vmatpush1.msra.mxu0 0.0
  %98 = vmatprep.subr.mxu0 0.0
  %99 = vmatpush1.msra.mxu0 0.0
  %100 = vmatprep.subr.mxu0 0.0
  %101 = vmatpush1.msra.mxu0 0.0
  %102 = vmatprep.subr.mxu0 0.0
  %103 = vmatpush1.msra.mxu0 0.0
  %104 = vmatprep.subr.mxu0 0.0
  %105 = vmatpush1.msra.mxu0 0.0
  %106 = vmatprep.subr.mxu0 0.0
  %107 = vmatpush1.msra.mxu0 0.0
  %108 = vmatprep.subr.mxu0 0.0
  %109 = vmatpush1.msra.mxu0 0.0
  %110 = vmatprep.subr.mxu0 0.0
  %111 = vmatpush1.msra.mxu0 0.0
  %112 = vmatprep.subr.mxu0 0.0
  %113 = vmatpush1.msra.mxu0 %v51
  %114 = vmatprep.subr.mxu0 0.0
  %115 = vmatpush1.msra.mxu0 %v50
  %116 = vmatprep.subr.mxu0 0.0
  %117 = vmatpush2.msra.mxu0 0.0
  %118 = vmatprep.subr.mxu0 0.0
  %119 = vmatpush2.msra.mxu0 0.0
  %120 = vmatprep.subr.mxu0 0.0
  %121 = vmatpush2.msra.mxu0 0.0
  %122 = vmatprep.subr.mxu0 0.0
  %123 = vmatpush2.msra.mxu0 0.0
  %124 = vmatprep.subr.mxu0 0.0
  %125 = vmatpush2.msra.mxu0 0.0
  %126 = vmatprep.subr.mxu0 0.0
  %127 = vmatpush2.msra.mxu0 0.0
  %128 = vmatprep.subr.mxu0 0.0
  %129 = vmatpush2.msra.mxu0 0.0
  %130 = vmatprep.subr.mxu0 0.0
  %131 = vmatpush2.msra.mxu0 0.0
  %132 = vmatprep.subr.mxu0 0.0
  %133 = vmatpush2.msra.mxu0 0.0
  %134 = vmatprep.subr.mxu0 0.0
  %135 = vmatpush2.msra.mxu0 0.0
  %136 = vmatprep.subr.mxu0 0.0
  %137 = vmatpush2.msra.mxu0 0.0
  %138 = vmatprep.subr.mxu0 0.0
  %139 = vmatpush2.msra.mxu0 0.0
  %140 = vmatprep.subr.mxu0 0.0
  %141 = vmatpush2.msra.mxu0 0.0
  %142 = vmatprep.subr.mxu0 0.0
  %143 = vmatpush2.msra.mxu0 0.0
  %144 = vmatprep.subr.mxu0 0.0
  %145 = vmatpush2.msra.mxu0 0.0
  %146 = vmatprep.subr.mxu0 0.0
  %147 = vmatpush2.msra.mxu0 0.0
  %148 = vmatprep.mubr.f32.mxu0 0.0
  %149 = vmatmul.mubr.f32.gmra.mxu0 %v61
  %v150 = vpop.f32.mrf.mxu0
  %v151 = vadd.f32 %v57, %v150
  %v152 = vpop.f32.mrf.mxu0
  %153 = vmatprep.mubr.f32.mxu0 0.0
  %154 = vmatmul.mubr.f32.gmra.mxu0 %v64
  %v155 = vpop.f32.mrf.mxu0
  %v156 = vadd.f32 %v57, %v155
  %v157 = vpop.f32.mrf.mxu0
  %158 = vmatprep.mubr.f32.mxu0 0.0
  %159 = vmatmul.mubr.f32.gmra.mxu0 %v67
  %v160 = vpop.f32.mrf.mxu0
  %v161 = vadd.f32 %v57, %v160
  %v162 = vpop.f32.mrf.mxu0
  %163 = vmatprep.mubr.f32.mxu0 0.0
  %164 = vmatmul.mubr.f32.gmra.mxu0 %v70
  %v165 = vpop.f32.mrf.mxu0
  %v166 = vadd.f32 %v57, %v165
  %v167 = vpop.f32.mrf.mxu0
  %168 = vmatprep.mubr.f32.mxu0 0.0
  %169 = vmatmul.mubr.f32.gmra.mxu0 %v73
  %v170 = vpop.f32.mrf.mxu0
  %v171 = vadd.f32 %v57, %v170
  %v172 = vpop.f32.mrf.mxu0
  %173 = vmatprep.mubr.f32.mxu0 0.0
  %174 = vmatmul.mubr.f32.gmra.mxu0 %v76
  %v175 = vpop.f32.mrf.mxu0
  %v176 = vadd.f32 %v57, %v175
  %v177 = vpop.f32.mrf.mxu0
  %178 = vmatprep.mubr.f32.mxu0 0.0
  %179 = vmatmul.mubr.f32.gmra.mxu0 %v79
  %v180 = vpop.f32.mrf.mxu0
  %v181 = vadd.f32 %v57, %v180
  %v182 = vpop.f32.mrf.mxu0
  %183 = vmatprep.mubr.f32.mxu0 0.0
  %184 = vmatmul.mubr.f32.gmra.mxu0 %v82
  %v185 = vpop.f32.mrf.mxu0
  %v186 = vadd.f32 %v57, %v185
  %v187 = vpop.f32.mrf.mxu0
  %188 = vdwg.mxu0
  %v189 = vld [vmem:[%s4] sm:$0xff]
  %v190 = vld [vmem:[%s4 + $0x8] sm:$0xff]
  %v191 = vld [vmem:[%s6] sm:$0x1]
  %v193 = vlaneseq
  %v194 = vshrl.u32 %v193, 7
  %v195 = vsub.s32 0, %v194
  %v196 = vrot.slane %v191, %v195
  %198 = vmatprep.subr.mxu0 0.0
  %199 = vmatpush1.msra.mxu0 0.0
  %200 = vmatprep.subr.mxu0 0.0
  %201 = vmatpush1.msra.mxu0 0.0
  %202 = vmatprep.subr.mxu0 0.0
  %203 = vmatpush1.msra.mxu0 0.0
  %204 = vmatprep.subr.mxu0 0.0
  %205 = vmatpush1.msra.mxu0 0.0
  %206 = vmatprep.subr.mxu0 0.0
  %207 = vmatpush1.msra.mxu0 0.0
  %208 = vmatprep.subr.mxu0 0.0
  %209 = vmatpush1.msra.mxu0 0.0
  %210 = vmatprep.subr.mxu0 0.0
  %211 = vmatpush1.msra.mxu0 0.0
  %212 = vmatprep.subr.mxu0 0.0
  %213 = vmatpush1.msra.mxu0 0.0
  %214 = vmatprep.subr.mxu0 0.0
  %215 = vmatpush1.msra.mxu0 0.0
  %216 = vmatprep.subr.mxu0 0.0
  %217 = vmatpush1.msra.mxu0 0.0
  %218 = vmatprep.subr.mxu0 0.0
  %219 = vmatpush1.msra.mxu0 0.0
  %220 = vmatprep.subr.mxu0 0.0
  %221 = vmatpush1.msra.mxu0 0.0
  %222 = vmatprep.subr.mxu0 0.0
  %223 = vmatpush1.msra.mxu0 0.0
  %224 = vmatprep.subr.mxu0 0.0
  %225 = vmatpush1.msra.mxu0 0.0
  %226 = vmatprep.subr.mxu0 0.0
  %227 = vmatpush1.msra.mxu0 %v190
  %228 = vmatprep.subr.mxu0 0.0
  %229 = vmatpush1.msra.mxu0 %v189
  %230 = vmatprep.subr.mxu0 0.0
  %231 = vmatpush2.msra.mxu0 0.0
  %232 = vmatprep.subr.mxu0 0.0
  %233 = vmatpush2.msra.mxu0 0.0
  %234 = vmatprep.subr.mxu0 0.0
  %235 = vmatpush2.msra.mxu0 0.0
  %236 = vmatprep.subr.mxu0 0.0
  %237 = vmatpush2.msra.mxu0 0.0
  %238 = vmatprep.subr.mxu0 0.0
  %239 = vmatpush2.msra.mxu0 0.0
  %240 = vmatprep.subr.mxu0 0.0
  %241 = vmatpush2.msra.mxu0 0.0
  %242 = vmatprep.subr.mxu0 0.0
  %243 = vmatpush2.msra.mxu0 0.0
  %244 = vmatprep.subr.mxu0 0.0
  %245 = vmatpush2.msra.mxu0 0.0
  %246 = vmatprep.subr.mxu0 0.0
  %247 = vmatpush2.msra.mxu0 0.0
  %248 = vmatprep.subr.mxu0 0.0
  %249 = vmatpush2.msra.mxu0 0.0
  %250 = vmatprep.subr.mxu0 0.0
  %251 = vmatpush2.msra.mxu0 0.0
  %252 = vmatprep.subr.mxu0 0.0
  %253 = vmatpush2.msra.mxu0 0.0
  %254 = vmatprep.subr.mxu0 0.0
  %255 = vmatpush2.msra.mxu0 0.0
  %256 = vmatprep.subr.mxu0 0.0
  %257 = vmatpush2.msra.mxu0 0.0
  %258 = vmatprep.subr.mxu0 0.0
  %259 = vmatpush2.msra.mxu0 0.0
  %260 = vmatprep.subr.mxu0 0.0
  %261 = vmatpush2.msra.mxu0 0.0
  %262 = vmatprep.mubr.f32.mxu0 0.0
  %263 = vmatmul.mubr.f32.gmra.mxu0 %v61
  %v264 = vpop.f32.mrf.mxu0
  %v265 = vadd.f32 %v196, %v264
  %v266 = vpop.f32.mrf.mxu0
  %267 = vmatprep.mubr.f32.mxu0 0.0
  %268 = vmatmul.mubr.f32.gmra.mxu0 %v64
  %v269 = vpop.f32.mrf.mxu0
  %v270 = vadd.f32 %v196, %v269
  %v271 = vpop.f32.mrf.mxu0
  %272 = vmatprep.mubr.f32.mxu0 0.0
  %273 = vmatmul.mubr.f32.gmra.mxu0 %v67
  %v274 = vpop.f32.mrf.mxu0
  %v275 = vadd.f32 %v196, %v274
  %v276 = vpop.f32.mrf.mxu0
  %277 = vmatprep.mubr.f32.mxu0 0.0
  %278 = vmatmul.mubr.f32.gmra.mxu0 %v70
  %v279 = vpop.f32.mrf.mxu0
  %v280 = vadd.f32 %v196, %v279
  %v281 = vpop.f32.mrf.mxu0
  %282 = vmatprep.mubr.f32.mxu0 0.0
  %283 = vmatmul.mubr.f32.gmra.mxu0 %v73
  %v284 = vpop.f32.mrf.mxu0
  %v285 = vadd.f32 %v196, %v284
  %v286 = vpop.f32.mrf.mxu0
  %287 = vmatprep.mubr.f32.mxu0 0.0
  %288 = vmatmul.mubr.f32.gmra.mxu0 %v76
  %v289 = vpop.f32.mrf.mxu0
  %v290 = vadd.f32 %v196, %v289
  %v291 = vpop.f32.mrf.mxu0
  %292 = vmatprep.mubr.f32.mxu0 0.0
  %293 = vmatmul.mubr.f32.gmra.mxu0 %v79
  %v294 = vpop.f32.mrf.mxu0
  %v295 = vadd.f32 %v196, %v294
  %v296 = vpop.f32.mrf.mxu0
  %297 = vmatprep.mubr.f32.mxu0 0.0
  %298 = vmatmul.mubr.f32.gmra.mxu0 %v82
  %v299 = vpop.f32.mrf.mxu0
  %v300 = vadd.f32 %v196, %v299
  %v301 = vpop.f32.mrf.mxu0
  %302 = vdwg.mxu0
  %v303 = vld [vmem:[%s2] sm:$0xff]
  %v304 = vld [vmem:[%s2 + $0x8] sm:$0xff]
  %v305 = vld [vmem:[%s2 + $0x10] sm:$0xff]
  %v306 = vld [vmem:[%s2 + $0x18] sm:$0xff]
  %v307 = vld [vmem:[%s5] sm:$0xff]
  %v308 = vld [vmem:[%s5 + $0x8] sm:$0xff]
  %v309 = vld [vmem:[%s5 + $0x10] sm:$0xff]
  %v310 = vld [vmem:[%s5 + $0x18] sm:$0xff]
  %vm311 = vcmask 261120
  %v313 = vsel %vm311, 0.0, 0
  %315 = vmatprep.subr.mxu0 0.0
  %316 = vmatpush1.msra.mxu0 0.0
  %317 = vmatprep.subr.mxu0 0.0
  %318 = vmatpush1.msra.mxu0 0.0
  %319 = vmatprep.subr.mxu0 0.0
  %320 = vmatpush1.msra.mxu0 0.0
  %321 = vmatprep.subr.mxu0 0.0
  %322 = vmatpush1.msra.mxu0 0.0
  %323 = vmatprep.subr.mxu0 0.0
  %324 = vmatpush1.msra.mxu0 0.0
  %325 = vmatprep.subr.mxu0 0.0
  %326 = vmatpush1.msra.mxu0 0.0
  %327 = vmatprep.subr.mxu0 0.0
  %328 = vmatpush1.msra.mxu0 0.0
  %329 = vmatprep.subr.mxu0 0.0
  %330 = vmatpush1.msra.mxu0 0.0
  %331 = vmatprep.subr.mxu0 0.0
  %332 = vmatpush1.msra.mxu0 0.0
  %333 = vmatprep.subr.mxu0 0.0
  %334 = vmatpush1.msra.mxu0 0.0
  %335 = vmatprep.subr.mxu0 0.0
  %336 = vmatpush1.msra.mxu0 0.0
  %337 = vmatprep.subr.mxu0 0.0
  %338 = vmatpush1.msra.mxu0 0.0
  %339 = vmatprep.subr.mxu0 0.0
  %340 = vmatpush1.msra.mxu0 %v306
  %341 = vmatprep.subr.mxu0 0.0
  %342 = vmatpush1.msra.mxu0 %v305
  %343 = vmatprep.subr.mxu0 0.0
  %344 = vmatpush1.msra.mxu0 %v304
  %345 = vmatprep.subr.mxu0 0.0
  %346 = vmatpush1.msra.mxu0 %v303
  %347 = vmatprep.subr.mxu0 0.0
  %348 = vmatpush2.msra.mxu0 0.0
  %349 = vmatprep.subr.mxu0 0.0
  %350 = vmatpush2.msra.mxu0 0.0
  %351 = vmatprep.subr.mxu0 0.0
  %352 = vmatpush2.msra.mxu0 0.0
  %353 = vmatprep.subr.mxu0 0.0
  %354 = vmatpush2.msra.mxu0 0.0
  %355 = vmatprep.subr.mxu0 0.0
  %356 = vmatpush2.msra.mxu0 0.0
  %357 = vmatprep.subr.mxu0 0.0
  %358 = vmatpush2.msra.mxu0 0.0
  %359 = vmatprep.subr.mxu0 0.0
  %360 = vmatpush2.msra.mxu0 0.0
  %361 = vmatprep.subr.mxu0 0.0
  %362 = vmatpush2.msra.mxu0 0.0
  %363 = vmatprep.subr.mxu0 0.0
  %364 = vmatpush2.msra.mxu0 0.0
  %365 = vmatprep.subr.mxu0 0.0
  %366 = vmatpush2.msra.mxu0 0.0
  %367 = vmatprep.subr.mxu0 0.0
  %368 = vmatpush2.msra.mxu0 0.0
  %369 = vmatprep.subr.mxu0 0.0
  %370 = vmatpush2.msra.mxu0 0.0
  %371 = vmatprep.subr.mxu0 0.0
  %372 = vmatpush2.msra.mxu0 0.0
  %373 = vmatprep.subr.mxu0 0.0
  %374 = vmatpush2.msra.mxu0 0.0
  %375 = vmatprep.subr.mxu0 0.0
  %376 = vmatpush2.msra.mxu0 0.0
  %377 = vmatprep.subr.mxu0 0.0
  %378 = vmatpush2.msra.mxu0 0.0
  %379 = vmatprep.mubr.f32.mxu0 0.0
  %380 = vmatmul.mubr.f32.gmra.mxu0 %v313
  %v381 = vpop.f32.mrf.mxu0
  %v382 = vadd.f32 0.0, %v381
  %v383 = vpop.f32.mrf.mxu0
  %384 = vdwg.mxu0
  %v385 = vadd.f32 %v151, %v382
  %v386 = vxor.u32 %v385, 2147483648
  %v387 = vmul.f32 %v386, 1.442695
  %v388 = vpow.pop %v387
  %v389 = vadd.f32 %v388, 1.0
  %v390 = vrcp.pop %v389
  %v391 = vmul.f32 1.0, %v390
  %v392 = vtanh.pop %v385
  %v393 = vmul.f32 %v391, 0.0
  %395 = vrot.lane.b32.xlu0 %v392, 64
  %v396 = vpop.permute.xlu0 %395
  %v398 = vmul.f32 %v391, %v396
  %400 = vrot.lane.b32.xlu0 %v398, 32
  %v401 = vpop.permute.xlu0 %400
  %v403 = vadd.f32 %v393, %v401
  %v404 = vtanh.pop %v403
  %406 = vrot.lane.b32.xlu0 %v404, 64
  %v407 = vpop.permute.xlu0 %406
  %v409 = vmul.f32 %v391, %v407
  %410 = vmatprep.subr.mxu0 0.0
  %411 = vmatpush1.msra.mxu0 0.0
  %412 = vmatprep.subr.mxu0 0.0
  %413 = vmatpush1.msra.mxu0 0.0
  %414 = vmatprep.subr.mxu0 0.0
  %415 = vmatpush1.msra.mxu0 0.0
  %416 = vmatprep.subr.mxu0 0.0
  %417 = vmatpush1.msra.mxu0 0.0
  %418 = vmatprep.subr.mxu0 0.0
  %419 = vmatpush1.msra.mxu0 0.0
  %420 = vmatprep.subr.mxu0 0.0
  %421 = vmatpush1.msra.mxu0 0.0
  %422 = vmatprep.subr.mxu0 0.0
  %423 = vmatpush1.msra.mxu0 0.0
  %424 = vmatprep.subr.mxu0 0.0
  %425 = vmatpush1.msra.mxu0 0.0
  %426 = vmatprep.subr.mxu0 0.0
  %427 = vmatpush1.msra.mxu0 0.0
  %428 = vmatprep.subr.mxu0 0.0
  %429 = vmatpush1.msra.mxu0 0.0
  %430 = vmatprep.subr.mxu0 0.0
  %431 = vmatpush1.msra.mxu0 0.0
  %432 = vmatprep.subr.mxu0 0.0
  %433 = vmatpush1.msra.mxu0 0.0
  %434 = vmatprep.subr.mxu0 0.0
  %435 = vmatpush1.msra.mxu0 %v310
  %436 = vmatprep.subr.mxu0 0.0
  %437 = vmatpush1.msra.mxu0 %v309
  %438 = vmatprep.subr.mxu0 0.0
  %439 = vmatpush1.msra.mxu0 %v308
  %440 = vmatprep.subr.mxu0 0.0
  %441 = vmatpush1.msra.mxu0 %v307
  %442 = vmatprep.subr.mxu0 0.0
  %443 = vmatpush2.msra.mxu0 0.0
  %444 = vmatprep.subr.mxu0 0.0
  %445 = vmatpush2.msra.mxu0 0.0
  %446 = vmatprep.subr.mxu0 0.0
  %447 = vmatpush2.msra.mxu0 0.0
  %448 = vmatprep.subr.mxu0 0.0
  %449 = vmatpush2.msra.mxu0 0.0
  %450 = vmatprep.subr.mxu0 0.0
  %451 = vmatpush2.msra.mxu0 0.0
  %452 = vmatprep.subr.mxu0 0.0
  %453 = vmatpush2.msra.mxu0 0.0
  %454 = vmatprep.subr.mxu0 0.0
  %455 = vmatpush2.msra.mxu0 0.0
  %456 = vmatprep.subr.mxu0 0.0
  %457 = vmatpush2.msra.mxu0 0.0
  %458 = vmatprep.subr.mxu0 0.0
  %459 = vmatpush2.msra.mxu0 0.0
  %460 = vmatprep.subr.mxu0 0.0
  %461 = vmatpush2.msra.mxu0 0.0
  %462 = vmatprep.subr.mxu0 0.0
  %463 = vmatpush2.msra.mxu0 0.0
  %464 = vmatprep.subr.mxu0 0.0
  %465 = vmatpush2.msra.mxu0 0.0
  %466 = vmatprep.subr.mxu0 0.0
  %467 = vmatpush2.msra.mxu0 0.0
  %468 = vmatprep.subr.mxu0 0.0
  %469 = vmatpush2.msra.mxu0 0.0
  %470 = vmatprep.subr.mxu0 0.0
  %471 = vmatpush2.msra.mxu0 0.0
  %472 = vmatprep.subr.mxu0 0.0
  %473 = vmatpush2.msra.mxu0 0.0
  %474 = vmatprep.mubr.f32.mxu0 0.0
  %475 = vmatmul.mubr.f32.gmra.mxu0 %v313
  %v476 = vpop.f32.mrf.mxu0
  %v477 = vadd.f32 0.0, %v476
  %v478 = vpop.f32.mrf.mxu0
  %479 = vdwg.mxu0
  %v480 = vadd.f32 %v300, %v477
  %v481 = vxor.u32 %v480, 2147483648
  %v482 = vmul.f32 %v481, 1.442695
  %v483 = vpow.pop %v482
  %v484 = vadd.f32 %v483, 1.0
  %v485 = vrcp.pop %v484
  %v486 = vmul.f32 1.0, %v485
  %v487 = vtanh.pop %v480
  %v488 = vmul.f32 %v486, 0.0
  %490 = vrot.lane.b32.xlu0 %v487, 64
  %v491 = vpop.permute.xlu0 %490
  %v493 = vmul.f32 %v486, %v491
  %495 = vrot.lane.b32.xlu0 %v493, 32
  %v496 = vpop.permute.xlu0 %495
  %v498 = vadd.f32 %v488, %v496
  %v499 = vtanh.pop %v498
  %501 = vrot.lane.b32.xlu0 %v499, 64
  %v502 = vpop.permute.xlu0 %501
  %v504 = vmul.f32 %v486, %v502
  %506 = vrot.lane.b32.xlu0 %v409, 32
  %v507 = vpop.permute.xlu0 %506
  %509 = vst.msk [vmem:[%s11] sm:$0xff] %vm311, %v507
  %511 = vrot.lane.b32.xlu0 %v504, 32
  %v512 = vpop.permute.xlu0 %511
  %s514 = scalar_lea.vmem %s12, 56
  %515 = vst.msk [vmem:[%s514] sm:$0xff] %vm311, %v512
  %v516 = vsel %vm311, %v507, 0
  %518 = vmatprep.subr.mxu0 0.0
  %519 = vmatpush1.msra.mxu0 0.0
  %520 = vmatprep.subr.mxu0 0.0
  %521 = vmatpush1.msra.mxu0 0.0
  %522 = vmatprep.subr.mxu0 0.0
  %523 = vmatpush1.msra.mxu0 0.0
  %524 = vmatprep.subr.mxu0 0.0
  %525 = vmatpush1.msra.mxu0 0.0
  %526 = vmatprep.subr.mxu0 0.0
  %527 = vmatpush1.msra.mxu0 0.0
  %528 = vmatprep.subr.mxu0 0.0
  %529 = vmatpush1.msra.mxu0 0.0
  %530 = vmatprep.subr.mxu0 0.0
  %531 = vmatpush1.msra.mxu0 0.0
  %532 = vmatprep.subr.mxu0 0.0
  %533 = vmatpush1.msra.mxu0 0.0
  %534 = vmatprep.subr.mxu0 0.0
  %535 = vmatpush1.msra.mxu0 0.0
  %536 = vmatprep.subr.mxu0 0.0
  %537 = vmatpush1.msra.mxu0 0.0
  %538 = vmatprep.subr.mxu0 0.0
  %539 = vmatpush1.msra.mxu0 0.0
  %540 = vmatprep.subr.mxu0 0.0
  %541 = vmatpush1.msra.mxu0 0.0
  %542 = vmatprep.subr.mxu0 0.0
  %543 = vmatpush1.msra.mxu0 %v306
  %544 = vmatprep.subr.mxu0 0.0
  %545 = vmatpush1.msra.mxu0 %v305
  %546 = vmatprep.subr.mxu0 0.0
  %547 = vmatpush1.msra.mxu0 %v304
  %548 = vmatprep.subr.mxu0 0.0
  %549 = vmatpush1.msra.mxu0 %v303
  %550 = vmatprep.subr.mxu0 0.0
  %551 = vmatpush2.msra.mxu0 0.0
  %552 = vmatprep.subr.mxu0 0.0
  %553 = vmatpush2.msra.mxu0 0.0
  %554 = vmatprep.subr.mxu0 0.0
  %555 = vmatpush2.msra.mxu0 0.0
  %556 = vmatprep.subr.mxu0 0.0
  %557 = vmatpush2.msra.mxu0 0.0
  %558 = vmatprep.subr.mxu0 0.0
  %559 = vmatpush2.msra.mxu0 0.0
  %560 = vmatprep.subr.mxu0 0.0
  %561 = vmatpush2.msra.mxu0 0.0
  %562 = vmatprep.subr.mxu0 0.0
  %563 = vmatpush2.msra.mxu0 0.0
  %564 = vmatprep.subr.mxu0 0.0
  %565 = vmatpush2.msra.mxu0 0.0
  %566 = vmatprep.subr.mxu0 0.0
  %567 = vmatpush2.msra.mxu0 0.0
  %568 = vmatprep.subr.mxu0 0.0
  %569 = vmatpush2.msra.mxu0 0.0
  %570 = vmatprep.subr.mxu0 0.0
  %571 = vmatpush2.msra.mxu0 0.0
  %572 = vmatprep.subr.mxu0 0.0
  %573 = vmatpush2.msra.mxu0 0.0
  %574 = vmatprep.subr.mxu0 0.0
  %575 = vmatpush2.msra.mxu0 0.0
  %576 = vmatprep.subr.mxu0 0.0
  %577 = vmatpush2.msra.mxu0 0.0
  %578 = vmatprep.subr.mxu0 0.0
  %579 = vmatpush2.msra.mxu0 0.0
  %580 = vmatprep.subr.mxu0 0.0
  %581 = vmatpush2.msra.mxu0 0.0
  %582 = vmatprep.mubr.f32.mxu0 0.0
  %583 = vmatmul.mubr.f32.gmra.mxu0 %v516
  %v584 = vpop.f32.mrf.mxu0
  %v585 = vadd.f32 0.0, %v584
  %v586 = vpop.f32.mrf.mxu0
  %587 = vdwg.mxu0
  %v588 = vadd.f32 %v156, %v585
  %v589 = vxor.u32 %v588, 2147483648
  %v590 = vmul.f32 %v589, 1.442695
  %v591 = vpow.pop %v590
  %v592 = vadd.f32 %v591, 1.0
  %v593 = vrcp.pop %v592
  %v594 = vmul.f32 1.0, %v593
  %v595 = vtanh.pop %v588
  %v596 = vmul.f32 %v594, %v403
  %598 = vrot.lane.b32.xlu0 %v595, 64
  %v599 = vpop.permute.xlu0 %598
  %v601 = vmul.f32 %v594, %v599
  %603 = vrot.lane.b32.xlu0 %v601, 32
  %v604 = vpop.permute.xlu0 %603
  %v606 = vadd.f32 %v596, %v604
  %v607 = vtanh.pop %v606
  %609 = vrot.lane.b32.xlu0 %v607, 64
  %v610 = vpop.permute.xlu0 %609
  %v612 = vmul.f32 %v594, %v610
  %v613 = vsel %vm311, %v512, 0
  %615 = vmatprep.subr.mxu0 0.0
  %616 = vmatpush1.msra.mxu0 0.0
  %617 = vmatprep.subr.mxu0 0.0
  %618 = vmatpush1.msra.mxu0 0.0
  %619 = vmatprep.subr.mxu0 0.0
  %620 = vmatpush1.msra.mxu0 0.0
  %621 = vmatprep.subr.mxu0 0.0
  %622 = vmatpush1.msra.mxu0 0.0
  %623 = vmatprep.subr.mxu0 0.0
  %624 = vmatpush1.msra.mxu0 0.0
  %625 = vmatprep.subr.mxu0 0.0
  %626 = vmatpush1.msra.mxu0 0.0
  %627 = vmatprep.subr.mxu0 0.0
  %628 = vmatpush1.msra.mxu0 0.0
  %629 = vmatprep.subr.mxu0 0.0
  %630 = vmatpush1.msra.mxu0 0.0
  %631 = vmatprep.subr.mxu0 0.0
  %632 = vmatpush1.msra.mxu0 0.0
  %633 = vmatprep.subr.mxu0 0.0
  %634 = vmatpush1.msra.mxu0 0.0
  %635 = vmatprep.subr.mxu0 0.0
  %636 = vmatpush1.msra.mxu0 0.0
  %637 = vmatprep.subr.mxu0 0.0
  %638 = vmatpush1.msra.mxu0 0.0
  %639 = vmatprep.subr.mxu0 0.0
  %640 = vmatpush1.msra.mxu0 %v310
  %641 = vmatprep.subr.mxu0 0.0
  %642 = vmatpush1.msra.mxu0 %v309
  %643 = vmatprep.subr.mxu0 0.0
  %644 = vmatpush1.msra.mxu0 %v308
  %645 = vmatprep.subr.mxu0 0.0
  %646 = vmatpush1.msra.mxu0 %v307
  %647 = vmatprep.subr.mxu0 0.0
  %648 = vmatpush2.msra.mxu0 0.0
  %649 = vmatprep.subr.mxu0 0.0
  %650 = vmatpush2.msra.mxu0 0.0
  %651 = vmatprep.subr.mxu0 0.0
  %652 = vmatpush2.msra.mxu0 0.0
  %653 = vmatprep.subr.mxu0 0.0
  %654 = vmatpush2.msra.mxu0 0.0
  %655 = vmatprep.subr.mxu0 0.0
  %656 = vmatpush2.msra.mxu0 0.0
  %657 = vmatprep.subr.mxu0 0.0
  %658 = vmatpush2.msra.mxu0 0.0
  %659 = vmatprep.subr.mxu0 0.0
  %660 = vmatpush2.msra.mxu0 0.0
  %661 = vmatprep.subr.mxu0 0.0
  %662 = vmatpush2.msra.mxu0 0.0
  %663 = vmatprep.subr.mxu0 0.0
  %664 = vmatpush2.msra.mxu0 0.0
  %665 = vmatprep.subr.mxu0 0.0
  %666 = vmatpush2.msra.mxu0 0.0
  %667 = vmatprep.subr.mxu0 0.0
  %668 = vmatpush2.msra.mxu0 0.0
  %669 = vmatprep.subr.mxu0 0.0
  %670 = vmatpush2.msra.mxu0 0.0
  %671 = vmatprep.subr.mxu0 0.0
  %672 = vmatpush2.msra.mxu0 0.0
  %673 = vmatprep.subr.mxu0 0.0
  %674 = vmatpush2.msra.mxu0 0.0
  %675 = vmatprep.subr.mxu0 0.0
  %676 = vmatpush2.msra.mxu0 0.0
  %677 = vmatprep.subr.mxu0 0.0
  %678 = vmatpush2.msra.mxu0 0.0
  %679 = vmatprep.mubr.f32.mxu0 0.0
  %680 = vmatmul.mubr.f32.gmra.mxu0 %v613
  %v681 = vpop.f32.mrf.mxu0
  %v682 = vadd.f32 0.0, %v681
  %v683 = vpop.f32.mrf.mxu0
  %684 = vdwg.mxu0
  %v685 = vadd.f32 %v295, %v682
  %v686 = vxor.u32 %v685, 2147483648
  %v687 = vmul.f32 %v686, 1.442695
  %v688 = vpow.pop %v687
  %v689 = vadd.f32 %v688, 1.0
  %v690 = vrcp.pop %v689
  %v691 = vmul.f32 1.0, %v690
  %v692 = vtanh.pop %v685
  %v693 = vmul.f32 %v691, %v498
  %695 = vrot.lane.b32.xlu0 %v692, 64
  %v696 = vpop.permute.xlu0 %695
  %v698 = vmul.f32 %v691, %v696
  %700 = vrot.lane.b32.xlu0 %v698, 32
  %v701 = vpop.permute.xlu0 %700
  %v703 = vadd.f32 %v693, %v701
  %v704 = vtanh.pop %v703
  %706 = vrot.lane.b32.xlu0 %v704, 64
  %v707 = vpop.permute.xlu0 %706
  %v709 = vmul.f32 %v691, %v707
  %711 = vrot.lane.b32.xlu0 %v612, 32
  %v712 = vpop.permute.xlu0 %711
  %s714 = scalar_lea.vmem %s11, 8
  %715 = vst.msk [vmem:[%s714] sm:$0xff] %vm311, %v712
  %717 = vrot.lane.b32.xlu0 %v709, 32
  %v718 = vpop.permute.xlu0 %717
  %s720 = scalar_lea.vmem %s12, 48
  %721 = vst.msk [vmem:[%s720] sm:$0xff] %vm311, %v718
  %v722 = vsel %vm311, %v712, 0
  %724 = vmatprep.subr.mxu0 0.0
  %725 = vmatpush1.msra.mxu0 0.0
  %726 = vmatprep.subr.mxu0 0.0
  %727 = vmatpush1.msra.mxu0 0.0
  %728 = vmatprep.subr.mxu0 0.0
  %729 = vmatpush1.msra.mxu0 0.0
  %730 = vmatprep.subr.mxu0 0.0
  %731 = vmatpush1.msra.mxu0 0.0
  %732 = vmatprep.subr.mxu0 0.0
  %733 = vmatpush1.msra.mxu0 0.0
  %734 = vmatprep.subr.mxu0 0.0
  %735 = vmatpush1.msra.mxu0 0.0
  %736 = vmatprep.subr.mxu0 0.0
  %737 = vmatpush1.msra.mxu0 0.0
  %738 = vmatprep.subr.mxu0 0.0
  %739 = vmatpush1.msra.mxu0 0.0
  %740 = vmatprep.subr.mxu0 0.0
  %741 = vmatpush1.msra.mxu0 0.0
  %742 = vmatprep.subr.mxu0 0.0
  %743 = vmatpush1.msra.mxu0 0.0
  %744 = vmatprep.subr.mxu0 0.0
  %745 = vmatpush1.msra.mxu0 0.0
  %746 = vmatprep.subr.mxu0 0.0
  %747 = vmatpush1.msra.mxu0 0.0
  %748 = vmatprep.subr.mxu0 0.0
  %749 = vmatpush1.msra.mxu0 %v306
  %750 = vmatprep.subr.mxu0 0.0
  %751 = vmatpush1.msra.mxu0 %v305
  %752 = vmatprep.subr.mxu0 0.0
  %753 = vmatpush1.msra.mxu0 %v304
  %754 = vmatprep.subr.mxu0 0.0
  %755 = vmatpush1.msra.mxu0 %v303
  %756 = vmatprep.subr.mxu0 0.0
  %757 = vmatpush2.msra.mxu0 0.0
  %758 = vmatprep.subr.mxu0 0.0
  %759 = vmatpush2.msra.mxu0 0.0
  %760 = vmatprep.subr.mxu0 0.0
  %761 = vmatpush2.msra.mxu0 0.0
  %762 = vmatprep.subr.mxu0 0.0
  %763 = vmatpush2.msra.mxu0 0.0
  %764 = vmatprep.subr.mxu0 0.0
  %765 = vmatpush2.msra.mxu0 0.0
  %766 = vmatprep.subr.mxu0 0.0
  %767 = vmatpush2.msra.mxu0 0.0
  %768 = vmatprep.subr.mxu0 0.0
  %769 = vmatpush2.msra.mxu0 0.0
  %770 = vmatprep.subr.mxu0 0.0
  %771 = vmatpush2.msra.mxu0 0.0
  %772 = vmatprep.subr.mxu0 0.0
  %773 = vmatpush2.msra.mxu0 0.0
  %774 = vmatprep.subr.mxu0 0.0
  %775 = vmatpush2.msra.mxu0 0.0
  %776 = vmatprep.subr.mxu0 0.0
  %777 = vmatpush2.msra.mxu0 0.0
  %778 = vmatprep.subr.mxu0 0.0
  %779 = vmatpush2.msra.mxu0 0.0
  %780 = vmatprep.subr.mxu0 0.0
  %781 = vmatpush2.msra.mxu0 0.0
  %782 = vmatprep.subr.mxu0 0.0
  %783 = vmatpush2.msra.mxu0 0.0
  %784 = vmatprep.subr.mxu0 0.0
  %785 = vmatpush2.msra.mxu0 0.0
  %786 = vmatprep.subr.mxu0 0.0
  %787 = vmatpush2.msra.mxu0 0.0
  %788 = vmatprep.mubr.f32.mxu0 0.0
  %789 = vmatmul.mubr.f32.gmra.mxu0 %v722
  %v790 = vpop.f32.mrf.mxu0
  %v791 = vadd.f32 0.0, %v790
  %v792 = vpop.f32.mrf.mxu0
  %793 = vdwg.mxu0
  %v794 = vadd.f32 %v161, %v791
  %v795 = vxor.u32 %v794, 2147483648
  %v796 = vmul.f32 %v795, 1.442695
  %v797 = vpow.pop %v796
  %v798 = vadd.f32 %v797, 1.0
  %v799 = vrcp.pop %v798
  %v800 = vmul.f32 1.0, %v799
  %v801 = vtanh.pop %v794
  %v802 = vmul.f32 %v800, %v606
  %804 = vrot.lane.b32.xlu0 %v801, 64
  %v805 = vpop.permute.xlu0 %804
  %v807 = vmul.f32 %v800, %v805
  %809 = vrot.lane.b32.xlu0 %v807, 32
  %v810 = vpop.permute.xlu0 %809
  %v812 = vadd.f32 %v802, %v810
  %v813 = vtanh.pop %v812
  %815 = vrot.lane.b32.xlu0 %v813, 64
  %v816 = vpop.permute.xlu0 %815
  %v818 = vmul.f32 %v800, %v816
  %v819 = vsel %vm311, %v718, 0
  %821 = vmatprep.subr.mxu0 0.0
  %822 = vmatpush1.msra.mxu0 0.0
  %823 = vmatprep.subr.mxu0 0.0
  %824 = vmatpush1.msra.mxu0 0.0
  %825 = vmatprep.subr.mxu0 0.0
  %826 = vmatpush1.msra.mxu0 0.0
  %827 = vmatprep.subr.mxu0 0.0
  %828 = vmatpush1.msra.mxu0 0.0
  %829 = vmatprep.subr.mxu0 0.0
  %830 = vmatpush1.msra.mxu0 0.0
  %831 = vmatprep.subr.mxu0 0.0
  %832 = vmatpush1.msra.mxu0 0.0
  %833 = vmatprep.subr.mxu0 0.0
  %834 = vmatpush1.msra.mxu0 0.0
  %835 = vmatprep.subr.mxu0 0.0
  %836 = vmatpush1.msra.mxu0 0.0
  %837 = vmatprep.subr.mxu0 0.0
  %838 = vmatpush1.msra.mxu0 0.0
  %839 = vmatprep.subr.mxu0 0.0
  %840 = vmatpush1.msra.mxu0 0.0
  %841 = vmatprep.subr.mxu0 0.0
  %842 = vmatpush1.msra.mxu0 0.0
  %843 = vmatprep.subr.mxu0 0.0
  %844 = vmatpush1.msra.mxu0 0.0
  %845 = vmatprep.subr.mxu0 0.0
  %846 = vmatpush1.msra.mxu0 %v310
  %847 = vmatprep.subr.mxu0 0.0
  %848 = vmatpush1.msra.mxu0 %v309
  %849 = vmatprep.subr.mxu0 0.0
  %850 = vmatpush1.msra.mxu0 %v308
  %851 = vmatprep.subr.mxu0 0.0
  %852 = vmatpush1.msra.mxu0 %v307
  %853 = vmatprep.subr.mxu0 0.0
  %854 = vmatpush2.msra.mxu0 0.0
  %855 = vmatprep.subr.mxu0 0.0
  %856 = vmatpush2.msra.mxu0 0.0
  %857 = vmatprep.subr.mxu0 0.0
  %858 = vmatpush2.msra.mxu0 0.0
  %859 = vmatprep.subr.mxu0 0.0
  %860 = vmatpush2.msra.mxu0 0.0
  %861 = vmatprep.subr.mxu0 0.0
  %862 = vmatpush2.msra.mxu0 0.0
  %863 = vmatprep.subr.mxu0 0.0
  %864 = vmatpush2.msra.mxu0 0.0
  %865 = vmatprep.subr.mxu0 0.0
  %866 = vmatpush2.msra.mxu0 0.0
  %867 = vmatprep.subr.mxu0 0.0
  %868 = vmatpush2.msra.mxu0 0.0
  %869 = vmatprep.subr.mxu0 0.0
  %870 = vmatpush2.msra.mxu0 0.0
  %871 = vmatprep.subr.mxu0 0.0
  %872 = vmatpush2.msra.mxu0 0.0
  %873 = vmatprep.subr.mxu0 0.0
  %874 = vmatpush2.msra.mxu0 0.0
  %875 = vmatprep.subr.mxu0 0.0
  %876 = vmatpush2.msra.mxu0 0.0
  %877 = vmatprep.subr.mxu0 0.0
  %878 = vmatpush2.msra.mxu0 0.0
  %879 = vmatprep.subr.mxu0 0.0
  %880 = vmatpush2.msra.mxu0 0.0
  %881 = vmatprep.subr.mxu0 0.0
  %882 = vmatpush2.msra.mxu0 0.0
  %883 = vmatprep.subr.mxu0 0.0
  %884 = vmatpush2.msra.mxu0 0.0
  %885 = vmatprep.mubr.f32.mxu0 0.0
  %886 = vmatmul.mubr.f32.gmra.mxu0 %v819
  %v887 = vpop.f32.mrf.mxu0
  %v888 = vadd.f32 0.0, %v887
  %v889 = vpop.f32.mrf.mxu0
  %890 = vdwg.mxu0
  %v891 = vadd.f32 %v290, %v888
  %v892 = vxor.u32 %v891, 2147483648
  %v893 = vmul.f32 %v892, 1.442695
  %v894 = vpow.pop %v893
  %v895 = vadd.f32 %v894, 1.0
  %v896 = vrcp.pop %v895
  %v897 = vmul.f32 1.0, %v896
  %v898 = vtanh.pop %v891
  %v899 = vmul.f32 %v897, %v703
  %901 = vrot.lane.b32.xlu0 %v898, 64
  %v902 = vpop.permute.xlu0 %901
  %v904 = vmul.f32 %v897, %v902
  %906 = vrot.lane.b32.xlu0 %v904, 32
  %v907 = vpop.permute.xlu0 %906
  %v909 = vadd.f32 %v899, %v907
  %v910 = vtanh.pop %v909
  %912 = vrot.lane.b32.xlu0 %v910, 64
  %v913 = vpop.permute.xlu0 %912
  %v915 = vmul.f32 %v897, %v913
  %917 = vrot.lane.b32.xlu0 %v818, 32
  %v918 = vpop.permute.xlu0 %917
  %s920 = scalar_lea.vmem %s11, 16
  %921 = vst.msk [vmem:[%s920] sm:$0xff] %vm311, %v918
  %923 = vrot.lane.b32.xlu0 %v915, 32
  %v924 = vpop.permute.xlu0 %923
  %s926 = scalar_lea.vmem %s12, 40
  %927 = vst.msk [vmem:[%s926] sm:$0xff] %vm311, %v924
  %v928 = vsel %vm311, %v918, 0
  %930 = vmatprep.subr.mxu0 0.0
  %931 = vmatpush1.msra.mxu0 0.0
  %932 = vmatprep.subr.mxu0 0.0
  %933 = vmatpush1.msra.mxu0 0.0
  %934 = vmatprep.subr.mxu0 0.0
  %935 = vmatpush1.msra.mxu0 0.0
  %936 = vmatprep.subr.mxu0 0.0
  %937 = vmatpush1.msra.mxu0 0.0
  %938 = vmatprep.subr.mxu0 0.0
  %939 = vmatpush1.msra.mxu0 0.0
  %940 = vmatprep.subr.mxu0 0.0
  %941 = vmatpush1.msra.mxu0 0.0
  %942 = vmatprep.subr.mxu0 0.0
  %943 = vmatpush1.msra.mxu0 0.0
  %944 = vmatprep.subr.mxu0 0.0
  %945 = vmatpush1.msra.mxu0 0.0
  %946 = vmatprep.subr.mxu0 0.0
  %947 = vmatpush1.msra.mxu0 0.0
  %948 = vmatprep.subr.mxu0 0.0
  %949 = vmatpush1.msra.mxu0 0.0
  %950 = vmatprep.subr.mxu0 0.0
  %951 = vmatpush1.msra.mxu0 0.0
  %952 = vmatprep.subr.mxu0 0.0
  %953 = vmatpush1.msra.mxu0 0.0
  %954 = vmatprep.subr.mxu0 0.0
  %955 = vmatpush1.msra.mxu0 %v306
  %956 = vmatprep.subr.mxu0 0.0
  %957 = vmatpush1.msra.mxu0 %v305
  %958 = vmatprep.subr.mxu0 0.0
  %959 = vmatpush1.msra.mxu0 %v304
  %960 = vmatprep.subr.mxu0 0.0
  %961 = vmatpush1.msra.mxu0 %v303
  %962 = vmatprep.subr.mxu0 0.0
  %963 = vmatpush2.msra.mxu0 0.0
  %964 = vmatprep.subr.mxu0 0.0
  %965 = vmatpush2.msra.mxu0 0.0
  %966 = vmatprep.subr.mxu0 0.0
  %967 = vmatpush2.msra.mxu0 0.0
  %968 = vmatprep.subr.mxu0 0.0
  %969 = vmatpush2.msra.mxu0 0.0
  %970 = vmatprep.subr.mxu0 0.0
  %971 = vmatpush2.msra.mxu0 0.0
  %972 = vmatprep.subr.mxu0 0.0
  %973 = vmatpush2.msra.mxu0 0.0
  %974 = vmatprep.subr.mxu0 0.0
  %975 = vmatpush2.msra.mxu0 0.0
  %976 = vmatprep.subr.mxu0 0.0
  %977 = vmatpush2.msra.mxu0 0.0
  %978 = vmatprep.subr.mxu0 0.0
  %979 = vmatpush2.msra.mxu0 0.0
  %980 = vmatprep.subr.mxu0 0.0
  %981 = vmatpush2.msra.mxu0 0.0
  %982 = vmatprep.subr.mxu0 0.0
  %983 = vmatpush2.msra.mxu0 0.0
  %984 = vmatprep.subr.mxu0 0.0
  %985 = vmatpush2.msra.mxu0 0.0
  %986 = vmatprep.subr.mxu0 0.0
  %987 = vmatpush2.msra.mxu0 0.0
  %988 = vmatprep.subr.mxu0 0.0
  %989 = vmatpush2.msra.mxu0 0.0
  %990 = vmatprep.subr.mxu0 0.0
  %991 = vmatpush2.msra.mxu0 0.0
  %992 = vmatprep.subr.mxu0 0.0
  %993 = vmatpush2.msra.mxu0 0.0
  %994 = vmatprep.mubr.f32.mxu0 0.0
  %995 = vmatmul.mubr.f32.gmra.mxu0 %v928
  %v996 = vpop.f32.mrf.mxu0
  %v997 = vadd.f32 0.0, %v996
  %v998 = vpop.f32.mrf.mxu0
  %999 = vdwg.mxu0
  %v1000 = vadd.f32 %v166, %v997
  %v1001 = vxor.u32 %v1000, 2147483648
  %v1002 = vmul.f32 %v1001, 1.442695
  %v1003 = vpow.pop %v1002
  %v1004 = vadd.f32 %v1003, 1.0
  %v1005 = vrcp.pop %v1004
  %v1006 = vmul.f32 1.0, %v1005
  %v1007 = vtanh.pop %v1000
  %v1008 = vmul.f32 %v1006, %v812
  %1010 = vrot.lane.b32.xlu0 %v1007, 64
  %v1011 = vpop.permute.xlu0 %1010
  %v1013 = vmul.f32 %v1006, %v1011
  %1015 = vrot.lane.b32.xlu0 %v1013, 32
  %v1016 = vpop.permute.xlu0 %1015
  %v1018 = vadd.f32 %v1008, %v1016
  %v1019 = vtanh.pop %v1018
  %1021 = vrot.lane.b32.xlu0 %v1019, 64
  %v1022 = vpop.permute.xlu0 %1021
  %v1024 = vmul.f32 %v1006, %v1022
  %v1025 = vsel %vm311, %v924, 0
  %1027 = vmatprep.subr.mxu0 0.0
  %1028 = vmatpush1.msra.mxu0 0.0
  %1029 = vmatprep.subr.mxu0 0.0
  %1030 = vmatpush1.msra.mxu0 0.0
  %1031 = vmatprep.subr.mxu0 0.0
  %1032 = vmatpush1.msra.mxu0 0.0
  %1033 = vmatprep.subr.mxu0 0.0
  %1034 = vmatpush1.msra.mxu0 0.0
  %1035 = vmatprep.subr.mxu0 0.0
  %1036 = vmatpush1.msra.mxu0 0.0
  %1037 = vmatprep.subr.mxu0 0.0
  %1038 = vmatpush1.msra.mxu0 0.0
  %1039 = vmatprep.subr.mxu0 0.0
  %1040 = vmatpush1.msra.mxu0 0.0
  %1041 = vmatprep.subr.mxu0 0.0
  %1042 = vmatpush1.msra.mxu0 0.0
  %1043 = vmatprep.subr.mxu0 0.0
  %1044 = vmatpush1.msra.mxu0 0.0
  %1045 = vmatprep.subr.mxu0 0.0
  %1046 = vmatpush1.msra.mxu0 0.0
  %1047 = vmatprep.subr.mxu0 0.0
  %1048 = vmatpush1.msra.mxu0 0.0
  %1049 = vmatprep.subr.mxu0 0.0
  %1050 = vmatpush1.msra.mxu0 0.0
  %1051 = vmatprep.subr.mxu0 0.0
  %1052 = vmatpush1.msra.mxu0 %v310
  %1053 = vmatprep.subr.mxu0 0.0
  %1054 = vmatpush1.msra.mxu0 %v309
  %1055 = vmatprep.subr.mxu0 0.0
  %1056 = vmatpush1.msra.mxu0 %v308
  %1057 = vmatprep.subr.mxu0 0.0
  %1058 = vmatpush1.msra.mxu0 %v307
  %1059 = vmatprep.subr.mxu0 0.0
  %1060 = vmatpush2.msra.mxu0 0.0
  %1061 = vmatprep.subr.mxu0 0.0
  %1062 = vmatpush2.msra.mxu0 0.0
  %1063 = vmatprep.subr.mxu0 0.0
  %1064 = vmatpush2.msra.mxu0 0.0
  %1065 = vmatprep.subr.mxu0 0.0
  %1066 = vmatpush2.msra.mxu0 0.0
  %1067 = vmatprep.subr.mxu0 0.0
  %1068 = vmatpush2.msra.mxu0 0.0
  %1069 = vmatprep.subr.mxu0 0.0
  %1070 = vmatpush2.msra.mxu0 0.0
  %1071 = vmatprep.subr.mxu0 0.0
  %1072 = vmatpush2.msra.mxu0 0.0
  %1073 = vmatprep.subr.mxu0 0.0
  %1074 = vmatpush2.msra.mxu0 0.0
  %1075 = vmatprep.subr.mxu0 0.0
  %1076 = vmatpush2.msra.mxu0 0.0
  %1077 = vmatprep.subr.mxu0 0.0
  %1078 = vmatpush2.msra.mxu0 0.0
  %1079 = vmatprep.subr.mxu0 0.0
  %1080 = vmatpush2.msra.mxu0 0.0
  %1081 = vmatprep.subr.mxu0 0.0
  %1082 = vmatpush2.msra.mxu0 0.0
  %1083 = vmatprep.subr.mxu0 0.0
  %1084 = vmatpush2.msra.mxu0 0.0
  %1085 = vmatprep.subr.mxu0 0.0
  %1086 = vmatpush2.msra.mxu0 0.0
  %1087 = vmatprep.subr.mxu0 0.0
  %1088 = vmatpush2.msra.mxu0 0.0
  %1089 = vmatprep.subr.mxu0 0.0
  %1090 = vmatpush2.msra.mxu0 0.0
  %1091 = vmatprep.mubr.f32.mxu0 0.0
  %1092 = vmatmul.mubr.f32.gmra.mxu0 %v1025
  %v1093 = vpop.f32.mrf.mxu0
  %v1094 = vadd.f32 0.0, %v1093
  %v1095 = vpop.f32.mrf.mxu0
  %1096 = vdwg.mxu0
  %v1097 = vadd.f32 %v285, %v1094
  %v1098 = vxor.u32 %v1097, 2147483648
  %v1099 = vmul.f32 %v1098, 1.442695
  %v1100 = vpow.pop %v1099
  %v1101 = vadd.f32 %v1100, 1.0
  %v1102 = vrcp.pop %v1101
  %v1103 = vmul.f32 1.0, %v1102
  %v1104 = vtanh.pop %v1097
  %v1105 = vmul.f32 %v1103, %v909
  %1107 = vrot.lane.b32.xlu0 %v1104, 64
  %v1108 = vpop.permute.xlu0 %1107
  %v1110 = vmul.f32 %v1103, %v1108
  %1112 = vrot.lane.b32.xlu0 %v1110, 32
  %v1113 = vpop.permute.xlu0 %1112
  %v1115 = vadd.f32 %v1105, %v1113
  %v1116 = vtanh.pop %v1115
  %1118 = vrot.lane.b32.xlu0 %v1116, 64
  %v1119 = vpop.permute.xlu0 %1118
  %v1121 = vmul.f32 %v1103, %v1119
  %1123 = vrot.lane.b32.xlu0 %v1024, 32
  %v1124 = vpop.permute.xlu0 %1123
  %s1126 = scalar_lea.vmem %s11, 24
  %1127 = vst.msk [vmem:[%s1126] sm:$0xff] %vm311, %v1124
  %1129 = vrot.lane.b32.xlu0 %v1121, 32
  %v1130 = vpop.permute.xlu0 %1129
  %s1132 = scalar_lea.vmem %s12, 32
  %1133 = vst.msk [vmem:[%s1132] sm:$0xff] %vm311, %v1130
  %v1134 = vsel %vm311, %v1124, 0
  %1136 = vmatprep.subr.mxu0 0.0
  %1137 = vmatpush1.msra.mxu0 0.0
  %1138 = vmatprep.subr.mxu0 0.0
  %1139 = vmatpush1.msra.mxu0 0.0
  %1140 = vmatprep.subr.mxu0 0.0
  %1141 = vmatpush1.msra.mxu0 0.0
  %1142 = vmatprep.subr.mxu0 0.0
  %1143 = vmatpush1.msra.mxu0 0.0
  %1144 = vmatprep.subr.mxu0 0.0
  %1145 = vmatpush1.msra.mxu0 0.0
  %1146 = vmatprep.subr.mxu0 0.0
  %1147 = vmatpush1.msra.mxu0 0.0
  %1148 = vmatprep.subr.mxu0 0.0
  %1149 = vmatpush1.msra.mxu0 0.0
  %1150 = vmatprep.subr.mxu0 0.0
  %1151 = vmatpush1.msra.mxu0 0.0
  %1152 = vmatprep.subr.mxu0 0.0
  %1153 = vmatpush1.msra.mxu0 0.0
  %1154 = vmatprep.subr.mxu0 0.0
  %1155 = vmatpush1.msra.mxu0 0.0
  %1156 = vmatprep.subr.mxu0 0.0
  %1157 = vmatpush1.msra.mxu0 0.0
  %1158 = vmatprep.subr.mxu0 0.0
  %1159 = vmatpush1.msra.mxu0 0.0
  %1160 = vmatprep.subr.mxu0 0.0
  %1161 = vmatpush1.msra.mxu0 %v306
  %1162 = vmatprep.subr.mxu0 0.0
  %1163 = vmatpush1.msra.mxu0 %v305
  %1164 = vmatprep.subr.mxu0 0.0
  %1165 = vmatpush1.msra.mxu0 %v304
  %1166 = vmatprep.subr.mxu0 0.0
  %1167 = vmatpush1.msra.mxu0 %v303
  %1168 = vmatprep.subr.mxu0 0.0
  %1169 = vmatpush2.msra.mxu0 0.0
  %1170 = vmatprep.subr.mxu0 0.0
  %1171 = vmatpush2.msra.mxu0 0.0
  %1172 = vmatprep.subr.mxu0 0.0
  %1173 = vmatpush2.msra.mxu0 0.0
  %1174 = vmatprep.subr.mxu0 0.0
  %1175 = vmatpush2.msra.mxu0 0.0
  %1176 = vmatprep.subr.mxu0 0.0
  %1177 = vmatpush2.msra.mxu0 0.0
  %1178 = vmatprep.subr.mxu0 0.0
  %1179 = vmatpush2.msra.mxu0 0.0
  %1180 = vmatprep.subr.mxu0 0.0
  %1181 = vmatpush2.msra.mxu0 0.0
  %1182 = vmatprep.subr.mxu0 0.0
  %1183 = vmatpush2.msra.mxu0 0.0
  %1184 = vmatprep.subr.mxu0 0.0
  %1185 = vmatpush2.msra.mxu0 0.0
  %1186 = vmatprep.subr.mxu0 0.0
  %1187 = vmatpush2.msra.mxu0 0.0
  %1188 = vmatprep.subr.mxu0 0.0
  %1189 = vmatpush2.msra.mxu0 0.0
  %1190 = vmatprep.subr.mxu0 0.0
  %1191 = vmatpush2.msra.mxu0 0.0
  %1192 = vmatprep.subr.mxu0 0.0
  %1193 = vmatpush2.msra.mxu0 0.0
  %1194 = vmatprep.subr.mxu0 0.0
  %1195 = vmatpush2.msra.mxu0 0.0
  %1196 = vmatprep.subr.mxu0 0.0
  %1197 = vmatpush2.msra.mxu0 0.0
  %1198 = vmatprep.subr.mxu0 0.0
  %1199 = vmatpush2.msra.mxu0 0.0
  %1200 = vmatprep.mubr.f32.mxu0 0.0
  %1201 = vmatmul.mubr.f32.gmra.mxu0 %v1134
  %v1202 = vpop.f32.mrf.mxu0
  %v1203 = vadd.f32 0.0, %v1202
  %v1204 = vpop.f32.mrf.mxu0
  %1205 = vdwg.mxu0
  %v1206 = vadd.f32 %v171, %v1203
  %v1207 = vxor.u32 %v1206, 2147483648
  %v1208 = vmul.f32 %v1207, 1.442695
  %v1209 = vpow.pop %v1208
  %v1210 = vadd.f32 %v1209, 1.0
  %v1211 = vrcp.pop %v1210
  %v1212 = vmul.f32 1.0, %v1211
  %v1213 = vtanh.pop %v1206
  %v1214 = vmul.f32 %v1212, %v1018
  %1216 = vrot.lane.b32.xlu0 %v1213, 64
  %v1217 = vpop.permute.xlu0 %1216
  %v1219 = vmul.f32 %v1212, %v1217
  %1221 = vrot.lane.b32.xlu0 %v1219, 32
  %v1222 = vpop.permute.xlu0 %1221
  %v1224 = vadd.f32 %v1214, %v1222
  %v1225 = vtanh.pop %v1224
  %1227 = vrot.lane.b32.xlu0 %v1225, 64
  %v1228 = vpop.permute.xlu0 %1227
  %v1230 = vmul.f32 %v1212, %v1228
  %v1231 = vsel %vm311, %v1130, 0
  %1233 = vmatprep.subr.mxu0 0.0
  %1234 = vmatpush1.msra.mxu0 0.0
  %1235 = vmatprep.subr.mxu0 0.0
  %1236 = vmatpush1.msra.mxu0 0.0
  %1237 = vmatprep.subr.mxu0 0.0
  %1238 = vmatpush1.msra.mxu0 0.0
  %1239 = vmatprep.subr.mxu0 0.0
  %1240 = vmatpush1.msra.mxu0 0.0
  %1241 = vmatprep.subr.mxu0 0.0
  %1242 = vmatpush1.msra.mxu0 0.0
  %1243 = vmatprep.subr.mxu0 0.0
  %1244 = vmatpush1.msra.mxu0 0.0
  %1245 = vmatprep.subr.mxu0 0.0
  %1246 = vmatpush1.msra.mxu0 0.0
  %1247 = vmatprep.subr.mxu0 0.0
  %1248 = vmatpush1.msra.mxu0 0.0
  %1249 = vmatprep.subr.mxu0 0.0
  %1250 = vmatpush1.msra.mxu0 0.0
  %1251 = vmatprep.subr.mxu0 0.0
  %1252 = vmatpush1.msra.mxu0 0.0
  %1253 = vmatprep.subr.mxu0 0.0
  %1254 = vmatpush1.msra.mxu0 0.0
  %1255 = vmatprep.subr.mxu0 0.0
  %1256 = vmatpush1.msra.mxu0 0.0
  %1257 = vmatprep.subr.mxu0 0.0
  %1258 = vmatpush1.msra.mxu0 %v310
  %1259 = vmatprep.subr.mxu0 0.0
  %1260 = vmatpush1.msra.mxu0 %v309
  %1261 = vmatprep.subr.mxu0 0.0
  %1262 = vmatpush1.msra.mxu0 %v308
  %1263 = vmatprep.subr.mxu0 0.0
  %1264 = vmatpush1.msra.mxu0 %v307
  %1265 = vmatprep.subr.mxu0 0.0
  %1266 = vmatpush2.msra.mxu0 0.0
  %1267 = vmatprep.subr.mxu0 0.0
  %1268 = vmatpush2.msra.mxu0 0.0
  %1269 = vmatprep.subr.mxu0 0.0
  %1270 = vmatpush2.msra.mxu0 0.0
  %1271 = vmatprep.subr.mxu0 0.0
  %1272 = vmatpush2.msra.mxu0 0.0
  %1273 = vmatprep.subr.mxu0 0.0
  %1274 = vmatpush2.msra.mxu0 0.0
  %1275 = vmatprep.subr.mxu0 0.0
  %1276 = vmatpush2.msra.mxu0 0.0
  %1277 = vmatprep.subr.mxu0 0.0
  %1278 = vmatpush2.msra.mxu0 0.0
  %1279 = vmatprep.subr.mxu0 0.0
  %1280 = vmatpush2.msra.mxu0 0.0
  %1281 = vmatprep.subr.mxu0 0.0
  %1282 = vmatpush2.msra.mxu0 0.0
  %1283 = vmatprep.subr.mxu0 0.0
  %1284 = vmatpush2.msra.mxu0 0.0
  %1285 = vmatprep.subr.mxu0 0.0
  %1286 = vmatpush2.msra.mxu0 0.0
  %1287 = vmatprep.subr.mxu0 0.0
  %1288 = vmatpush2.msra.mxu0 0.0
  %1289 = vmatprep.subr.mxu0 0.0
  %1290 = vmatpush2.msra.mxu0 0.0
  %1291 = vmatprep.subr.mxu0 0.0
  %1292 = vmatpush2.msra.mxu0 0.0
  %1293 = vmatprep.subr.mxu0 0.0
  %1294 = vmatpush2.msra.mxu0 0.0
  %1295 = vmatprep.subr.mxu0 0.0
  %1296 = vmatpush2.msra.mxu0 0.0
  %1297 = vmatprep.mubr.f32.mxu0 0.0
  %1298 = vmatmul.mubr.f32.gmra.mxu0 %v1231
  %v1299 = vpop.f32.mrf.mxu0
  %v1300 = vadd.f32 0.0, %v1299
  %v1301 = vpop.f32.mrf.mxu0
  %1302 = vdwg.mxu0
  %v1303 = vadd.f32 %v280, %v1300
  %v1304 = vxor.u32 %v1303, 2147483648
  %v1305 = vmul.f32 %v1304, 1.442695
  %v1306 = vpow.pop %v1305
  %v1307 = vadd.f32 %v1306, 1.0
  %v1308 = vrcp.pop %v1307
  %v1309 = vmul.f32 1.0, %v1308
  %v1310 = vtanh.pop %v1303
  %v1311 = vmul.f32 %v1309, %v1115
  %1313 = vrot.lane.b32.xlu0 %v1310, 64
  %v1314 = vpop.permute.xlu0 %1313
  %v1316 = vmul.f32 %v1309, %v1314
  %1318 = vrot.lane.b32.xlu0 %v1316, 32
  %v1319 = vpop.permute.xlu0 %1318
  %v1321 = vadd.f32 %v1311, %v1319
  %v1322 = vtanh.pop %v1321
  %1324 = vrot.lane.b32.xlu0 %v1322, 64
  %v1325 = vpop.permute.xlu0 %1324
  %v1327 = vmul.f32 %v1309, %v1325
  %1329 = vrot.lane.b32.xlu0 %v1230, 32
  %v1330 = vpop.permute.xlu0 %1329
  %s1332 = scalar_lea.vmem %s11, 32
  %1333 = vst.msk [vmem:[%s1332] sm:$0xff] %vm311, %v1330
  %1335 = vrot.lane.b32.xlu0 %v1327, 32
  %v1336 = vpop.permute.xlu0 %1335
  %s1338 = scalar_lea.vmem %s12, 24
  %1339 = vst.msk [vmem:[%s1338] sm:$0xff] %vm311, %v1336
  %v1340 = vsel %vm311, %v1330, 0
  %1342 = vmatprep.subr.mxu0 0.0
  %1343 = vmatpush1.msra.mxu0 0.0
  %1344 = vmatprep.subr.mxu0 0.0
  %1345 = vmatpush1.msra.mxu0 0.0
  %1346 = vmatprep.subr.mxu0 0.0
  %1347 = vmatpush1.msra.mxu0 0.0
  %1348 = vmatprep.subr.mxu0 0.0
  %1349 = vmatpush1.msra.mxu0 0.0
  %1350 = vmatprep.subr.mxu0 0.0
  %1351 = vmatpush1.msra.mxu0 0.0
  %1352 = vmatprep.subr.mxu0 0.0
  %1353 = vmatpush1.msra.mxu0 0.0
  %1354 = vmatprep.subr.mxu0 0.0
  %1355 = vmatpush1.msra.mxu0 0.0
  %1356 = vmatprep.subr.mxu0 0.0
  %1357 = vmatpush1.msra.mxu0 0.0
  %1358 = vmatprep.subr.mxu0 0.0
  %1359 = vmatpush1.msra.mxu0 0.0
  %1360 = vmatprep.subr.mxu0 0.0
  %1361 = vmatpush1.msra.mxu0 0.0
  %1362 = vmatprep.subr.mxu0 0.0
  %1363 = vmatpush1.msra.mxu0 0.0
  %1364 = vmatprep.subr.mxu0 0.0
  %1365 = vmatpush1.msra.mxu0 0.0
  %1366 = vmatprep.subr.mxu0 0.0
  %1367 = vmatpush1.msra.mxu0 %v306
  %1368 = vmatprep.subr.mxu0 0.0
  %1369 = vmatpush1.msra.mxu0 %v305
  %1370 = vmatprep.subr.mxu0 0.0
  %1371 = vmatpush1.msra.mxu0 %v304
  %1372 = vmatprep.subr.mxu0 0.0
  %1373 = vmatpush1.msra.mxu0 %v303
  %1374 = vmatprep.subr.mxu0 0.0
  %1375 = vmatpush2.msra.mxu0 0.0
  %1376 = vmatprep.subr.mxu0 0.0
  %1377 = vmatpush2.msra.mxu0 0.0
  %1378 = vmatprep.subr.mxu0 0.0
  %1379 = vmatpush2.msra.mxu0 0.0
  %1380 = vmatprep.subr.mxu0 0.0
  %1381 = vmatpush2.msra.mxu0 0.0
  %1382 = vmatprep.subr.mxu0 0.0
  %1383 = vmatpush2.msra.mxu0 0.0
  %1384 = vmatprep.subr.mxu0 0.0
  %1385 = vmatpush2.msra.mxu0 0.0
  %1386 = vmatprep.subr.mxu0 0.0
  %1387 = vmatpush2.msra.mxu0 0.0
  %1388 = vmatprep.subr.mxu0 0.0
  %1389 = vmatpush2.msra.mxu0 0.0
  %1390 = vmatprep.subr.mxu0 0.0
  %1391 = vmatpush2.msra.mxu0 0.0
  %1392 = vmatprep.subr.mxu0 0.0
  %1393 = vmatpush2.msra.mxu0 0.0
  %1394 = vmatprep.subr.mxu0 0.0
  %1395 = vmatpush2.msra.mxu0 0.0
  %1396 = vmatprep.subr.mxu0 0.0
  %1397 = vmatpush2.msra.mxu0 0.0
  %1398 = vmatprep.subr.mxu0 0.0
  %1399 = vmatpush2.msra.mxu0 0.0
  %1400 = vmatprep.subr.mxu0 0.0
  %1401 = vmatpush2.msra.mxu0 0.0
  %1402 = vmatprep.subr.mxu0 0.0
  %1403 = vmatpush2.msra.mxu0 0.0
  %1404 = vmatprep.subr.mxu0 0.0
  %1405 = vmatpush2.msra.mxu0 0.0
  %1406 = vmatprep.mubr.f32.mxu0 0.0
  %1407 = vmatmul.mubr.f32.gmra.mxu0 %v1340
  %v1408 = vpop.f32.mrf.mxu0
  %v1409 = vadd.f32 0.0, %v1408
  %v1410 = vpop.f32.mrf.mxu0
  %1411 = vdwg.mxu0
  %v1412 = vadd.f32 %v176, %v1409
  %v1413 = vxor.u32 %v1412, 2147483648
  %v1414 = vmul.f32 %v1413, 1.442695
  %v1415 = vpow.pop %v1414
  %v1416 = vadd.f32 %v1415, 1.0
  %v1417 = vrcp.pop %v1416
  %v1418 = vmul.f32 1.0, %v1417
  %v1419 = vtanh.pop %v1412
  %v1420 = vmul.f32 %v1418, %v1224
  %1422 = vrot.lane.b32.xlu0 %v1419, 64
  %v1423 = vpop.permute.xlu0 %1422
  %v1425 = vmul.f32 %v1418, %v1423
  %1427 = vrot.lane.b32.xlu0 %v1425, 32
  %v1428 = vpop.permute.xlu0 %1427
  %v1430 = vadd.f32 %v1420, %v1428
  %v1431 = vtanh.pop %v1430
  %1433 = vrot.lane.b32.xlu0 %v1431, 64
  %v1434 = vpop.permute.xlu0 %1433
  %v1436 = vmul.f32 %v1418, %v1434
  %v1437 = vsel %vm311, %v1336, 0
  %1439 = vmatprep.subr.mxu0 0.0
  %1440 = vmatpush1.msra.mxu0 0.0
  %1441 = vmatprep.subr.mxu0 0.0
  %1442 = vmatpush1.msra.mxu0 0.0
  %1443 = vmatprep.subr.mxu0 0.0
  %1444 = vmatpush1.msra.mxu0 0.0
  %1445 = vmatprep.subr.mxu0 0.0
  %1446 = vmatpush1.msra.mxu0 0.0
  %1447 = vmatprep.subr.mxu0 0.0
  %1448 = vmatpush1.msra.mxu0 0.0
  %1449 = vmatprep.subr.mxu0 0.0
  %1450 = vmatpush1.msra.mxu0 0.0
  %1451 = vmatprep.subr.mxu0 0.0
  %1452 = vmatpush1.msra.mxu0 0.0
  %1453 = vmatprep.subr.mxu0 0.0
  %1454 = vmatpush1.msra.mxu0 0.0
  %1455 = vmatprep.subr.mxu0 0.0
  %1456 = vmatpush1.msra.mxu0 0.0
  %1457 = vmatprep.subr.mxu0 0.0
  %1458 = vmatpush1.msra.mxu0 0.0
  %1459 = vmatprep.subr.mxu0 0.0
  %1460 = vmatpush1.msra.mxu0 0.0
  %1461 = vmatprep.subr.mxu0 0.0
  %1462 = vmatpush1.msra.mxu0 0.0
  %1463 = vmatprep.subr.mxu0 0.0
  %1464 = vmatpush1.msra.mxu0 %v310
  %1465 = vmatprep.subr.mxu0 0.0
  %1466 = vmatpush1.msra.mxu0 %v309
  %1467 = vmatprep.subr.mxu0 0.0
  %1468 = vmatpush1.msra.mxu0 %v308
  %1469 = vmatprep.subr.mxu0 0.0
  %1470 = vmatpush1.msra.mxu0 %v307
  %1471 = vmatprep.subr.mxu0 0.0
  %1472 = vmatpush2.msra.mxu0 0.0
  %1473 = vmatprep.subr.mxu0 0.0
  %1474 = vmatpush2.msra.mxu0 0.0
  %1475 = vmatprep.subr.mxu0 0.0
  %1476 = vmatpush2.msra.mxu0 0.0
  %1477 = vmatprep.subr.mxu0 0.0
  %1478 = vmatpush2.msra.mxu0 0.0
  %1479 = vmatprep.subr.mxu0 0.0
  %1480 = vmatpush2.msra.mxu0 0.0
  %1481 = vmatprep.subr.mxu0 0.0
  %1482 = vmatpush2.msra.mxu0 0.0
  %1483 = vmatprep.subr.mxu0 0.0
  %1484 = vmatpush2.msra.mxu0 0.0
  %1485 = vmatprep.subr.mxu0 0.0
  %1486 = vmatpush2.msra.mxu0 0.0
  %1487 = vmatprep.subr.mxu0 0.0
  %1488 = vmatpush2.msra.mxu0 0.0
  %1489 = vmatprep.subr.mxu0 0.0
  %1490 = vmatpush2.msra.mxu0 0.0
  %1491 = vmatprep.subr.mxu0 0.0
  %1492 = vmatpush2.msra.mxu0 0.0
  %1493 = vmatprep.subr.mxu0 0.0
  %1494 = vmatpush2.msra.mxu0 0.0
  %1495 = vmatprep.subr.mxu0 0.0
  %1496 = vmatpush2.msra.mxu0 0.0
  %1497 = vmatprep.subr.mxu0 0.0
  %1498 = vmatpush2.msra.mxu0 0.0
  %1499 = vmatprep.subr.mxu0 0.0
  %1500 = vmatpush2.msra.mxu0 0.0
  %1501 = vmatprep.subr.mxu0 0.0
  %1502 = vmatpush2.msra.mxu0 0.0
  %1503 = vmatprep.mubr.f32.mxu0 0.0
  %1504 = vmatmul.mubr.f32.gmra.mxu0 %v1437
  %v1505 = vpop.f32.mrf.mxu0
  %v1506 = vadd.f32 0.0, %v1505
  %v1507 = vpop.f32.mrf.mxu0
  %1508 = vdwg.mxu0
  %v1509 = vadd.f32 %v275, %v1506
  %v1510 = vxor.u32 %v1509, 2147483648
  %v1511 = vmul.f32 %v1510, 1.442695
  %v1512 = vpow.pop %v1511
  %v1513 = vadd.f32 %v1512, 1.0
  %v1514 = vrcp.pop %v1513
  %v1515 = vmul.f32 1.0, %v1514
  %v1516 = vtanh.pop %v1509
  %v1517 = vmul.f32 %v1515, %v1321
  %1519 = vrot.lane.b32.xlu0 %v1516, 64
  %v1520 = vpop.permute.xlu0 %1519
  %v1522 = vmul.f32 %v1515, %v1520
  %1524 = vrot.lane.b32.xlu0 %v1522, 32
  %v1525 = vpop.permute.xlu0 %1524
  %v1527 = vadd.f32 %v1517, %v1525
  %v1528 = vtanh.pop %v1527
  %1530 = vrot.lane.b32.xlu0 %v1528, 64
  %v1531 = vpop.permute.xlu0 %1530
  %v1533 = vmul.f32 %v1515, %v1531
  %1535 = vrot.lane.b32.xlu0 %v1436, 32
  %v1536 = vpop.permute.xlu0 %1535
  %s1538 = scalar_lea.vmem %s11, 40
  %1539 = vst.msk [vmem:[%s1538] sm:$0xff] %vm311, %v1536
  %1541 = vrot.lane.b32.xlu0 %v1533, 32
  %v1542 = vpop.permute.xlu0 %1541
  %s1544 = scalar_lea.vmem %s12, 16
  %1545 = vst.msk [vmem:[%s1544] sm:$0xff] %vm311, %v1542
  %v1546 = vsel %vm311, %v1536, 0
  %1548 = vmatprep.subr.mxu0 0.0
  %1549 = vmatpush1.msra.mxu0 0.0
  %1550 = vmatprep.subr.mxu0 0.0
  %1551 = vmatpush1.msra.mxu0 0.0
  %1552 = vmatprep.subr.mxu0 0.0
  %1553 = vmatpush1.msra.mxu0 0.0
  %1554 = vmatprep.subr.mxu0 0.0
  %1555 = vmatpush1.msra.mxu0 0.0
  %1556 = vmatprep.subr.mxu0 0.0
  %1557 = vmatpush1.msra.mxu0 0.0
  %1558 = vmatprep.subr.mxu0 0.0
  %1559 = vmatpush1.msra.mxu0 0.0
  %1560 = vmatprep.subr.mxu0 0.0
  %1561 = vmatpush1.msra.mxu0 0.0
  %1562 = vmatprep.subr.mxu0 0.0
  %1563 = vmatpush1.msra.mxu0 0.0
  %1564 = vmatprep.subr.mxu0 0.0
  %1565 = vmatpush1.msra.mxu0 0.0
  %1566 = vmatprep.subr.mxu0 0.0
  %1567 = vmatpush1.msra.mxu0 0.0
  %1568 = vmatprep.subr.mxu0 0.0
  %1569 = vmatpush1.msra.mxu0 0.0
  %1570 = vmatprep.subr.mxu0 0.0
  %1571 = vmatpush1.msra.mxu0 0.0
  %1572 = vmatprep.subr.mxu0 0.0
  %1573 = vmatpush1.msra.mxu0 %v306
  %1574 = vmatprep.subr.mxu0 0.0
  %1575 = vmatpush1.msra.mxu0 %v305
  %1576 = vmatprep.subr.mxu0 0.0
  %1577 = vmatpush1.msra.mxu0 %v304
  %1578 = vmatprep.subr.mxu0 0.0
  %1579 = vmatpush1.msra.mxu0 %v303
  %1580 = vmatprep.subr.mxu0 0.0
  %1581 = vmatpush2.msra.mxu0 0.0
  %1582 = vmatprep.subr.mxu0 0.0
  %1583 = vmatpush2.msra.mxu0 0.0
  %1584 = vmatprep.subr.mxu0 0.0
  %1585 = vmatpush2.msra.mxu0 0.0
  %1586 = vmatprep.subr.mxu0 0.0
  %1587 = vmatpush2.msra.mxu0 0.0
  %1588 = vmatprep.subr.mxu0 0.0
  %1589 = vmatpush2.msra.mxu0 0.0
  %1590 = vmatprep.subr.mxu0 0.0
  %1591 = vmatpush2.msra.mxu0 0.0
  %1592 = vmatprep.subr.mxu0 0.0
  %1593 = vmatpush2.msra.mxu0 0.0
  %1594 = vmatprep.subr.mxu0 0.0
  %1595 = vmatpush2.msra.mxu0 0.0
  %1596 = vmatprep.subr.mxu0 0.0
  %1597 = vmatpush2.msra.mxu0 0.0
  %1598 = vmatprep.subr.mxu0 0.0
  %1599 = vmatpush2.msra.mxu0 0.0
  %1600 = vmatprep.subr.mxu0 0.0
  %1601 = vmatpush2.msra.mxu0 0.0
  %1602 = vmatprep.subr.mxu0 0.0
  %1603 = vmatpush2.msra.mxu0 0.0
  %1604 = vmatprep.subr.mxu0 0.0
  %1605 = vmatpush2.msra.mxu0 0.0
  %1606 = vmatprep.subr.mxu0 0.0
  %1607 = vmatpush2.msra.mxu0 0.0
  %1608 = vmatprep.subr.mxu0 0.0
  %1609 = vmatpush2.msra.mxu0 0.0
  %1610 = vmatprep.subr.mxu0 0.0
  %1611 = vmatpush2.msra.mxu0 0.0
  %1612 = vmatprep.mubr.f32.mxu0 0.0
  %1613 = vmatmul.mubr.f32.gmra.mxu0 %v1546
  %v1614 = vpop.f32.mrf.mxu0
  %v1615 = vadd.f32 0.0, %v1614
  %v1616 = vpop.f32.mrf.mxu0
  %1617 = vdwg.mxu0
  %v1618 = vadd.f32 %v181, %v1615
  %v1619 = vxor.u32 %v1618, 2147483648
  %v1620 = vmul.f32 %v1619, 1.442695
  %v1621 = vpow.pop %v1620
  %v1622 = vadd.f32 %v1621, 1.0
  %v1623 = vrcp.pop %v1622
  %v1624 = vmul.f32 1.0, %v1623
  %v1625 = vtanh.pop %v1618
  %v1626 = vmul.f32 %v1624, %v1430
  %1628 = vrot.lane.b32.xlu0 %v1625, 64
  %v1629 = vpop.permute.xlu0 %1628
  %v1631 = vmul.f32 %v1624, %v1629
  %1633 = vrot.lane.b32.xlu0 %v1631, 32
  %v1634 = vpop.permute.xlu0 %1633
  %v1636 = vadd.f32 %v1626, %v1634
  %v1637 = vtanh.pop %v1636
  %1639 = vrot.lane.b32.xlu0 %v1637, 64
  %v1640 = vpop.permute.xlu0 %1639
  %v1642 = vmul.f32 %v1624, %v1640
  %v1643 = vsel %vm311, %v1542, 0
  %1645 = vmatprep.subr.mxu0 0.0
  %1646 = vmatpush1.msra.mxu0 0.0
  %1647 = vmatprep.subr.mxu0 0.0
  %1648 = vmatpush1.msra.mxu0 0.0
  %1649 = vmatprep.subr.mxu0 0.0
  %1650 = vmatpush1.msra.mxu0 0.0
  %1651 = vmatprep.subr.mxu0 0.0
  %1652 = vmatpush1.msra.mxu0 0.0
  %1653 = vmatprep.subr.mxu0 0.0
  %1654 = vmatpush1.msra.mxu0 0.0
  %1655 = vmatprep.subr.mxu0 0.0
  %1656 = vmatpush1.msra.mxu0 0.0
  %1657 = vmatprep.subr.mxu0 0.0
  %1658 = vmatpush1.msra.mxu0 0.0
  %1659 = vmatprep.subr.mxu0 0.0
  %1660 = vmatpush1.msra.mxu0 0.0
  %1661 = vmatprep.subr.mxu0 0.0
  %1662 = vmatpush1.msra.mxu0 0.0
  %1663 = vmatprep.subr.mxu0 0.0
  %1664 = vmatpush1.msra.mxu0 0.0
  %1665 = vmatprep.subr.mxu0 0.0
  %1666 = vmatpush1.msra.mxu0 0.0
  %1667 = vmatprep.subr.mxu0 0.0
  %1668 = vmatpush1.msra.mxu0 0.0
  %1669 = vmatprep.subr.mxu0 0.0
  %1670 = vmatpush1.msra.mxu0 %v310
  %1671 = vmatprep.subr.mxu0 0.0
  %1672 = vmatpush1.msra.mxu0 %v309
  %1673 = vmatprep.subr.mxu0 0.0
  %1674 = vmatpush1.msra.mxu0 %v308
  %1675 = vmatprep.subr.mxu0 0.0
  %1676 = vmatpush1.msra.mxu0 %v307
  %1677 = vmatprep.subr.mxu0 0.0
  %1678 = vmatpush2.msra.mxu0 0.0
  %1679 = vmatprep.subr.mxu0 0.0
  %1680 = vmatpush2.msra.mxu0 0.0
  %1681 = vmatprep.subr.mxu0 0.0
  %1682 = vmatpush2.msra.mxu0 0.0
  %1683 = vmatprep.subr.mxu0 0.0
  %1684 = vmatpush2.msra.mxu0 0.0
  %1685 = vmatprep.subr.mxu0 0.0
  %1686 = vmatpush2.msra.mxu0 0.0
  %1687 = vmatprep.subr.mxu0 0.0
  %1688 = vmatpush2.msra.mxu0 0.0
  %1689 = vmatprep.subr.mxu0 0.0
  %1690 = vmatpush2.msra.mxu0 0.0
  %1691 = vmatprep.subr.mxu0 0.0
  %1692 = vmatpush2.msra.mxu0 0.0
  %1693 = vmatprep.subr.mxu0 0.0
  %1694 = vmatpush2.msra.mxu0 0.0
  %1695 = vmatprep.subr.mxu0 0.0
  %1696 = vmatpush2.msra.mxu0 0.0
  %1697 = vmatprep.subr.mxu0 0.0
  %1698 = vmatpush2.msra.mxu0 0.0
  %1699 = vmatprep.subr.mxu0 0.0
  %1700 = vmatpush2.msra.mxu0 0.0
  %1701 = vmatprep.subr.mxu0 0.0
  %1702 = vmatpush2.msra.mxu0 0.0
  %1703 = vmatprep.subr.mxu0 0.0
  %1704 = vmatpush2.msra.mxu0 0.0
  %1705 = vmatprep.subr.mxu0 0.0
  %1706 = vmatpush2.msra.mxu0 0.0
  %1707 = vmatprep.subr.mxu0 0.0
  %1708 = vmatpush2.msra.mxu0 0.0
  %1709 = vmatprep.mubr.f32.mxu0 0.0
  %1710 = vmatmul.mubr.f32.gmra.mxu0 %v1643
  %v1711 = vpop.f32.mrf.mxu0
  %v1712 = vadd.f32 0.0, %v1711
  %v1713 = vpop.f32.mrf.mxu0
  %1714 = vdwg.mxu0
  %v1715 = vadd.f32 %v270, %v1712
  %v1716 = vxor.u32 %v1715, 2147483648
  %v1717 = vmul.f32 %v1716, 1.442695
  %v1718 = vpow.pop %v1717
  %v1719 = vadd.f32 %v1718, 1.0
  %v1720 = vrcp.pop %v1719
  %v1721 = vmul.f32 1.0, %v1720
  %v1722 = vtanh.pop %v1715
  %v1723 = vmul.f32 %v1721, %v1527
  %1725 = vrot.lane.b32.xlu0 %v1722, 64
  %v1726 = vpop.permute.xlu0 %1725
  %v1728 = vmul.f32 %v1721, %v1726
  %1730 = vrot.lane.b32.xlu0 %v1728, 32
  %v1731 = vpop.permute.xlu0 %1730
  %v1733 = vadd.f32 %v1723, %v1731
  %v1734 = vtanh.pop %v1733
  %1736 = vrot.lane.b32.xlu0 %v1734, 64
  %v1737 = vpop.permute.xlu0 %1736
  %v1739 = vmul.f32 %v1721, %v1737
  %1741 = vrot.lane.b32.xlu0 %v1642, 32
  %v1742 = vpop.permute.xlu0 %1741
  %s1744 = scalar_lea.vmem %s11, 48
  %1745 = vst.msk [vmem:[%s1744] sm:$0xff] %vm311, %v1742
  %1747 = vrot.lane.b32.xlu0 %v1739, 32
  %v1748 = vpop.permute.xlu0 %1747
  %s1750 = scalar_lea.vmem %s12, 8
  %1751 = vst.msk [vmem:[%s1750] sm:$0xff] %vm311, %v1748
  %v1752 = vsel %vm311, %v1742, 0
  %1754 = vmatprep.subr.mxu0 0.0
  %1755 = vmatpush1.msra.mxu0 0.0
  %1756 = vmatprep.subr.mxu0 0.0
  %1757 = vmatpush1.msra.mxu0 0.0
  %1758 = vmatprep.subr.mxu0 0.0
  %1759 = vmatpush1.msra.mxu0 0.0
  %1760 = vmatprep.subr.mxu0 0.0
  %1761 = vmatpush1.msra.mxu0 0.0
  %1762 = vmatprep.subr.mxu0 0.0
  %1763 = vmatpush1.msra.mxu0 0.0
  %1764 = vmatprep.subr.mxu0 0.0
  %1765 = vmatpush1.msra.mxu0 0.0
  %1766 = vmatprep.subr.mxu0 0.0
  %1767 = vmatpush1.msra.mxu0 0.0
  %1768 = vmatprep.subr.mxu0 0.0
  %1769 = vmatpush1.msra.mxu0 0.0
  %1770 = vmatprep.subr.mxu0 0.0
  %1771 = vmatpush1.msra.mxu0 0.0
  %1772 = vmatprep.subr.mxu0 0.0
  %1773 = vmatpush1.msra.mxu0 0.0
  %1774 = vmatprep.subr.mxu0 0.0
  %1775 = vmatpush1.msra.mxu0 0.0
  %1776 = vmatprep.subr.mxu0 0.0
  %1777 = vmatpush1.msra.mxu0 0.0
  %1778 = vmatprep.subr.mxu0 0.0
  %1779 = vmatpush1.msra.mxu0 %v306
  %1780 = vmatprep.subr.mxu0 0.0
  %1781 = vmatpush1.msra.mxu0 %v305
  %1782 = vmatprep.subr.mxu0 0.0
  %1783 = vmatpush1.msra.mxu0 %v304
  %1784 = vmatprep.subr.mxu0 0.0
  %1785 = vmatpush1.msra.mxu0 %v303
  %1786 = vmatprep.subr.mxu0 0.0
  %1787 = vmatpush2.msra.mxu0 0.0
  %1788 = vmatprep.subr.mxu0 0.0
  %1789 = vmatpush2.msra.mxu0 0.0
  %1790 = vmatprep.subr.mxu0 0.0
  %1791 = vmatpush2.msra.mxu0 0.0
  %1792 = vmatprep.subr.mxu0 0.0
  %1793 = vmatpush2.msra.mxu0 0.0
  %1794 = vmatprep.subr.mxu0 0.0
  %1795 = vmatpush2.msra.mxu0 0.0
  %1796 = vmatprep.subr.mxu0 0.0
  %1797 = vmatpush2.msra.mxu0 0.0
  %1798 = vmatprep.subr.mxu0 0.0
  %1799 = vmatpush2.msra.mxu0 0.0
  %1800 = vmatprep.subr.mxu0 0.0
  %1801 = vmatpush2.msra.mxu0 0.0
  %1802 = vmatprep.subr.mxu0 0.0
  %1803 = vmatpush2.msra.mxu0 0.0
  %1804 = vmatprep.subr.mxu0 0.0
  %1805 = vmatpush2.msra.mxu0 0.0
  %1806 = vmatprep.subr.mxu0 0.0
  %1807 = vmatpush2.msra.mxu0 0.0
  %1808 = vmatprep.subr.mxu0 0.0
  %1809 = vmatpush2.msra.mxu0 0.0
  %1810 = vmatprep.subr.mxu0 0.0
  %1811 = vmatpush2.msra.mxu0 0.0
  %1812 = vmatprep.subr.mxu0 0.0
  %1813 = vmatpush2.msra.mxu0 0.0
  %1814 = vmatprep.subr.mxu0 0.0
  %1815 = vmatpush2.msra.mxu0 0.0
  %1816 = vmatprep.subr.mxu0 0.0
  %1817 = vmatpush2.msra.mxu0 0.0
  %1818 = vmatprep.mubr.f32.mxu0 0.0
  %1819 = vmatmul.mubr.f32.gmra.mxu0 %v1752
  %v1820 = vpop.f32.mrf.mxu0
  %v1821 = vadd.f32 0.0, %v1820
  %v1822 = vpop.f32.mrf.mxu0
  %1823 = vdwg.mxu0
  %v1824 = vadd.f32 %v186, %v1821
  %v1825 = vxor.u32 %v1824, 2147483648
  %v1826 = vmul.f32 %v1825, 1.442695
  %v1827 = vpow.pop %v1826
  %v1828 = vadd.f32 %v1827, 1.0
  %v1829 = vrcp.pop %v1828
  %v1830 = vmul.f32 1.0, %v1829
  %v1831 = vtanh.pop %v1824
  %v1832 = vmul.f32 %v1830, %v1636
  %1834 = vrot.lane.b32.xlu0 %v1831, 64
  %v1835 = vpop.permute.xlu0 %1834
  %v1837 = vmul.f32 %v1830, %v1835
  %1839 = vrot.lane.b32.xlu0 %v1837, 32
  %v1840 = vpop.permute.xlu0 %1839
  %v1842 = vadd.f32 %v1832, %v1840
  %v1843 = vtanh.pop %v1842
  %1845 = vrot.lane.b32.xlu0 %v1843, 64
  %v1846 = vpop.permute.xlu0 %1845
  %v1848 = vmul.f32 %v1830, %v1846
  %v1849 = vsel %vm311, %v1748, 0
  %1851 = vmatprep.subr.mxu0 0.0
  %1852 = vmatpush1.msra.mxu0 0.0
  %1853 = vmatprep.subr.mxu0 0.0
  %1854 = vmatpush1.msra.mxu0 0.0
  %1855 = vmatprep.subr.mxu0 0.0
  %1856 = vmatpush1.msra.mxu0 0.0
  %1857 = vmatprep.subr.mxu0 0.0
  %1858 = vmatpush1.msra.mxu0 0.0
  %1859 = vmatprep.subr.mxu0 0.0
  %1860 = vmatpush1.msra.mxu0 0.0
  %1861 = vmatprep.subr.mxu0 0.0
  %1862 = vmatpush1.msra.mxu0 0.0
  %1863 = vmatprep.subr.mxu0 0.0
  %1864 = vmatpush1.msra.mxu0 0.0
  %1865 = vmatprep.subr.mxu0 0.0
  %1866 = vmatpush1.msra.mxu0 0.0
  %1867 = vmatprep.subr.mxu0 0.0
  %1868 = vmatpush1.msra.mxu0 0.0
  %1869 = vmatprep.subr.mxu0 0.0
  %1870 = vmatpush1.msra.mxu0 0.0
  %1871 = vmatprep.subr.mxu0 0.0
  %1872 = vmatpush1.msra.mxu0 0.0
  %1873 = vmatprep.subr.mxu0 0.0
  %1874 = vmatpush1.msra.mxu0 0.0
  %1875 = vmatprep.subr.mxu0 0.0
  %1876 = vmatpush1.msra.mxu0 %v310
  %1877 = vmatprep.subr.mxu0 0.0
  %1878 = vmatpush1.msra.mxu0 %v309
  %1879 = vmatprep.subr.mxu0 0.0
  %1880 = vmatpush1.msra.mxu0 %v308
  %1881 = vmatprep.subr.mxu0 0.0
  %1882 = vmatpush1.msra.mxu0 %v307
  %1883 = vmatprep.subr.mxu0 0.0
  %1884 = vmatpush2.msra.mxu0 0.0
  %1885 = vmatprep.subr.mxu0 0.0
  %1886 = vmatpush2.msra.mxu0 0.0
  %1887 = vmatprep.subr.mxu0 0.0
  %1888 = vmatpush2.msra.mxu0 0.0
  %1889 = vmatprep.subr.mxu0 0.0
  %1890 = vmatpush2.msra.mxu0 0.0
  %1891 = vmatprep.subr.mxu0 0.0
  %1892 = vmatpush2.msra.mxu0 0.0
  %1893 = vmatprep.subr.mxu0 0.0
  %1894 = vmatpush2.msra.mxu0 0.0
  %1895 = vmatprep.subr.mxu0 0.0
  %1896 = vmatpush2.msra.mxu0 0.0
  %1897 = vmatprep.subr.mxu0 0.0
  %1898 = vmatpush2.msra.mxu0 0.0
  %1899 = vmatprep.subr.mxu0 0.0
  %1900 = vmatpush2.msra.mxu0 0.0
  %1901 = vmatprep.subr.mxu0 0.0
  %1902 = vmatpush2.msra.mxu0 0.0
  %1903 = vmatprep.subr.mxu0 0.0
  %1904 = vmatpush2.msra.mxu0 0.0
  %1905 = vmatprep.subr.mxu0 0.0
  %1906 = vmatpush2.msra.mxu0 0.0
  %1907 = vmatprep.subr.mxu0 0.0
  %1908 = vmatpush2.msra.mxu0 0.0
  %1909 = vmatprep.subr.mxu0 0.0
  %1910 = vmatpush2.msra.mxu0 0.0
  %1911 = vmatprep.subr.mxu0 0.0
  %1912 = vmatpush2.msra.mxu0 0.0
  %1913 = vmatprep.subr.mxu0 0.0
  %1914 = vmatpush2.msra.mxu0 0.0
  %1915 = vmatprep.mubr.f32.mxu0 0.0
  %1916 = vmatmul.mubr.f32.gmra.mxu0 %v1849
  %v1917 = vpop.f32.mrf.mxu0
  %v1918 = vadd.f32 0.0, %v1917
  %v1919 = vpop.f32.mrf.mxu0
  %1920 = vdwg.mxu0
  %v1921 = vadd.f32 %v265, %v1918
  %v1922 = vxor.u32 %v1921, 2147483648
  %v1923 = vmul.f32 %v1922, 1.442695
  %v1924 = vpow.pop %v1923
  %v1925 = vadd.f32 %v1924, 1.0
  %v1926 = vrcp.pop %v1925
  %v1927 = vmul.f32 1.0, %v1926
  %v1928 = vtanh.pop %v1921
  %v1929 = vmul.f32 %v1927, %v1733
  %1931 = vrot.lane.b32.xlu0 %v1928, 64
  %v1932 = vpop.permute.xlu0 %1931
  %v1934 = vmul.f32 %v1927, %v1932
  %1936 = vrot.lane.b32.xlu0 %v1934, 32
  %v1937 = vpop.permute.xlu0 %1936
  %v1939 = vadd.f32 %v1929, %v1937
  %v1940 = vtanh.pop %v1939
  %1942 = vrot.lane.b32.xlu0 %v1940, 64
  %v1943 = vpop.permute.xlu0 %1942
  %v1945 = vmul.f32 %v1927, %v1943
  %1947 = vrot.lane.b32.xlu0 %v1848, 32
  %v1948 = vpop.permute.xlu0 %1947
  %s1950 = scalar_lea.vmem %s11, 56
  %1951 = vst.msk [vmem:[%s1950] sm:$0xff] %vm311, %v1948
  %1953 = vrot.lane.b32.xlu0 %v1945, 32
  %v1954 = vpop.permute.xlu0 %1953
  %1956 = vst.msk [vmem:[%s12] sm:$0xff] %vm311, %v1954
  %1957 = vrot.lane.b32.xlu0 %v1945, 64
  %v1958 = vpop.permute.xlu0 %1957
  %v1960 = vsel %vm311, %v1948, %v1958
  %1962 = vrot.lane.b32.xlu0 %v1842, 96
  %v1963 = vpop.permute.xlu0 %1962
  %v1965 = vsel %vm311, %v1963, %v1939
  %v1966 = vld [vmem:[%s7] sm:$0xff]
  %v1967 = vld [vmem:[%s7 + $0x8] sm:$0xff]
  %v1968 = vld [vmem:[%s7 + $0x10] sm:$0xff]
  %v1969 = vld [vmem:[%s7 + $0x18] sm:$0xff]
  %v1970 = vld [vmem:[%s7 + $0x20] sm:$0xff]
  %v1971 = vld [vmem:[%s7 + $0x28] sm:$0xff]
  %v1972 = vld [vmem:[%s7 + $0x30] sm:$0xff]
  %v1973 = vld [vmem:[%s7 + $0x38] sm:$0xff]
  %v1974 = vld [vmem:[%s8] sm:$0x1]
  %v1976 = vlaneseq
  %v1977 = vshrl.u32 %v1976, 7
  %v1978 = vsub.s32 0, %v1977
  %v1979 = vrot.slane %v1974, %v1978
  %vm1981 = vcmask 523264
  %v1983 = vsel %vm1981, %v1960, 0
  %1985 = vmatprep.subr.mxu0 0.0
  %1986 = vmatpush1.msra.mxu0 0.0
  %1987 = vmatprep.subr.mxu0 0.0
  %1988 = vmatpush1.msra.mxu0 0.0
  %1989 = vmatprep.subr.mxu0 0.0
  %1990 = vmatpush1.msra.mxu0 0.0
  %1991 = vmatprep.subr.mxu0 0.0
  %1992 = vmatpush1.msra.mxu0 0.0
  %1993 = vmatprep.subr.mxu0 0.0
  %1994 = vmatpush1.msra.mxu0 0.0
  %1995 = vmatprep.subr.mxu0 0.0
  %1996 = vmatpush1.msra.mxu0 0.0
  %1997 = vmatprep.subr.mxu0 0.0
  %1998 = vmatpush1.msra.mxu0 0.0
  %1999 = vmatprep.subr.mxu0 0.0
  %2000 = vmatpush1.msra.mxu0 0.0
  %2001 = vmatprep.subr.mxu0 0.0
  %2002 = vmatpush1.msra.mxu0 %v1973
  %2003 = vmatprep.subr.mxu0 0.0
  %2004 = vmatpush1.msra.mxu0 %v1972
  %2005 = vmatprep.subr.mxu0 0.0
  %2006 = vmatpush1.msra.mxu0 %v1971
  %2007 = vmatprep.subr.mxu0 0.0
  %2008 = vmatpush1.msra.mxu0 %v1970
  %2009 = vmatprep.subr.mxu0 0.0
  %2010 = vmatpush1.msra.mxu0 %v1969
  %2011 = vmatprep.subr.mxu0 0.0
  %2012 = vmatpush1.msra.mxu0 %v1968
  %2013 = vmatprep.subr.mxu0 0.0
  %2014 = vmatpush1.msra.mxu0 %v1967
  %2015 = vmatprep.subr.mxu0 0.0
  %2016 = vmatpush1.msra.mxu0 %v1966
  %2017 = vmatprep.subr.mxu0 0.0
  %2018 = vmatpush2.msra.mxu0 0.0
  %2019 = vmatprep.subr.mxu0 0.0
  %2020 = vmatpush2.msra.mxu0 0.0
  %2021 = vmatprep.subr.mxu0 0.0
  %2022 = vmatpush2.msra.mxu0 0.0
  %2023 = vmatprep.subr.mxu0 0.0
  %2024 = vmatpush2.msra.mxu0 0.0
  %2025 = vmatprep.subr.mxu0 0.0
  %2026 = vmatpush2.msra.mxu0 0.0
  %2027 = vmatprep.subr.mxu0 0.0
  %2028 = vmatpush2.msra.mxu0 0.0
  %2029 = vmatprep.subr.mxu0 0.0
  %2030 = vmatpush2.msra.mxu0 0.0
  %2031 = vmatprep.subr.mxu0 0.0
  %2032 = vmatpush2.msra.mxu0 0.0
  %2033 = vmatprep.subr.mxu0 0.0
  %2034 = vmatpush2.msra.mxu0 0.0
  %2035 = vmatprep.subr.mxu0 0.0
  %2036 = vmatpush2.msra.mxu0 0.0
  %2037 = vmatprep.subr.mxu0 0.0
  %2038 = vmatpush2.msra.mxu0 0.0
  %2039 = vmatprep.subr.mxu0 0.0
  %2040 = vmatpush2.msra.mxu0 0.0
  %2041 = vmatprep.subr.mxu0 0.0
  %2042 = vmatpush2.msra.mxu0 0.0
  %2043 = vmatprep.subr.mxu0 0.0
  %2044 = vmatpush2.msra.mxu0 0.0
  %2045 = vmatprep.subr.mxu0 0.0
  %2046 = vmatpush2.msra.mxu0 0.0
  %2047 = vmatprep.subr.mxu0 0.0
  %2048 = vmatpush2.msra.mxu0 0.0
  %2049 = vmatprep.mubr.f32.mxu0 0.0
  %2050 = vmatmul.mubr.f32.gmra.mxu0 %v1983
  %v2051 = vpop.f32.mrf.mxu0
  %v2052 = vadd.f32 %v1979, %v2051
  %v2053 = vpop.f32.mrf.mxu0
  %2054 = vdwg.mxu0
  %2055 = vst.msk [vmem:[%s13] sm:$0xff] %vm311, %v2052
  %v2056 = vld [vmem:[%s9] sm:$0xff]
  %v2057 = vld [vmem:[%s9 + $0x8] sm:$0xff]
  %v2058 = vld [vmem:[%s9 + $0x10] sm:$0xff]
  %v2059 = vld [vmem:[%s9 + $0x18] sm:$0xff]
  %v2060 = vld [vmem:[%s9 + $0x20] sm:$0xff]
  %v2061 = vld [vmem:[%s9 + $0x28] sm:$0xff]
  %v2062 = vld [vmem:[%s9 + $0x30] sm:$0xff]
  %v2063 = vld [vmem:[%s9 + $0x38] sm:$0xff]
  %v2064 = vld [vmem:[%s10] sm:$0x1]
  %v2066 = vlaneseq
  %v2067 = vshrl.u32 %v2066, 7
  %v2068 = vsub.s32 0, %v2067
  %v2069 = vrot.slane %v2064, %v2068
  %v2072 = vsel %vm1981, %v1965, 0
  %2074 = vmatprep.subr.mxu0 0.0
  %2075 = vmatpush1.msra.mxu0 0.0
  %2076 = vmatprep.subr.mxu0 0.0
  %2077 = vmatpush1.msra.mxu0 0.0
  %2078 = vmatprep.subr.mxu0 0.0
  %2079 = vmatpush1.msra.mxu0 0.0
  %2080 = vmatprep.subr.mxu0 0.0
  %2081 = vmatpush1.msra.mxu0 0.0
  %2082 = vmatprep.subr.mxu0 0.0
  %2083 = vmatpush1.msra.mxu0 0.0
  %2084 = vmatprep.subr.mxu0 0.0
  %2085 = vmatpush1.msra.mxu0 0.0
  %2086 = vmatprep.subr.mxu0 0.0
  %2087 = vmatpush1.msra.mxu0 0.0
  %2088 = vmatprep.subr.mxu0 0.0
  %2089 = vmatpush1.msra.mxu0 0.0
  %2090 = vmatprep.subr.mxu0 0.0
  %2091 = vmatpush1.msra.mxu0 %v2063
  %2092 = vmatprep.subr.mxu0 0.0
  %2093 = vmatpush1.msra.mxu0 %v2062
  %2094 = vmatprep.subr.mxu0 0.0
  %2095 = vmatpush1.msra.mxu0 %v2061
  %2096 = vmatprep.subr.mxu0 0.0
  %2097 = vmatpush1.msra.mxu0 %v2060
  %2098 = vmatprep.subr.mxu0 0.0
  %2099 = vmatpush1.msra.mxu0 %v2059
  %2100 = vmatprep.subr.mxu0 0.0
  %2101 = vmatpush1.msra.mxu0 %v2058
  %2102 = vmatprep.subr.mxu0 0.0
  %2103 = vmatpush1.msra.mxu0 %v2057
  %2104 = vmatprep.subr.mxu0 0.0
  %2105 = vmatpush1.msra.mxu0 %v2056
  %2106 = vmatprep.subr.mxu0 0.0
  %2107 = vmatpush2.msra.mxu0 0.0
  %2108 = vmatprep.subr.mxu0 0.0
  %2109 = vmatpush2.msra.mxu0 0.0
  %2110 = vmatprep.subr.mxu0 0.0
  %2111 = vmatpush2.msra.mxu0 0.0
  %2112 = vmatprep.subr.mxu0 0.0
  %2113 = vmatpush2.msra.mxu0 0.0
  %2114 = vmatprep.subr.mxu0 0.0
  %2115 = vmatpush2.msra.mxu0 0.0
  %2116 = vmatprep.subr.mxu0 0.0
  %2117 = vmatpush2.msra.mxu0 0.0
  %2118 = vmatprep.subr.mxu0 0.0
  %2119 = vmatpush2.msra.mxu0 0.0
  %2120 = vmatprep.subr.mxu0 0.0
  %2121 = vmatpush2.msra.mxu0 0.0
  %2122 = vmatprep.subr.mxu0 0.0
  %2123 = vmatpush2.msra.mxu0 0.0
  %2124 = vmatprep.subr.mxu0 0.0
  %2125 = vmatpush2.msra.mxu0 0.0
  %2126 = vmatprep.subr.mxu0 0.0
  %2127 = vmatpush2.msra.mxu0 0.0
  %2128 = vmatprep.subr.mxu0 0.0
  %2129 = vmatpush2.msra.mxu0 0.0
  %2130 = vmatprep.subr.mxu0 0.0
  %2131 = vmatpush2.msra.mxu0 0.0
  %2132 = vmatprep.subr.mxu0 0.0
  %2133 = vmatpush2.msra.mxu0 0.0
  %2134 = vmatprep.subr.mxu0 0.0
  %2135 = vmatpush2.msra.mxu0 0.0
  %2136 = vmatprep.subr.mxu0 0.0
  %2137 = vmatpush2.msra.mxu0 0.0
  %2138 = vmatprep.mubr.f32.mxu0 0.0
  %2139 = vmatmul.mubr.f32.gmra.mxu0 %v2072
  %v2140 = vpop.f32.mrf.mxu0
  %v2141 = vadd.f32 %v2069, %v2140
  %v2142 = vpop.f32.mrf.mxu0
  %2143 = vdwg.mxu0
  %2144 = vst.msk [vmem:[%s14] sm:$0xff] %vm311, %v2141
  // Predicated region
  $region46: #{seq2seq_forward.2} parent=0 // pred_check
    _
  $region47: #{seq2seq_forward.2} parent=0 // pred_check_branch
    %2146 = sbr.rel (0) target = $region49
  $region48: #{seq2seq_forward.2} parent=0 // pred_region
    _
  $region49: #{seq2seq_forward.2} parent=0 // pred_fallthru
    _
  // Predicated region
  $region50: #{seq2seq_forward.2} parent=0 // pred_check
    _
  $region51: #{seq2seq_forward.2} parent=0 // pred_check_branch
    %2148 = sbr.rel (0) target = $region53
  $region52: #{seq2seq_forward.2} parent=0 // pred_region
    _
  $region53: #{seq2seq_forward.2} parent=0 // pred_fallthru
    _
  // Predicated region
  $region54: #{seq2seq_forward.2} parent=0 // pred_check
    _
  $region55: #{seq2seq_forward.2} parent=0 // pred_check_branch
    %2150 = sbr.rel (0) target = $region57
  $region56: #{seq2seq_forward.2} parent=0 // pred_region
    _
  $region57: #{seq2seq_forward.2} parent=0 // pred_fallthru
    _
  // Predicated region
  $region58: #{seq2seq_forward.2} parent=0 // pred_check
    _
  $region59: #{seq2seq_forward.2} parent=0 // pred_check_branch
    %2152 = sbr.rel (0) target = $region61
  $region60: #{seq2seq_forward.2} parent=0 // pred_region
    _
  $region61: #{seq2seq_forward.2} parent=0 // pred_fallthru
    _
  // Predicated region
  $region62: #{seq2seq_forward.2} parent=0 // pred_check
    _
  $region63: #{seq2seq_forward.2} parent=0 // pred_check_branch
    %2154 = sbr.rel (0) target = $region65
  $region64: #{seq2seq_forward.2} parent=0 // pred_region
    _
  $region65: #{seq2seq_forward.2} parent=0 // pred_fallthru
    _
  // Predicated region
  $region66: #{seq2seq_forward.2} parent=0 // pred_check
    _
  $region67: #{seq2seq_forward.2} parent=0 // pred_check_branch
    %2156 = sbr.rel (0) target = $region69
  $region68: #{seq2seq_forward.2} parent=0 // pred_region
    _
  $region69: #{seq2seq_forward.2} parent=0 // pred_fallthru
    _
  // Predicated region
  $region70: #{seq2seq_forward.2} parent=0 // pred_check
    _
  $region71: #{seq2seq_forward.2} parent=0 // pred_check_branch
    %2158 = sbr.rel (0) target = $region73
  $region72: #{seq2seq_forward.2} parent=0 // pred_region
    _
  $region73: #{seq2seq_forward.2} parent=0 // pred_fallthru
    _
  // Predicated region
  $region74: #{seq2seq_forward.2} parent=0 // pred_check
    _
  $region75: #{seq2seq_forward.2} parent=0 // pred_check_branch
    %2160 = sbr.rel (0) target = $region77
  $region76: #{seq2seq_forward.2} parent=0 // pred_region
    _
  $region77: #{seq2seq_forward.2} parent=0 // pred_fallthru
    _

// kernel: seq2seq_forward.3
$region0: #{seq2seq_forward.3}
  #allocation0 [shape = 'u32[]', space=smem, size = 0x4, offset = 0x4, fixed_abs, tag = 'smem constant byte address 0x4 - core index']
  #allocation1 [shape = 'u32[144,128]{1,0:T(1,128)}', space=vmem, size = 0x12000, scoped, tag = 'internal scratch']
  #allocation2 [shape = 'f32[1,1]{1,0:T(1,128)S(6)}', space=smem, size = 0x200, scoped, tag = 'scoped memory for seq2seq_forward.3']
  %s0 = inlined_call_operand.vmem [shape: s32[6], index: 0, kind: input, shape index: {}]
  %s1 = inlined_call_operand.<no memory space> [shape: f32[1,1], index: 1, kind: input, shape index: {}]
  %s2 = inlined_call_operand.vmem [shape: f32[6,8,128], index: 2, kind: input, shape index: {}]
  %s3 = inlined_call_operand.vmem [shape: f32[8,8,32], index: 3, kind: input, shape index: {}]
  %s4 = inlined_call_operand.vmem [shape: f32[8,8,32], index: 4, kind: input, shape index: {}]
  %s5 = inlined_call_operand.vmem [shape: f32[8,32], index: 5, kind: input, shape index: {}]
  %s6 = inlined_call_operand.vmem [shape: f32[8,32], index: 6, kind: input, shape index: {}]
  %s7 = inlined_call_operand.vmem [shape: f32[128,16], index: 7, kind: input, shape index: {}]
  %s8 = inlined_call_operand.vmem [shape: f32[112,128], index: 8, kind: input, shape index: {}]
  %s9 = inlined_call_operand.vmem [shape: f32[1,128], index: 9, kind: input, shape index: {}]
  %s10 = inlined_call_operand.vmem [shape: f32[1,32], index: 10, kind: input, shape index: {}]
  %s11 = inlined_call_operand.vmem [shape: f32[1,32], index: 11, kind: input, shape index: {}]
  %s12 = inlined_call_operand.vmem [shape: f32[1,32], index: 12, kind: input, shape index: {}]
  %s13 = inlined_call_operand.vmem [shape: f32[32,128], index: 13, kind: input, shape index: {}]
  %s14 = inlined_call_operand.vmem [shape: f32[1,128], index: 14, kind: input, shape index: {}]
  %s15 = inlined_call_operand.vmem [shape: f32[6,8,128], index: 15, kind: output, shape index: {}]
  %s16 = sld [smem:[#allocation0]]
  $region74: #{seq2seq_forward.3} parent=0
    _
  %s18 = ssub.s32 1, %s16
  %s19 = scalar_select 0, %s18, %s16
  %20 = sst [smem:[#allocation2]] %s1
  $region1: #{seq2seq_forward.3} parent=0
    #allocation3 [shape = 'u8[512]{0}', space=smem, size = 0x200, scoped, tag = 'input window, operand 0, single buffered']
    #allocation4 [shape = 's32[1]{0}', space=sflag, size = 0x4, scoped, tag = 'scoped memory for seq2seq_forward.3']
    %21 = vsyncpa [#allocation4], 0
    // Predicated region
    $region2: #{seq2seq_forward.3} parent=1 // pred_check
      _
    $region3: #{seq2seq_forward.3} parent=1 // pred_check_branch
      %23 = sbr.rel (0) target = $region5
    $region4: #{seq2seq_forward.3} parent=1 // pred_region
      %s25 = ssub.s32 16, 16
      %26 = vsyncadd [#allocation4], %s25
      %s28 = sshll.u32 %s0, 4
      %s29 = int_to_ptr.vmem [resolvable:$true] %s28
      %31 = dma.vmem_to_smem %s29, 16, [#allocation3], [#allocation4]
    $region5: #{seq2seq_forward.3} parent=1 // pred_fallthru
      _
    // Predicated region
    $region6: #{seq2seq_forward.3} parent=1 // pred_check
      _
    $region7: #{seq2seq_forward.3} parent=1 // pred_check_branch
      %33 = sbr.rel (0) target = $region9
    $region8: #{seq2seq_forward.3} parent=1 // pred_region
      _
    $region9: #{seq2seq_forward.3} parent=1 // pred_fallthru
      _
    // Predicated region
    $region10: #{seq2seq_forward.3} parent=1 // pred_check
      _
    $region11: #{seq2seq_forward.3} parent=1 // pred_check_branch
      %35 = sbr.rel (0) target = $region13
    $region12: #{seq2seq_forward.3} parent=1 // pred_region
      _
    $region13: #{seq2seq_forward.3} parent=1 // pred_fallthru
      _
    // Predicated region
    $region14: #{seq2seq_forward.3} parent=1 // pred_check
      _
    $region15: #{seq2seq_forward.3} parent=1 // pred_check_branch
      %37 = sbr.rel (0) target = $region17
    $region16: #{seq2seq_forward.3} parent=1 // pred_region
      _
    $region17: #{seq2seq_forward.3} parent=1 // pred_fallthru
      _
    // Predicated region
    $region18: #{seq2seq_forward.3} parent=1 // pred_check
      _
    $region19: #{seq2seq_forward.3} parent=1 // pred_check_branch
      %39 = sbr.rel (0) target = $region21
    $region20: #{seq2seq_forward.3} parent=1 // pred_region
      _
    $region21: #{seq2seq_forward.3} parent=1 // pred_fallthru
      _
    // Predicated region
    $region22: #{seq2seq_forward.3} parent=1 // pred_check
      _
    $region23: #{seq2seq_forward.3} parent=1 // pred_check_branch
      %41 = sbr.rel (0) target = $region25
    $region24: #{seq2seq_forward.3} parent=1 // pred_region
      _
    $region25: #{seq2seq_forward.3} parent=1 // pred_fallthru
      _
    // Predicated region
    $region26: #{seq2seq_forward.3} parent=1 // pred_check
      _
    $region27: #{seq2seq_forward.3} parent=1 // pred_check_branch
      %43 = sbr.rel (0) target = $region29
    $region28: #{seq2seq_forward.3} parent=1 // pred_region
      _
    $region29: #{seq2seq_forward.3} parent=1 // pred_fallthru
      _
    // Predicated region
    $region30: #{seq2seq_forward.3} parent=1 // pred_check
      _
    $region31: #{seq2seq_forward.3} parent=1 // pred_check_branch
      %45 = sbr.rel (0) target = $region33
    $region32: #{seq2seq_forward.3} parent=1 // pred_region
      _
    $region33: #{seq2seq_forward.3} parent=1 // pred_fallthru
      _
    // Predicated region
    $region34: #{seq2seq_forward.3} parent=1 // pred_check
      _
    $region35: #{seq2seq_forward.3} parent=1 // pred_check_branch
      %47 = sbr.rel (0) target = $region37
    $region36: #{seq2seq_forward.3} parent=1 // pred_region
      _
    $region37: #{seq2seq_forward.3} parent=1 // pred_fallthru
      _
    // Predicated region
    $region38: #{seq2seq_forward.3} parent=1 // pred_check
      _
    $region39: #{seq2seq_forward.3} parent=1 // pred_check_branch
      %49 = sbr.rel (0) target = $region41
    $region40: #{seq2seq_forward.3} parent=1 // pred_region
      _
    $region41: #{seq2seq_forward.3} parent=1 // pred_fallthru
      _
    // Predicated region
    $region42: #{seq2seq_forward.3} parent=1 // pred_check
      _
    $region43: #{seq2seq_forward.3} parent=1 // pred_check_branch
      %51 = sbr.rel (0) target = $region45
    $region44: #{seq2seq_forward.3} parent=1 // pred_region
      _
    $region45: #{seq2seq_forward.3} parent=1 // pred_fallthru
      _
    // Predicated region
    $region46: #{seq2seq_forward.3} parent=1 // pred_check
      _
    $region47: #{seq2seq_forward.3} parent=1 // pred_check_branch
      %53 = sbr.rel (0) target = $region49
    $region48: #{seq2seq_forward.3} parent=1 // pred_region
      _
    $region49: #{seq2seq_forward.3} parent=1 // pred_fallthru
      _
    // Predicated region
    $region50: #{seq2seq_forward.3} parent=1 // pred_check
      _
    $region51: #{seq2seq_forward.3} parent=1 // pred_check_branch
      %55 = sbr.rel (0) target = $region53
    $region52: #{seq2seq_forward.3} parent=1 // pred_region
      _
    $region53: #{seq2seq_forward.3} parent=1 // pred_fallthru
      _
    // Predicated region
    $region54: #{seq2seq_forward.3} parent=1 // pred_check
      _
    $region55: #{seq2seq_forward.3} parent=1 // pred_check_branch
      %57 = sbr.rel (0) target = $region57
    $region56: #{seq2seq_forward.3} parent=1 // pred_region
      _
    $region57: #{seq2seq_forward.3} parent=1 // pred_fallthru
      _
    // Predicated region
    $region58: #{seq2seq_forward.3} parent=1 // pred_check
      _
    $region59: #{seq2seq_forward.3} parent=1 // pred_check_branch
      %59 = sbr.rel (0) target = $region61
    $region60: #{seq2seq_forward.3} parent=1 // pred_region
      _
    $region61: #{seq2seq_forward.3} parent=1 // pred_fallthru
      _
    // Predicated region
    $region62: #{seq2seq_forward.3} parent=1 // pred_check
      _
    $region63: #{seq2seq_forward.3} parent=1 // pred_check_branch
      %61 = sbr.rel (0) target = $region65
    $region64: #{seq2seq_forward.3} parent=1 // pred_region
      %62 = dma.done [#allocation4], 16
    $region65: #{seq2seq_forward.3} parent=1 // pred_fallthru
      _
    %63 = sfence
    %v64 = vld [vmem:[%s3] sm:$0xff]
    %v65 = vld [vmem:[%s3 + $0x8] sm:$0xff]
    %v66 = vld [vmem:[%s3 + $0x10] sm:$0xff]
    %v67 = vld [vmem:[%s3 + $0x18] sm:$0xff]
    %v68 = vld [vmem:[%s3 + $0x20] sm:$0xff]
    %v69 = vld [vmem:[%s3 + $0x28] sm:$0xff]
    %v70 = vld [vmem:[%s3 + $0x30] sm:$0xff]
    %v71 = vld [vmem:[%s3 + $0x38] sm:$0xff]
    %v72 = vld [vmem:[%s4] sm:$0xff]
    %v73 = vld [vmem:[%s4 + $0x8] sm:$0xff]
    %v74 = vld [vmem:[%s4 + $0x10] sm:$0xff]
    %v75 = vld [vmem:[%s4 + $0x18] sm:$0xff]
    %v76 = vld [vmem:[%s4 + $0x20] sm:$0xff]
    %v77 = vld [vmem:[%s4 + $0x28] sm:$0xff]
    %v78 = vld [vmem:[%s4 + $0x30] sm:$0xff]
    %v79 = vld [vmem:[%s4 + $0x38] sm:$0xff]
    %s80 = sld [smem:[#allocation2]]
    %v81 = vld [vmem:[%s11] sm:$0x1]
    %v82 = vld [vmem:[%s12] sm:$0x1]
    %v84 = vlaneseq
    %v85 = vshrl.u32 %v84, 7
    %v86 = vsub.s32 0, %v85
    %v87 = vrot.slane %v81, %v86
    %v89 = vmul.f32 %v64, %v87
    %v90 = vmul.f32 %v65, %v87
    %v91 = vmul.f32 %v66, %v87
    %v92 = vmul.f32 %v67, %v87
    %v93 = vmul.f32 %v68, %v87
    %v94 = vmul.f32 %v69, %v87
    %v95 = vmul.f32 %v70, %v87
    %v96 = vmul.f32 %v71, %v87
    %vm97 = vcmask 261120
    %v98 = vsel %vm97, %v89, 0.0
    %99 = vadd.xlane.f32.xlu0 %v98
    %v100 = vpop.xlane.xlu0 %99
    %v101 = vsel %vm97, %v90, 0.0
    %102 = vadd.xlane.f32.xlu0 %v101
    %v103 = vpop.xlane.xlu0 %102
    %v104 = vsel %vm97, %v91, 0.0
    %105 = vadd.xlane.f32.xlu0 %v104
    %v106 = vpop.xlane.xlu0 %105
    %v107 = vsel %vm97, %v92, 0.0
    %108 = vadd.xlane.f32.xlu0 %v107
    %v109 = vpop.xlane.xlu0 %108
    %v110 = vsel %vm97, %v93, 0.0
    %111 = vadd.xlane.f32.xlu0 %v110
    %v112 = vpop.xlane.xlu0 %111
    %v113 = vsel %vm97, %v94, 0.0
    %114 = vadd.xlane.f32.xlu0 %v113
    %v115 = vpop.xlane.xlu0 %114
    %v116 = vsel %vm97, %v95, 0.0
    %117 = vadd.xlane.f32.xlu0 %v116
    %v118 = vpop.xlane.xlu0 %117
    %v119 = vsel %vm97, %v96, 0.0
    %120 = vadd.xlane.f32.xlu0 %v119
    %v121 = vpop.xlane.xlu0 %120
    %v123 = vlaneseq
    %v124 = vshrl.u32 %v123, 7
    %v125 = vsub.s32 0, %v124
    %v126 = vrot.slane %v82, %v125
    %v128 = vmul.f32 %v72, %v126
    %v129 = vmul.f32 %v73, %v126
    %v130 = vmul.f32 %v74, %v126
    %v131 = vmul.f32 %v75, %v126
    %v132 = vmul.f32 %v76, %v126
    %v133 = vmul.f32 %v77, %v126
    %v134 = vmul.f32 %v78, %v126
    %v135 = vmul.f32 %v79, %v126
    %v136 = vsel %vm97, %v128, 0.0
    %137 = vadd.xlane.f32.xlu0 %v136
    %v138 = vpop.xlane.xlu0 %137
    %v139 = vsel %vm97, %v129, 0.0
    %140 = vadd.xlane.f32.xlu0 %v139
    %v141 = vpop.xlane.xlu0 %140
    %v142 = vsel %vm97, %v130, 0.0
    %143 = vadd.xlane.f32.xlu0 %v142
    %v144 = vpop.xlane.xlu0 %143
    %v145 = vsel %vm97, %v131, 0.0
    %146 = vadd.xlane.f32.xlu0 %v145
    %v147 = vpop.xlane.xlu0 %146
    %v148 = vsel %vm97, %v132, 0.0
    %149 = vadd.xlane.f32.xlu0 %v148
    %v150 = vpop.xlane.xlu0 %149
    %v151 = vsel %vm97, %v133, 0.0
    %152 = vadd.xlane.f32.xlu0 %v151
    %v153 = vpop.xlane.xlu0 %152
    %v154 = vsel %vm97, %v134, 0.0
    %155 = vadd.xlane.f32.xlu0 %v154
    %v156 = vpop.xlane.xlu0 %155
    %v157 = vsel %vm97, %v135, 0.0
    %158 = vadd.xlane.f32.xlu0 %v157
    %v159 = vpop.xlane.xlu0 %158
    %v160 = vadd.f32 %v100, %v138
    %v161 = vadd.f32 %v103, %v141
    %v162 = vadd.f32 %v106, %v144
    %v163 = vadd.f32 %v109, %v147
    %v164 = vadd.f32 %v112, %v150
    %v165 = vadd.f32 %v115, %v153
    %v166 = vadd.f32 %v118, %v156
    %v167 = vadd.f32 %v121, %v159
    %v168 = vstv %s80
    %v169 = vadd.f32 %v160, %v168
    %v170 = vadd.f32 %v161, %v168
    %v171 = vadd.f32 %v162, %v168
    %v172 = vadd.f32 %v163, %v168
    %v173 = vadd.f32 %v164, %v168
    %v174 = vadd.f32 %v165, %v168
    %v175 = vadd.f32 %v166, %v168
    %v176 = vadd.f32 %v167, %v168
    %v177 = vld [vmem:[%s10] sm:$0x1]
    %v179 = vlaneseq
    %v180 = vshrl.u32 %v179, 7
    %v181 = vsub.s32 0, %v180
    %v182 = vrot.slane %v177, %v181
    %v184 = vld [vmem:[%s7] sm:$0xff]
    %v185 = vld [vmem:[%s7 + $0x8] sm:$0xff]
    %v186 = vld [vmem:[%s7 + $0x10] sm:$0xff]
    %v187 = vld [vmem:[%s7 + $0x18] sm:$0xff]
    %v188 = vld [vmem:[%s7 + $0x20] sm:$0xff]
    %v189 = vld [vmem:[%s7 + $0x28] sm:$0xff]
    %v190 = vld [vmem:[%s7 + $0x30] sm:$0xff]
    %v191 = vld [vmem:[%s7 + $0x38] sm:$0xff]
    %v192 = vld [vmem:[%s7 + $0x40] sm:$0xff]
    %v193 = vld [vmem:[%s7 + $0x48] sm:$0xff]
    %v194 = vld [vmem:[%s7 + $0x50] sm:$0xff]
    %v195 = vld [vmem:[%s7 + $0x58] sm:$0xff]
    %v196 = vld [vmem:[%s7 + $0x60] sm:$0xff]
    %v197 = vld [vmem:[%s7 + $0x68] sm:$0xff]
    %v198 = vld [vmem:[%s7 + $0x70] sm:$0xff]
    %v199 = vld [vmem:[%s7 + $0x78] sm:$0xff]
    %v200 = vld [vmem:[%s8] sm:$0xff]
    %v201 = vld [vmem:[%s8 + $0x8] sm:$0xff]
    %v202 = vld [vmem:[%s8 + $0x10] sm:$0xff]
    %v203 = vld [vmem:[%s8 + $0x18] sm:$0xff]
    %v204 = vld [vmem:[%s8 + $0x20] sm:$0xff]
    %v205 = vld [vmem:[%s8 + $0x28] sm:$0xff]
    %v206 = vld [vmem:[%s8 + $0x30] sm:$0xff]
    %v207 = vld [vmem:[%s8 + $0x38] sm:$0xff]
    %v208 = vld [vmem:[%s8 + $0x40] sm:$0xff]
    %v209 = vld [vmem:[%s8 + $0x48] sm:$0xff]
    %v210 = vld [vmem:[%s8 + $0x50] sm:$0xff]
    %v211 = vld [vmem:[%s8 + $0x58] sm:$0xff]
    %v212 = vld [vmem:[%s8 + $0x60] sm:$0xff]
    %v213 = vld [vmem:[%s8 + $0x68] sm:$0xff]
    %v214 = vld [vmem:[%s9] sm:$0x1]
    %v216 = vlaneseq
    %v217 = vshrl.u32 %v216, 7
    %v218 = vsub.s32 0, %v217
    %v219 = vrot.slane %v214, %v218
    %v221 = vld [vmem:[%s13] sm:$0xff]
    %v222 = vld [vmem:[%s13 + $0x8] sm:$0xff]
    %v223 = vld [vmem:[%s13 + $0x10] sm:$0xff]
    %v224 = vld [vmem:[%s13 + $0x18] sm:$0xff]
    %v225 = vld [vmem:[%s14] sm:$0x1]
    %v227 = vlaneseq
    %v228 = vshrl.u32 %v227, 7
    %v229 = vsub.s32 0, %v228
    %v230 = vrot.slane %v225, %v229
    %v232 = vlaneseq
    %v233 = vand.u32 %v232, 127
    %v234 = vcvt.s32.f32 %v233
    %vm235 = vcmp.lt.s32.totalorder %v233, 20
    %236 = vst [vmem:[%s15] sm:$0xff] 0.0
    %v237 = vld [vmem:[%s5] sm:$0xff]
    %v238 = vld [vmem:[%s6] sm:$0xff]
    %v239 = vld [vmem:[%s2] sm:$0xff]
    %v240 = vmul.f32 %v237, %v182
    %v241 = vsel %vm97, %v240, 0.0
    %242 = vadd.xlane.f32.xlu0 %v241
    %v243 = vpop.xlane.xlu0 %242
    %v244 = vadd.f32 %v169, %v243
    %v245 = vadd.f32 %v170, %v243
    %v246 = vadd.f32 %v171, %v243
    %v247 = vadd.f32 %v172, %v243
    %v248 = vadd.f32 %v173, %v243
    %v249 = vadd.f32 %v174, %v243
    %v250 = vadd.f32 %v175, %v243
    %v251 = vadd.f32 %v176, %v243
    %v252 = vmax.f32 %v244, 0.0
    %v253 = vmax.f32 %v245, 0.0
    %v254 = vmax.f32 %v246, 0.0
    %v255 = vmax.f32 %v247, 0.0
    %v256 = vmax.f32 %v248, 0.0
    %v257 = vmax.f32 %v249, 0.0
    %v258 = vmax.f32 %v250, 0.0
    %v259 = vmax.f32 %v251, 0.0
    %v260 = vmax.f32 %v252, %v256
    %v261 = vmax.f32 %v253, %v257
    %v262 = vmax.f32 %v254, %v258
    %v263 = vmax.f32 %v255, %v259
    %v264 = vmax.f32 %v260, %v261
    %v265 = vmax.f32 %v262, %v263
    %v266 = vmax.f32 %v264, %v265
    %v267 = vsub.f32 %v252, %v266
    %v268 = vsub.f32 %v253, %v266
    %v269 = vsub.f32 %v254, %v266
    %v270 = vsub.f32 %v255, %v266
    %v271 = vsub.f32 %v256, %v266
    %v272 = vsub.f32 %v257, %v266
    %v273 = vsub.f32 %v258, %v266
    %v274 = vsub.f32 %v259, %v266
    %v275 = vmul.f32 %v267, 1.442695
    %v276 = vpow.pop %v275
    %v277 = vmul.f32 %v268, 1.442695
    %v278 = vpow.pop %v277
    %v279 = vmul.f32 %v269, 1.442695
    %v280 = vpow.pop %v279
    %v281 = vmul.f32 %v270, 1.442695
    %v282 = vpow.pop %v281
    %v283 = vmul.f32 %v271, 1.442695
    %v284 = vpow.pop %v283
    %v285 = vmul.f32 %v272, 1.442695
    %v286 = vpow.pop %v285
    %v287 = vmul.f32 %v273, 1.442695
    %v288 = vpow.pop %v287
    %v289 = vmul.f32 %v274, 1.442695
    %v290 = vpow.pop %v289
    %v291 = vadd.f32 %v276, %v278
    %v292 = vadd.f32 %v291, %v280
    %v293 = vadd.f32 %v292, %v282
    %v294 = vadd.f32 %v293, %v284
    %v295 = vadd.f32 %v294, %v286
    %v296 = vadd.f32 %v295, %v288
    %v297 = vadd.f32 %v296, %v290
    %v298 = vrcp.pop %v297
    %v299 = vmul.f32 %v276, %v298
    %v300 = vmul.f32 %v278, %v298
    %v301 = vmul.f32 %v280, %v298
    %v302 = vmul.f32 %v282, %v298
    %v303 = vmul.f32 %v284, %v298
    %v304 = vmul.f32 %v286, %v298
    %v305 = vmul.f32 %v288, %v298
    %v306 = vmul.f32 %v290, %v298
    %v307 = vmul.f32 %v299, %v64
    %v308 = vmul.f32 %v300, %v65
    %v309 = vmul.f32 %v301, %v66
    %v310 = vmul.f32 %v302, %v67
    %v311 = vmul.f32 %v303, %v68
    %v312 = vmul.f32 %v304, %v69
    %v313 = vmul.f32 %v305, %v70
    %v314 = vmul.f32 %v306, %v71
    %v315 = vsel %vm97, %v307, 0.0
    %v316 = vsel %vm97, %v308, 0.0
    %v317 = vadd.f32 %v315, %v316
    %v318 = vsel %vm97, %v309, 0.0
    %v319 = vadd.f32 %v317, %v318
    %v320 = vsel %vm97, %v310, 0.0
    %v321 = vadd.f32 %v319, %v320
    %v322 = vsel %vm97, %v311, 0.0
    %v323 = vadd.f32 %v321, %v322
    %v324 = vsel %vm97, %v312, 0.0
    %v325 = vadd.f32 %v323, %v324
    %v326 = vsel %vm97, %v313, 0.0
    %v327 = vadd.f32 %v325, %v326
    %v328 = vsel %vm97, %v314, 0.0
    %v329 = vadd.f32 %v327, %v328
    %v330 = vmul.f32 %v299, %v72
    %v331 = vmul.f32 %v300, %v73
    %v332 = vmul.f32 %v301, %v74
    %v333 = vmul.f32 %v302, %v75
    %v334 = vmul.f32 %v303, %v76
    %v335 = vmul.f32 %v304, %v77
    %v336 = vmul.f32 %v305, %v78
    %v337 = vmul.f32 %v306, %v79
    %v338 = vsel %vm97, %v330, 0.0
    %v339 = vsel %vm97, %v331, 0.0
    %v340 = vadd.f32 %v338, %v339
    %v341 = vsel %vm97, %v332, 0.0
    %v342 = vadd.f32 %v340, %v341
    %v343 = vsel %vm97, %v333, 0.0
    %v344 = vadd.f32 %v342, %v343
    %v345 = vsel %vm97, %v334, 0.0
    %v346 = vadd.f32 %v344, %v345
    %v347 = vsel %vm97, %v335, 0.0
    %v348 = vadd.f32 %v346, %v347
    %v349 = vsel %vm97, %v336, 0.0
    %v350 = vadd.f32 %v348, %v349
    %v351 = vsel %vm97, %v337, 0.0
    %v352 = vadd.f32 %v350, %v351
    %353 = vmatprep.subr.mxu0 0.0
    %354 = vmatpush1.msra.mxu0 %v199
    %355 = vmatprep.subr.mxu0 0.0
    %356 = vmatpush1.msra.mxu0 %v198
    %357 = vmatprep.subr.mxu0 0.0
    %358 = vmatpush1.msra.mxu0 %v197
    %359 = vmatprep.subr.mxu0 0.0
    %360 = vmatpush1.msra.mxu0 %v196
    %361 = vmatprep.subr.mxu0 0.0
    %362 = vmatpush1.msra.mxu0 %v195
    %363 = vmatprep.subr.mxu0 0.0
    %364 = vmatpush1.msra.mxu0 %v194
    %365 = vmatprep.subr.mxu0 0.0
    %366 = vmatpush1.msra.mxu0 %v193
    %367 = vmatprep.subr.mxu0 0.0
    %368 = vmatpush1.msra.mxu0 %v192
    %369 = vmatprep.subr.mxu0 0.0
    %370 = vmatpush1.msra.mxu0 %v191
    %371 = vmatprep.subr.mxu0 0.0
    %372 = vmatpush1.msra.mxu0 %v190
    %373 = vmatprep.subr.mxu0 0.0
    %374 = vmatpush1.msra.mxu0 %v189
    %375 = vmatprep.subr.mxu0 0.0
    %376 = vmatpush1.msra.mxu0 %v188
    %377 = vmatprep.subr.mxu0 0.0
    %378 = vmatpush1.msra.mxu0 %v187
    %379 = vmatprep.subr.mxu0 0.0
    %380 = vmatpush1.msra.mxu0 %v186
    %381 = vmatprep.subr.mxu0 0.0
    %382 = vmatpush1.msra.mxu0 %v185
    %383 = vmatprep.subr.mxu0 0.0
    %384 = vmatpush1.msra.mxu0 %v184
    %385 = vmatprep.subr.mxu0 0.0
    %386 = vmatpush2.msra.mxu0 0.0
    %387 = vmatprep.subr.mxu0 0.0
    %388 = vmatpush2.msra.mxu0 0.0
    %389 = vmatprep.subr.mxu0 0.0
    %390 = vmatpush2.msra.mxu0 0.0
    %391 = vmatprep.subr.mxu0 0.0
    %392 = vmatpush2.msra.mxu0 0.0
    %393 = vmatprep.subr.mxu0 0.0
    %394 = vmatpush2.msra.mxu0 0.0
    %395 = vmatprep.subr.mxu0 0.0
    %396 = vmatpush2.msra.mxu0 0.0
    %397 = vmatprep.subr.mxu0 0.0
    %398 = vmatpush2.msra.mxu0 0.0
    %399 = vmatprep.subr.mxu0 0.0
    %400 = vmatpush2.msra.mxu0 0.0
    %401 = vmatprep.subr.mxu0 0.0
    %402 = vmatpush2.msra.mxu0 0.0
    %403 = vmatprep.subr.mxu0 0.0
    %404 = vmatpush2.msra.mxu0 0.0
    %405 = vmatprep.subr.mxu0 0.0
    %406 = vmatpush2.msra.mxu0 0.0
    %407 = vmatprep.subr.mxu0 0.0
    %408 = vmatpush2.msra.mxu0 0.0
    %409 = vmatprep.subr.mxu0 0.0
    %410 = vmatpush2.msra.mxu0 0.0
    %411 = vmatprep.subr.mxu0 0.0
    %412 = vmatpush2.msra.mxu0 0.0
    %413 = vmatprep.subr.mxu0 0.0
    %414 = vmatpush2.msra.mxu0 0.0
    %415 = vmatprep.subr.mxu0 0.0
    %416 = vmatpush2.msra.mxu0 0.0
    %417 = vmatprep.mubr.f32.mxu0 0.0
    %418 = vmatmul.mubr.f32.gmra.mxu0 %v239
    %v419 = vpop.f32.mrf.mxu0
    %v420 = vadd.f32 0.0, %v419
    %v421 = vpop.f32.mrf.mxu0
    %422 = vdwg.mxu0
    %424 = vrot.lane.b32.xlu0 %v352, 32
    %v425 = vpop.permute.xlu0 %424
    %428 = vrot.lane.b32.xlu0 %v420, 64
    %v429 = vpop.permute.xlu0 %428
    %432 = vrot.lane.b32.xlu0 %v237, 80
    %v433 = vpop.permute.xlu0 %432
    %v435 = vsel %vm97, %v329, %v425
    %vm436 = vcmask 523264
    %v437 = vsel %vm436, %v435, %v429
    %vm438 = vcmask 654336
    %v439 = vsel %vm438, %v437, %v433
    %vm440 = vcmask 916480
    %v442 = vsel %vm440, %v439, 0
    %444 = vmatprep.subr.mxu0 0.0
    %445 = vmatpush1.msra.mxu0 0.0
    %446 = vmatprep.subr.mxu0 0.0
    %447 = vmatpush1.msra.mxu0 0.0
    %448 = vmatprep.subr.mxu0 0.0
    %449 = vmatpush1.msra.mxu0 %v213
    %450 = vmatprep.subr.mxu0 0.0
    %451 = vmatpush1.msra.mxu0 %v212
    %452 = vmatprep.subr.mxu0 0.0
    %453 = vmatpush1.msra.mxu0 %v211
    %454 = vmatprep.subr.mxu0 0.0
    %455 = vmatpush1.msra.mxu0 %v210
    %456 = vmatprep.subr.mxu0 0.0
    %457 = vmatpush1.msra.mxu0 %v209
    %458 = vmatprep.subr.mxu0 0.0
    %459 = vmatpush1.msra.mxu0 %v208
    %460 = vmatprep.subr.mxu0 0.0
    %461 = vmatpush1.msra.mxu0 %v207
    %462 = vmatprep.subr.mxu0 0.0
    %463 = vmatpush1.msra.mxu0 %v206
    %464 = vmatprep.subr.mxu0 0.0
    %465 = vmatpush1.msra.mxu0 %v205
    %466 = vmatprep.subr.mxu0 0.0
    %467 = vmatpush1.msra.mxu0 %v204
    %468 = vmatprep.subr.mxu0 0.0
    %469 = vmatpush1.msra.mxu0 %v203
    %470 = vmatprep.subr.mxu0 0.0
    %471 = vmatpush1.msra.mxu0 %v202
    %472 = vmatprep.subr.mxu0 0.0
    %473 = vmatpush1.msra.mxu0 %v201
    %474 = vmatprep.subr.mxu0 0.0
    %475 = vmatpush1.msra.mxu0 %v200
    %476 = vmatprep.subr.mxu0 0.0
    %477 = vmatpush2.msra.mxu0 0.0
    %478 = vmatprep.subr.mxu0 0.0
    %479 = vmatpush2.msra.mxu0 0.0
    %480 = vmatprep.subr.mxu0 0.0
    %481 = vmatpush2.msra.mxu0 0.0
    %482 = vmatprep.subr.mxu0 0.0
    %483 = vmatpush2.msra.mxu0 0.0
    %484 = vmatprep.subr.mxu0 0.0
    %485 = vmatpush2.msra.mxu0 0.0
    %486 = vmatprep.subr.mxu0 0.0
    %487 = vmatpush2.msra.mxu0 0.0
    %488 = vmatprep.subr.mxu0 0.0
    %489 = vmatpush2.msra.mxu0 0.0
    %490 = vmatprep.subr.mxu0 0.0
    %491 = vmatpush2.msra.mxu0 0.0
    %492 = vmatprep.subr.mxu0 0.0
    %493 = vmatpush2.msra.mxu0 0.0
    %494 = vmatprep.subr.mxu0 0.0
    %495 = vmatpush2.msra.mxu0 0.0
    %496 = vmatprep.subr.mxu0 0.0
    %497 = vmatpush2.msra.mxu0 0.0
    %498 = vmatprep.subr.mxu0 0.0
    %499 = vmatpush2.msra.mxu0 0.0
    %500 = vmatprep.subr.mxu0 0.0
    %501 = vmatpush2.msra.mxu0 0.0
    %502 = vmatprep.subr.mxu0 0.0
    %503 = vmatpush2.msra.mxu0 0.0
    %504 = vmatprep.subr.mxu0 0.0
    %505 = vmatpush2.msra.mxu0 0.0
    %506 = vmatprep.subr.mxu0 0.0
    %507 = vmatpush2.msra.mxu0 0.0
    %508 = vmatprep.mubr.f32.mxu0 0.0
    %509 = vmatmul.mubr.f32.gmra.mxu0 %v442
    %v510 = vpop.f32.mrf.mxu0
    %v511 = vadd.f32 %v219, %v510
    %v512 = vpop.f32.mrf.mxu0
    %513 = vdwg.mxu0
    %v514 = vxor.u32 %v511, 2147483648
    %v515 = vmul.f32 %v514, 1.442695
    %v516 = vpow.pop %v515
    %v517 = vadd.f32 %v516, 1.0
    %v518 = vrcp.pop %v517
    %v519 = vmul.f32 1.0, %v518
    %v520 = vtanh.pop %v511
    %522 = vrot.lane.b32.xlu0 %v238, 32
    %v523 = vpop.permute.xlu0 %522
    %v525 = vmul.f32 %v519, %v523
    %527 = vrot.lane.b32.xlu0 %v520, 64
    %v528 = vpop.permute.xlu0 %527
    %v530 = vmul.f32 %v519, %v528
    %532 = vrot.lane.b32.xlu0 %v530, 32
    %v533 = vpop.permute.xlu0 %532
    %v535 = vadd.f32 %v525, %v533
    %v536 = vtanh.pop %v535
    %538 = vrot.lane.b32.xlu0 %v536, 64
    %v539 = vpop.permute.xlu0 %538
    %v541 = vmul.f32 %v519, %v539
    %543 = vrot.lane.b32.xlu0 %v541, 32
    %v544 = vpop.permute.xlu0 %543
    %v545 = vsel %vm97, %v544, 0
    %547 = vmatprep.subr.mxu0 0.0
    %548 = vmatpush1.msra.mxu0 0.0
    %549 = vmatprep.subr.mxu0 0.0
    %550 = vmatpush1.msra.mxu0 0.0
    %551 = vmatprep.subr.mxu0 0.0
    %552 = vmatpush1.msra.mxu0 0.0
    %553 = vmatprep.subr.mxu0 0.0
    %554 = vmatpush1.msra.mxu0 0.0
    %555 = vmatprep.subr.mxu0 0.0
    %556 = vmatpush1.msra.mxu0 0.0
    %557 = vmatprep.subr.mxu0 0.0
    %558 = vmatpush1.msra.mxu0 0.0
    %559 = vmatprep.subr.mxu0 0.0
    %560 = vmatpush1.msra.mxu0 0.0
    %561 = vmatprep.subr.mxu0 0.0
    %562 = vmatpush1.msra.mxu0 0.0
    %563 = vmatprep.subr.mxu0 0.0
    %564 = vmatpush1.msra.mxu0 0.0
    %565 = vmatprep.subr.mxu0 0.0
    %566 = vmatpush1.msra.mxu0 0.0
    %567 = vmatprep.subr.mxu0 0.0
    %568 = vmatpush1.msra.mxu0 0.0
    %569 = vmatprep.subr.mxu0 0.0
    %570 = vmatpush1.msra.mxu0 0.0
    %571 = vmatprep.subr.mxu0 0.0
    %572 = vmatpush1.msra.mxu0 %v224
    %573 = vmatprep.subr.mxu0 0.0
    %574 = vmatpush1.msra.mxu0 %v223
    %575 = vmatprep.subr.mxu0 0.0
    %576 = vmatpush1.msra.mxu0 %v222
    %577 = vmatprep.subr.mxu0 0.0
    %578 = vmatpush1.msra.mxu0 %v221
    %579 = vmatprep.subr.mxu0 0.0
    %580 = vmatpush2.msra.mxu0 0.0
    %581 = vmatprep.subr.mxu0 0.0
    %582 = vmatpush2.msra.mxu0 0.0
    %583 = vmatprep.subr.mxu0 0.0
    %584 = vmatpush2.msra.mxu0 0.0
    %585 = vmatprep.subr.mxu0 0.0
    %586 = vmatpush2.msra.mxu0 0.0
    %587 = vmatprep.subr.mxu0 0.0
    %588 = vmatpush2.msra.mxu0 0.0
    %589 = vmatprep.subr.mxu0 0.0
    %590 = vmatpush2.msra.mxu0 0.0
    %591 = vmatprep.subr.mxu0 0.0
    %592 = vmatpush2.msra.mxu0 0.0
    %593 = vmatprep.subr.mxu0 0.0
    %594 = vmatpush2.msra.mxu0 0.0
    %595 = vmatprep.subr.mxu0 0.0
    %596 = vmatpush2.msra.mxu0 0.0
    %597 = vmatprep.subr.mxu0 0.0
    %598 = vmatpush2.msra.mxu0 0.0
    %599 = vmatprep.subr.mxu0 0.0
    %600 = vmatpush2.msra.mxu0 0.0
    %601 = vmatprep.subr.mxu0 0.0
    %602 = vmatpush2.msra.mxu0 0.0
    %603 = vmatprep.subr.mxu0 0.0
    %604 = vmatpush2.msra.mxu0 0.0
    %605 = vmatprep.subr.mxu0 0.0
    %606 = vmatpush2.msra.mxu0 0.0
    %607 = vmatprep.subr.mxu0 0.0
    %608 = vmatpush2.msra.mxu0 0.0
    %609 = vmatprep.subr.mxu0 0.0
    %610 = vmatpush2.msra.mxu0 0.0
    %611 = vmatprep.mubr.f32.mxu0 0.0
    %612 = vmatmul.mubr.f32.gmra.mxu0 %v545
    %v613 = vpop.f32.mrf.mxu0
    %v614 = vadd.f32 %v230, %v613
    %v615 = vpop.f32.mrf.mxu0
    %616 = vdwg.mxu0
    %s617 = scalar_lea.vmem %s15, 8
    %618 = vst [vmem:[%s617] sm:$0xff] %v614
    %v619 = vsel %vm235, %v614, -1e+30
    %620 = vmax.xlane.f32.xlu0 %v619
    %v621 = vpop.xlane.xlu0 %620
    %vm622 = vcmp.eq.f32.partialorder %v619, %v621
    %vm623 = vmand %vm622, %vm235
    %v624 = vsel %vm623, %v234, 128.0
    %625 = vmin.xlane.f32.xlu0 %v624
    %v626 = vpop.xlane.xlu0 %625
    %vm627 = vcmp.eq.f32.partialorder %v234, %v626
    %v628 = vsel %vm627, 1, 0
    %v629 = vcvt.s32.f32 %v628
    %s630 = sld [smem:[#allocation3 + $0x1]]
    %p631 = scmp.gt.s32.totalorder %s630, 0
    %s632 = scalar_select %p631, 1, 0
    %s633 = scvt.s32.f32 %s632
    %s634 = scalar_lea.vmem %s2, 8
    %v635 = vld [vmem:[%s634] sm:$0xff]
    %v636 = vstv %s633
    %v637 = vmul.f32 %v636, %v635
    %s638 = ssub.f32 1.0, %s633
    %v639 = vstv %s638
    %v640 = vmul.f32 %v639, %v629
    %v641 = vadd.f32 %v637, %v640
    %642 = vrot.lane.b32.xlu0 %v182, 96
    %v643 = vpop.permute.xlu0 %642
    %v645 = vmul.f32 %v541, %v643
    %647 = vrot.lane.b32.xlu0 %v645, 32
    %v648 = vpop.permute.xlu0 %647
    %v650 = vsel %vm97, %v648, 0.0
    %651 = vadd.xlane.f32.xlu0 %v650
    %v652 = vpop.xlane.xlu0 %651
    %v653 = vadd.f32 %v169, %v652
    %v654 = vadd.f32 %v170, %v652
    %v655 = vadd.f32 %v171, %v652
    %v656 = vadd.f32 %v172, %v652
    %v657 = vadd.f32 %v173, %v652
    %v658 = vadd.f32 %v174, %v652
    %v659 = vadd.f32 %v175, %v652
    %v660 = vadd.f32 %v176, %v652
    %v661 = vmax.f32 %v653, 0.0
    %v662 = vmax.f32 %v654, 0.0
    %v663 = vmax.f32 %v655, 0.0
    %v664 = vmax.f32 %v656, 0.0
    %v665 = vmax.f32 %v657, 0.0
    %v666 = vmax.f32 %v658, 0.0
    %v667 = vmax.f32 %v659, 0.0
    %v668 = vmax.f32 %v660, 0.0
    %v669 = vmax.f32 %v661, %v665
    %v670 = vmax.f32 %v662, %v666
    %v671 = vmax.f32 %v663, %v667
    %v672 = vmax.f32 %v664, %v668
    %v673 = vmax.f32 %v669, %v670
    %v674 = vmax.f32 %v671, %v672
    %v675 = vmax.f32 %v673, %v674
    %v676 = vsub.f32 %v661, %v675
    %v677 = vsub.f32 %v662, %v675
    %v678 = vsub.f32 %v663, %v675
    %v679 = vsub.f32 %v664, %v675
    %v680 = vsub.f32 %v665, %v675
    %v681 = vsub.f32 %v666, %v675
    %v682 = vsub.f32 %v667, %v675
    %v683 = vsub.f32 %v668, %v675
    %v684 = vmul.f32 %v676, 1.442695
    %v685 = vpow.pop %v684
    %v686 = vmul.f32 %v677, 1.442695
    %v687 = vpow.pop %v686
    %v688 = vmul.f32 %v678, 1.442695
    %v689 = vpow.pop %v688
    %v690 = vmul.f32 %v679, 1.442695
    %v691 = vpow.pop %v690
    %v692 = vmul.f32 %v680, 1.442695
    %v693 = vpow.pop %v692
    %v694 = vmul.f32 %v681, 1.442695
    %v695 = vpow.pop %v694
    %v696 = vmul.f32 %v682, 1.442695
    %v697 = vpow.pop %v696
    %v698 = vmul.f32 %v683, 1.442695
    %v699 = vpow.pop %v698
    %v700 = vadd.f32 %v685, %v687
    %v701 = vadd.f32 %v700, %v689
    %v702 = vadd.f32 %v701, %v691
    %v703 = vadd.f32 %v702, %v693
    %v704 = vadd.f32 %v703, %v695
    %v705 = vadd.f32 %v704, %v697
    %v706 = vadd.f32 %v705, %v699
    %v707 = vrcp.pop %v706
    %v708 = vmul.f32 %v685, %v707
    %v709 = vmul.f32 %v687, %v707
    %v710 = vmul.f32 %v689, %v707
    %v711 = vmul.f32 %v691, %v707
    %v712 = vmul.f32 %v693, %v707
    %v713 = vmul.f32 %v695, %v707
    %v714 = vmul.f32 %v697, %v707
    %v715 = vmul.f32 %v699, %v707
    %v716 = vmul.f32 %v708, %v64
    %v717 = vmul.f32 %v709, %v65
    %v718 = vmul.f32 %v710, %v66
    %v719 = vmul.f32 %v711, %v67
    %v720 = vmul.f32 %v712, %v68
    %v721 = vmul.f32 %v713, %v69
    %v722 = vmul.f32 %v714, %v70
    %v723 = vmul.f32 %v715, %v71
    %v724 = vsel %vm97, %v716, 0.0
    %v725 = vsel %vm97, %v717, 0.0
    %v726 = vadd.f32 %v724, %v725
    %v727 = vsel %vm97, %v718, 0.0
    %v728 = vadd.f32 %v726, %v727
    %v729 = vsel %vm97, %v719, 0.0
    %v730 = vadd.f32 %v728, %v729
    %v731 = vsel %vm97, %v720, 0.0
    %v732 = vadd.f32 %v730, %v731
    %v733 = vsel %vm97, %v721, 0.0
    %v734 = vadd.f32 %v732, %v733
    %v735 = vsel %vm97, %v722, 0.0
    %v736 = vadd.f32 %v734, %v735
    %v737 = vsel %vm97, %v723, 0.0
    %v738 = vadd.f32 %v736, %v737
    %v739 = vmul.f32 %v708, %v72
    %v740 = vmul.f32 %v709, %v73
    %v741 = vmul.f32 %v710, %v74
    %v742 = vmul.f32 %v711, %v75
    %v743 = vmul.f32 %v712, %v76
    %v744 = vmul.f32 %v713, %v77
    %v745 = vmul.f32 %v714, %v78
    %v746 = vmul.f32 %v715, %v79
    %v747 = vsel %vm97, %v739, 0.0
    %v748 = vsel %vm97, %v740, 0.0
    %v749 = vadd.f32 %v747, %v748
    %v750 = vsel %vm97, %v741, 0.0
    %v751 = vadd.f32 %v749, %v750
    %v752 = vsel %vm97, %v742, 0.0
    %v753 = vadd.f32 %v751, %v752
    %v754 = vsel %vm97, %v743, 0.0
    %v755 = vadd.f32 %v753, %v754
    %v756 = vsel %vm97, %v744, 0.0
    %v757 = vadd.f32 %v755, %v756
    %v758 = vsel %vm97, %v745, 0.0
    %v759 = vadd.f32 %v757, %v758
    %v760 = vsel %vm97, %v746, 0.0
    %v761 = vadd.f32 %v759, %v760
    %762 = vmatprep.subr.mxu0 0.0
    %763 = vmatpush1.msra.mxu0 %v199
    %764 = vmatprep.subr.mxu0 0.0
    %765 = vmatpush1.msra.mxu0 %v198
    %766 = vmatprep.subr.mxu0 0.0
    %767 = vmatpush1.msra.mxu0 %v197
    %768 = vmatprep.subr.mxu0 0.0
    %769 = vmatpush1.msra.mxu0 %v196
    %770 = vmatprep.subr.mxu0 0.0
    %771 = vmatpush1.msra.mxu0 %v195
    %772 = vmatprep.subr.mxu0 0.0
    %773 = vmatpush1.msra.mxu0 %v194
    %774 = vmatprep.subr.mxu0 0.0
    %775 = vmatpush1.msra.mxu0 %v193
    %776 = vmatprep.subr.mxu0 0.0
    %777 = vmatpush1.msra.mxu0 %v192
    %778 = vmatprep.subr.mxu0 0.0
    %779 = vmatpush1.msra.mxu0 %v191
    %780 = vmatprep.subr.mxu0 0.0
    %781 = vmatpush1.msra.mxu0 %v190
    %782 = vmatprep.subr.mxu0 0.0
    %783 = vmatpush1.msra.mxu0 %v189
    %784 = vmatprep.subr.mxu0 0.0
    %785 = vmatpush1.msra.mxu0 %v188
    %786 = vmatprep.subr.mxu0 0.0
    %787 = vmatpush1.msra.mxu0 %v187
    %788 = vmatprep.subr.mxu0 0.0
    %789 = vmatpush1.msra.mxu0 %v186
    %790 = vmatprep.subr.mxu0 0.0
    %791 = vmatpush1.msra.mxu0 %v185
    %792 = vmatprep.subr.mxu0 0.0
    %793 = vmatpush1.msra.mxu0 %v184
    %794 = vmatprep.subr.mxu0 0.0
    %795 = vmatpush2.msra.mxu0 0.0
    %796 = vmatprep.subr.mxu0 0.0
    %797 = vmatpush2.msra.mxu0 0.0
    %798 = vmatprep.subr.mxu0 0.0
    %799 = vmatpush2.msra.mxu0 0.0
    %800 = vmatprep.subr.mxu0 0.0
    %801 = vmatpush2.msra.mxu0 0.0
    %802 = vmatprep.subr.mxu0 0.0
    %803 = vmatpush2.msra.mxu0 0.0
    %804 = vmatprep.subr.mxu0 0.0
    %805 = vmatpush2.msra.mxu0 0.0
    %806 = vmatprep.subr.mxu0 0.0
    %807 = vmatpush2.msra.mxu0 0.0
    %808 = vmatprep.subr.mxu0 0.0
    %809 = vmatpush2.msra.mxu0 0.0
    %810 = vmatprep.subr.mxu0 0.0
    %811 = vmatpush2.msra.mxu0 0.0
    %812 = vmatprep.subr.mxu0 0.0
    %813 = vmatpush2.msra.mxu0 0.0
    %814 = vmatprep.subr.mxu0 0.0
    %815 = vmatpush2.msra.mxu0 0.0
    %816 = vmatprep.subr.mxu0 0.0
    %817 = vmatpush2.msra.mxu0 0.0
    %818 = vmatprep.subr.mxu0 0.0
    %819 = vmatpush2.msra.mxu0 0.0
    %820 = vmatprep.subr.mxu0 0.0
    %821 = vmatpush2.msra.mxu0 0.0
    %822 = vmatprep.subr.mxu0 0.0
    %823 = vmatpush2.msra.mxu0 0.0
    %824 = vmatprep.subr.mxu0 0.0
    %825 = vmatpush2.msra.mxu0 0.0
    %826 = vmatprep.mubr.f32.mxu0 0.0
    %827 = vmatmul.mubr.f32.gmra.mxu0 %v641
    %v828 = vpop.f32.mrf.mxu0
    %v829 = vadd.f32 0.0, %v828
    %v830 = vpop.f32.mrf.mxu0
    %831 = vdwg.mxu0
    %833 = vrot.lane.b32.xlu0 %v761, 32
    %v834 = vpop.permute.xlu0 %833
    %837 = vrot.lane.b32.xlu0 %v829, 64
    %v838 = vpop.permute.xlu0 %837
    %840 = vrot.lane.b32.xlu0 %v541, 112
    %v841 = vpop.permute.xlu0 %840
    %v843 = vsel %vm97, %v738, %v834
    %v844 = vsel %vm436, %v843, %v838
    %v845 = vsel %vm438, %v844, %v841
    %v847 = vsel %vm440, %v845, 0
    %849 = vmatprep.subr.mxu0 0.0
    %850 = vmatpush1.msra.mxu0 0.0
    %851 = vmatprep.subr.mxu0 0.0
    %852 = vmatpush1.msra.mxu0 0.0
    %853 = vmatprep.subr.mxu0 0.0
    %854 = vmatpush1.msra.mxu0 %v213
    %855 = vmatprep.subr.mxu0 0.0
    %856 = vmatpush1.msra.mxu0 %v212
    %857 = vmatprep.subr.mxu0 0.0
    %858 = vmatpush1.msra.mxu0 %v211
    %859 = vmatprep.subr.mxu0 0.0
    %860 = vmatpush1.msra.mxu0 %v210
    %861 = vmatprep.subr.mxu0 0.0
    %862 = vmatpush1.msra.mxu0 %v209
    %863 = vmatprep.subr.mxu0 0.0
    %864 = vmatpush1.msra.mxu0 %v208
    %865 = vmatprep.subr.mxu0 0.0
    %866 = vmatpush1.msra.mxu0 %v207
    %867 = vmatprep.subr.mxu0 0.0
    %868 = vmatpush1.msra.mxu0 %v206
    %869 = vmatprep.subr.mxu0 0.0
    %870 = vmatpush1.msra.mxu0 %v205
    %871 = vmatprep.subr.mxu0 0.0
    %872 = vmatpush1.msra.mxu0 %v204
    %873 = vmatprep.subr.mxu0 0.0
    %874 = vmatpush1.msra.mxu0 %v203
    %875 = vmatprep.subr.mxu0 0.0
    %876 = vmatpush1.msra.mxu0 %v202
    %877 = vmatprep.subr.mxu0 0.0
    %878 = vmatpush1.msra.mxu0 %v201
    %879 = vmatprep.subr.mxu0 0.0
    %880 = vmatpush1.msra.mxu0 %v200
    %881 = vmatprep.subr.mxu0 0.0
    %882 = vmatpush2.msra.mxu0 0.0
    %883 = vmatprep.subr.mxu0 0.0
    %884 = vmatpush2.msra.mxu0 0.0
    %885 = vmatprep.subr.mxu0 0.0
    %886 = vmatpush2.msra.mxu0 0.0
    %887 = vmatprep.subr.mxu0 0.0
    %888 = vmatpush2.msra.mxu0 0.0
    %889 = vmatprep.subr.mxu0 0.0
    %890 = vmatpush2.msra.mxu0 0.0
    %891 = vmatprep.subr.mxu0 0.0
    %892 = vmatpush2.msra.mxu0 0.0
    %893 = vmatprep.subr.mxu0 0.0
    %894 = vmatpush2.msra.mxu0 0.0
    %895 = vmatprep.subr.mxu0 0.0
    %896 = vmatpush2.msra.mxu0 0.0
    %897 = vmatprep.subr.mxu0 0.0
    %898 = vmatpush2.msra.mxu0 0.0
    %899 = vmatprep.subr.mxu0 0.0
    %900 = vmatpush2.msra.mxu0 0.0
    %901 = vmatprep.subr.mxu0 0.0
    %902 = vmatpush2.msra.mxu0 0.0
    %903 = vmatprep.subr.mxu0 0.0
    %904 = vmatpush2.msra.mxu0 0.0
    %905 = vmatprep.subr.mxu0 0.0
    %906 = vmatpush2.msra.mxu0 0.0
    %907 = vmatprep.subr.mxu0 0.0
    %908 = vmatpush2.msra.mxu0 0.0
    %909 = vmatprep.subr.mxu0 0.0
    %910 = vmatpush2.msra.mxu0 0.0
    %911 = vmatprep.subr.mxu0 0.0
    %912 = vmatpush2.msra.mxu0 0.0
    %913 = vmatprep.mubr.f32.mxu0 0.0
    %914 = vmatmul.mubr.f32.gmra.mxu0 %v847
    %v915 = vpop.f32.mrf.mxu0
    %v916 = vadd.f32 %v219, %v915
    %v917 = vpop.f32.mrf.mxu0
    %918 = vdwg.mxu0
    %v919 = vxor.u32 %v916, 2147483648
    %v920 = vmul.f32 %v919, 1.442695
    %v921 = vpow.pop %v920
    %v922 = vadd.f32 %v921, 1.0
    %v923 = vrcp.pop %v922
    %v924 = vmul.f32 1.0, %v923
    %v925 = vtanh.pop %v916
    %v926 = vmul.f32 %v924, %v535
    %928 = vrot.lane.b32.xlu0 %v925, 64
    %v929 = vpop.permute.xlu0 %928
    %v931 = vmul.f32 %v924, %v929
    %933 = vrot.lane.b32.xlu0 %v931, 32
    %v934 = vpop.permute.xlu0 %933
    %v936 = vadd.f32 %v926, %v934
    %v937 = vtanh.pop %v936
    %939 = vrot.lane.b32.xlu0 %v937, 64
    %v940 = vpop.permute.xlu0 %939
    %v942 = vmul.f32 %v924, %v940
    %944 = vrot.lane.b32.xlu0 %v942, 32
    %v945 = vpop.permute.xlu0 %944
    %v946 = vsel %vm97, %v945, 0
    %948 = vmatprep.subr.mxu0 0.0
    %949 = vmatpush1.msra.mxu0 0.0
    %950 = vmatprep.subr.mxu0 0.0
    %951 = vmatpush1.msra.mxu0 0.0
    %952 = vmatprep.subr.mxu0 0.0
    %953 = vmatpush1.msra.mxu0 0.0
    %954 = vmatprep.subr.mxu0 0.0
    %955 = vmatpush1.msra.mxu0 0.0
    %956 = vmatprep.subr.mxu0 0.0
    %957 = vmatpush1.msra.mxu0 0.0
    %958 = vmatprep.subr.mxu0 0.0
    %959 = vmatpush1.msra.mxu0 0.0
    %960 = vmatprep.subr.mxu0 0.0
    %961 = vmatpush1.msra.mxu0 0.0
    %962 = vmatprep.subr.mxu0 0.0
    %963 = vmatpush1.msra.mxu0 0.0
    %964 = vmatprep.subr.mxu0 0.0
    %965 = vmatpush1.msra.mxu0 0.0
    %966 = vmatprep.subr.mxu0 0.0
    %967 = vmatpush1.msra.mxu0 0.0
    %968 = vmatprep.subr.mxu0 0.0
    %969 = vmatpush1.msra.mxu0 0.0
    %970 = vmatprep.subr.mxu0 0.0
    %971 = vmatpush1.msra.mxu0 0.0
    %972 = vmatprep.subr.mxu0 0.0
    %973 = vmatpush1.msra.mxu0 %v224
    %974 = vmatprep.subr.mxu0 0.0
    %975 = vmatpush1.msra.mxu0 %v223
    %976 = vmatprep.subr.mxu0 0.0
    %977 = vmatpush1.msra.mxu0 %v222
    %978 = vmatprep.subr.mxu0 0.0
    %979 = vmatpush1.msra.mxu0 %v221
    %980 = vmatprep.subr.mxu0 0.0
    %981 = vmatpush2.msra.mxu0 0.0
    %982 = vmatprep.subr.mxu0 0.0
    %983 = vmatpush2.msra.mxu0 0.0
    %984 = vmatprep.subr.mxu0 0.0
    %985 = vmatpush2.msra.mxu0 0.0
    %986 = vmatprep.subr.mxu0 0.0
    %987 = vmatpush2.msra.mxu0 0.0
    %988 = vmatprep.subr.mxu0 0.0
    %989 = vmatpush2.msra.mxu0 0.0
    %990 = vmatprep.subr.mxu0 0.0
    %991 = vmatpush2.msra.mxu0 0.0
    %992 = vmatprep.subr.mxu0 0.0
    %993 = vmatpush2.msra.mxu0 0.0
    %994 = vmatprep.subr.mxu0 0.0
    %995 = vmatpush2.msra.mxu0 0.0
    %996 = vmatprep.subr.mxu0 0.0
    %997 = vmatpush2.msra.mxu0 0.0
    %998 = vmatprep.subr.mxu0 0.0
    %999 = vmatpush2.msra.mxu0 0.0
    %1000 = vmatprep.subr.mxu0 0.0
    %1001 = vmatpush2.msra.mxu0 0.0
    %1002 = vmatprep.subr.mxu0 0.0
    %1003 = vmatpush2.msra.mxu0 0.0
    %1004 = vmatprep.subr.mxu0 0.0
    %1005 = vmatpush2.msra.mxu0 0.0
    %1006 = vmatprep.subr.mxu0 0.0
    %1007 = vmatpush2.msra.mxu0 0.0
    %1008 = vmatprep.subr.mxu0 0.0
    %1009 = vmatpush2.msra.mxu0 0.0
    %1010 = vmatprep.subr.mxu0 0.0
    %1011 = vmatpush2.msra.mxu0 0.0
    %1012 = vmatprep.mubr.f32.mxu0 0.0
    %1013 = vmatmul.mubr.f32.gmra.mxu0 %v946
    %v1014 = vpop.f32.mrf.mxu0
    %v1015 = vadd.f32 %v230, %v1014
    %v1016 = vpop.f32.mrf.mxu0
    %1017 = vdwg.mxu0
    %s1018 = scalar_lea.vmem %s15, 16
    %1019 = vst [vmem:[%s1018] sm:$0xff] %v1015
    %v1020 = vsel %vm235, %v1015, -1e+30
    %1021 = vmax.xlane.f32.xlu0 %v1020
    %v1022 = vpop.xlane.xlu0 %1021
    %vm1023 = vcmp.eq.f32.partialorder %v1020, %v1022
    %vm1024 = vmand %vm1023, %vm235
    %v1025 = vsel %vm1024, %v234, 128.0
    %1026 = vmin.xlane.f32.xlu0 %v1025
    %v1027 = vpop.xlane.xlu0 %1026
    %vm1028 = vcmp.eq.f32.partialorder %v234, %v1027
    %v1029 = vsel %vm1028, 1, 0
    %v1030 = vcvt.s32.f32 %v1029
    %s1031 = sld [smem:[#allocation3 + $0x2]]
    %p1032 = scmp.gt.s32.totalorder %s1031, 0
    %s1033 = scalar_select %p1032, 1, 0
    %s1034 = scvt.s32.f32 %s1033
    %s1035 = scalar_lea.vmem %s2, 16
    %v1036 = vld [vmem:[%s1035] sm:$0xff]
    %v1037 = vstv %s1034
    %v1038 = vmul.f32 %v1037, %v1036
    %s1039 = ssub.f32 1.0, %s1034
    %v1040 = vstv %s1039
    %v1041 = vmul.f32 %v1040, %v1030
    %v1042 = vadd.f32 %v1038, %v1041
    %v1043 = vmul.f32 %v942, %v643
    %1045 = vrot.lane.b32.xlu0 %v1043, 32
    %v1046 = vpop.permute.xlu0 %1045
    %v1048 = vsel %vm97, %v1046, 0.0
    %1049 = vadd.xlane.f32.xlu0 %v1048
    %v1050 = vpop.xlane.xlu0 %1049
    %v1051 = vadd.f32 %v169, %v1050
    %v1052 = vadd.f32 %v170, %v1050
    %v1053 = vadd.f32 %v171, %v1050
    %v1054 = vadd.f32 %v172, %v1050
    %v1055 = vadd.f32 %v173, %v1050
    %v1056 = vadd.f32 %v174, %v1050
    %v1057 = vadd.f32 %v175, %v1050
    %v1058 = vadd.f32 %v176, %v1050
    %v1059 = vmax.f32 %v1051, 0.0
    %v1060 = vmax.f32 %v1052, 0.0
    %v1061 = vmax.f32 %v1053, 0.0
    %v1062 = vmax.f32 %v1054, 0.0
    %v1063 = vmax.f32 %v1055, 0.0
    %v1064 = vmax.f32 %v1056, 0.0
    %v1065 = vmax.f32 %v1057, 0.0
    %v1066 = vmax.f32 %v1058, 0.0
    %v1067 = vmax.f32 %v1059, %v1063
    %v1068 = vmax.f32 %v1060, %v1064
    %v1069 = vmax.f32 %v1061, %v1065
    %v1070 = vmax.f32 %v1062, %v1066
    %v1071 = vmax.f32 %v1067, %v1068
    %v1072 = vmax.f32 %v1069, %v1070
    %v1073 = vmax.f32 %v1071, %v1072
    %v1074 = vsub.f32 %v1059, %v1073
    %v1075 = vsub.f32 %v1060, %v1073
    %v1076 = vsub.f32 %v1061, %v1073
    %v1077 = vsub.f32 %v1062, %v1073
    %v1078 = vsub.f32 %v1063, %v1073
    %v1079 = vsub.f32 %v1064, %v1073
    %v1080 = vsub.f32 %v1065, %v1073
    %v1081 = vsub.f32 %v1066, %v1073
    %v1082 = vmul.f32 %v1074, 1.442695
    %v1083 = vpow.pop %v1082
    %v1084 = vmul.f32 %v1075, 1.442695
    %v1085 = vpow.pop %v1084
    %v1086 = vmul.f32 %v1076, 1.442695
    %v1087 = vpow.pop %v1086
    %v1088 = vmul.f32 %v1077, 1.442695
    %v1089 = vpow.pop %v1088
    %v1090 = vmul.f32 %v1078, 1.442695
    %v1091 = vpow.pop %v1090
    %v1092 = vmul.f32 %v1079, 1.442695
    %v1093 = vpow.pop %v1092
    %v1094 = vmul.f32 %v1080, 1.442695
    %v1095 = vpow.pop %v1094
    %v1096 = vmul.f32 %v1081, 1.442695
    %v1097 = vpow.pop %v1096
    %v1098 = vadd.f32 %v1083, %v1085
    %v1099 = vadd.f32 %v1098, %v1087
    %v1100 = vadd.f32 %v1099, %v1089
    %v1101 = vadd.f32 %v1100, %v1091
    %v1102 = vadd.f32 %v1101, %v1093
    %v1103 = vadd.f32 %v1102, %v1095
    %v1104 = vadd.f32 %v1103, %v1097
    %v1105 = vrcp.pop %v1104
    %v1106 = vmul.f32 %v1083, %v1105
    %v1107 = vmul.f32 %v1085, %v1105
    %v1108 = vmul.f32 %v1087, %v1105
    %v1109 = vmul.f32 %v1089, %v1105
    %v1110 = vmul.f32 %v1091, %v1105
    %v1111 = vmul.f32 %v1093, %v1105
    %v1112 = vmul.f32 %v1095, %v1105
    %v1113 = vmul.f32 %v1097, %v1105
    %v1114 = vmul.f32 %v1106, %v64
    %v1115 = vmul.f32 %v1107, %v65
    %v1116 = vmul.f32 %v1108, %v66
    %v1117 = vmul.f32 %v1109, %v67
    %v1118 = vmul.f32 %v1110, %v68
    %v1119 = vmul.f32 %v1111, %v69
    %v1120 = vmul.f32 %v1112, %v70
    %v1121 = vmul.f32 %v1113, %v71
    %v1122 = vsel %vm97, %v1114, 0.0
    %v1123 = vsel %vm97, %v1115, 0.0
    %v1124 = vadd.f32 %v1122, %v1123
    %v1125 = vsel %vm97, %v1116, 0.0
    %v1126 = vadd.f32 %v1124, %v1125
    %v1127 = vsel %vm97, %v1117, 0.0
    %v1128 = vadd.f32 %v1126, %v1127
    %v1129 = vsel %vm97, %v1118, 0.0
    %v1130 = vadd.f32 %v1128, %v1129
    %v1131 = vsel %vm97, %v1119, 0.0
    %v1132 = vadd.f32 %v1130, %v1131
    %v1133 = vsel %vm97, %v1120, 0.0
    %v1134 = vadd.f32 %v1132, %v1133
    %v1135 = vsel %vm97, %v1121, 0.0
    %v1136 = vadd.f32 %v1134, %v1135
    %v1137 = vmul.f32 %v1106, %v72
    %v1138 = vmul.f32 %v1107, %v73
    %v1139 = vmul.f32 %v1108, %v74
    %v1140 = vmul.f32 %v1109, %v75
    %v1141 = vmul.f32 %v1110, %v76
    %v1142 = vmul.f32 %v1111, %v77
    %v1143 = vmul.f32 %v1112, %v78
    %v1144 = vmul.f32 %v1113, %v79
    %v1145 = vsel %vm97, %v1137, 0.0
    %v1146 = vsel %vm97, %v1138, 0.0
    %v1147 = vadd.f32 %v1145, %v1146
    %v1148 = vsel %vm97, %v1139, 0.0
    %v1149 = vadd.f32 %v1147, %v1148
    %v1150 = vsel %vm97, %v1140, 0.0
    %v1151 = vadd.f32 %v1149, %v1150
    %v1152 = vsel %vm97, %v1141, 0.0
    %v1153 = vadd.f32 %v1151, %v1152
    %v1154 = vsel %vm97, %v1142, 0.0
    %v1155 = vadd.f32 %v1153, %v1154
    %v1156 = vsel %vm97, %v1143, 0.0
    %v1157 = vadd.f32 %v1155, %v1156
    %v1158 = vsel %vm97, %v1144, 0.0
    %v1159 = vadd.f32 %v1157, %v1158
    %1160 = vmatprep.subr.mxu0 0.0
    %1161 = vmatpush1.msra.mxu0 %v199
    %1162 = vmatprep.subr.mxu0 0.0
    %1163 = vmatpush1.msra.mxu0 %v198
    %1164 = vmatprep.subr.mxu0 0.0
    %1165 = vmatpush1.msra.mxu0 %v197
    %1166 = vmatprep.subr.mxu0 0.0
    %1167 = vmatpush1.msra.mxu0 %v196
    %1168 = vmatprep.subr.mxu0 0.0
    %1169 = vmatpush1.msra.mxu0 %v195
    %1170 = vmatprep.subr.mxu0 0.0
    %1171 = vmatpush1.msra.mxu0 %v194
    %1172 = vmatprep.subr.mxu0 0.0
    %1173 = vmatpush1.msra.mxu0 %v193
    %1174 = vmatprep.subr.mxu0 0.0
    %1175 = vmatpush1.msra.mxu0 %v192
    %1176 = vmatprep.subr.mxu0 0.0
    %1177 = vmatpush1.msra.mxu0 %v191
    %1178 = vmatprep.subr.mxu0 0.0
    %1179 = vmatpush1.msra.mxu0 %v190
    %1180 = vmatprep.subr.mxu0 0.0
    %1181 = vmatpush1.msra.mxu0 %v189
    %1182 = vmatprep.subr.mxu0 0.0
    %1183 = vmatpush1.msra.mxu0 %v188
    %1184 = vmatprep.subr.mxu0 0.0
    %1185 = vmatpush1.msra.mxu0 %v187
    %1186 = vmatprep.subr.mxu0 0.0
    %1187 = vmatpush1.msra.mxu0 %v186
    %1188 = vmatprep.subr.mxu0 0.0
    %1189 = vmatpush1.msra.mxu0 %v185
    %1190 = vmatprep.subr.mxu0 0.0
    %1191 = vmatpush1.msra.mxu0 %v184
    %1192 = vmatprep.subr.mxu0 0.0
    %1193 = vmatpush2.msra.mxu0 0.0
    %1194 = vmatprep.subr.mxu0 0.0
    %1195 = vmatpush2.msra.mxu0 0.0
    %1196 = vmatprep.subr.mxu0 0.0
    %1197 = vmatpush2.msra.mxu0 0.0
    %1198 = vmatprep.subr.mxu0 0.0
    %1199 = vmatpush2.msra.mxu0 0.0
    %1200 = vmatprep.subr.mxu0 0.0
    %1201 = vmatpush2.msra.mxu0 0.0
    %1202 = vmatprep.subr.mxu0 0.0
    %1203 = vmatpush2.msra.mxu0 0.0
    %1204 = vmatprep.subr.mxu0 0.0
    %1205 = vmatpush2.msra.mxu0 0.0
    %1206 = vmatprep.subr.mxu0 0.0
    %1207 = vmatpush2.msra.mxu0 0.0
    %1208 = vmatprep.subr.mxu0 0.0
    %1209 = vmatpush2.msra.mxu0 0.0
    %1210 = vmatprep.subr.mxu0 0.0
    %1211 = vmatpush2.msra.mxu0 0.0
    %1212 = vmatprep.subr.mxu0 0.0
    %1213 = vmatpush2.msra.mxu0 0.0
    %1214 = vmatprep.subr.mxu0 0.0
    %1215 = vmatpush2.msra.mxu0 0.0
    %1216 = vmatprep.subr.mxu0 0.0
    %1217 = vmatpush2.msra.mxu0 0.0
    %1218 = vmatprep.subr.mxu0 0.0
    %1219 = vmatpush2.msra.mxu0 0.0
    %1220 = vmatprep.subr.mxu0 0.0
    %1221 = vmatpush2.msra.mxu0 0.0
    %1222 = vmatprep.subr.mxu0 0.0
    %1223 = vmatpush2.msra.mxu0 0.0
    %1224 = vmatprep.mubr.f32.mxu0 0.0
    %1225 = vmatmul.mubr.f32.gmra.mxu0 %v1042
    %v1226 = vpop.f32.mrf.mxu0
    %v1227 = vadd.f32 0.0, %v1226
    %v1228 = vpop.f32.mrf.mxu0
    %1229 = vdwg.mxu0
    %1231 = vrot.lane.b32.xlu0 %v1159, 32
    %v1232 = vpop.permute.xlu0 %1231
    %1235 = vrot.lane.b32.xlu0 %v1227, 64
    %v1236 = vpop.permute.xlu0 %1235
    %1238 = vrot.lane.b32.xlu0 %v942, 112
    %v1239 = vpop.permute.xlu0 %1238
    %v1241 = vsel %vm97, %v1136, %v1232
    %v1242 = vsel %vm436, %v1241, %v1236
    %v1243 = vsel %vm438, %v1242, %v1239
    %v1245 = vsel %vm440, %v1243, 0
    %1247 = vmatprep.subr.mxu0 0.0
    %1248 = vmatpush1.msra.mxu0 0.0
    %1249 = vmatprep.subr.mxu0 0.0
    %1250 = vmatpush1.msra.mxu0 0.0
    %1251 = vmatprep.subr.mxu0 0.0
    %1252 = vmatpush1.msra.mxu0 %v213
    %1253 = vmatprep.subr.mxu0 0.0
    %1254 = vmatpush1.msra.mxu0 %v212
    %1255 = vmatprep.subr.mxu0 0.0
    %1256 = vmatpush1.msra.mxu0 %v211
    %1257 = vmatprep.subr.mxu0 0.0
    %1258 = vmatpush1.msra.mxu0 %v210
    %1259 = vmatprep.subr.mxu0 0.0
    %1260 = vmatpush1.msra.mxu0 %v209
    %1261 = vmatprep.subr.mxu0 0.0
    %1262 = vmatpush1.msra.mxu0 %v208
    %1263 = vmatprep.subr.mxu0 0.0
    %1264 = vmatpush1.msra.mxu0 %v207
    %1265 = vmatprep.subr.mxu0 0.0
    %1266 = vmatpush1.msra.mxu0 %v206
    %1267 = vmatprep.subr.mxu0 0.0
    %1268 = vmatpush1.msra.mxu0 %v205
    %1269 = vmatprep.subr.mxu0 0.0
    %1270 = vmatpush1.msra.mxu0 %v204
    %1271 = vmatprep.subr.mxu0 0.0
    %1272 = vmatpush1.msra.mxu0 %v203
    %1273 = vmatprep.subr.mxu0 0.0
    %1274 = vmatpush1.msra.mxu0 %v202
    %1275 = vmatprep.subr.mxu0 0.0
    %1276 = vmatpush1.msra.mxu0 %v201
    %1277 = vmatprep.subr.mxu0 0.0
    %1278 = vmatpush1.msra.mxu0 %v200
    %1279 = vmatprep.subr.mxu0 0.0
    %1280 = vmatpush2.msra.mxu0 0.0
    %1281 = vmatprep.subr.mxu0 0.0
    %1282 = vmatpush2.msra.mxu0 0.0
    %1283 = vmatprep.subr.mxu0 0.0
    %1284 = vmatpush2.msra.mxu0 0.0
    %1285 = vmatprep.subr.mxu0 0.0
    %1286 = vmatpush2.msra.mxu0 0.0
    %1287 = vmatprep.subr.mxu0 0.0
    %1288 = vmatpush2.msra.mxu0 0.0
    %1289 = vmatprep.subr.mxu0 0.0
    %1290 = vmatpush2.msra.mxu0 0.0
    %1291 = vmatprep.subr.mxu0 0.0
    %1292 = vmatpush2.msra.mxu0 0.0
    %1293 = vmatprep.subr.mxu0 0.0
    %1294 = vmatpush2.msra.mxu0 0.0
    %1295 = vmatprep.subr.mxu0 0.0
    %1296 = vmatpush2.msra.mxu0 0.0
    %1297 = vmatprep.subr.mxu0 0.0
    %1298 = vmatpush2.msra.mxu0 0.0
    %1299 = vmatprep.subr.mxu0 0.0
    %1300 = vmatpush2.msra.mxu0 0.0
    %1301 = vmatprep.subr.mxu0 0.0
    %1302 = vmatpush2.msra.mxu0 0.0
    %1303 = vmatprep.subr.mxu0 0.0
    %1304 = vmatpush2.msra.mxu0 0.0
    %1305 = vmatprep.subr.mxu0 0.0
    %1306 = vmatpush2.msra.mxu0 0.0
    %1307 = vmatprep.subr.mxu0 0.0
    %1308 = vmatpush2.msra.mxu0 0.0
    %1309 = vmatprep.subr.mxu0 0.0
    %1310 = vmatpush2.msra.mxu0 0.0
    %1311 = vmatprep.mubr.f32.mxu0 0.0
    %1312 = vmatmul.mubr.f32.gmra.mxu0 %v1245
    %v1313 = vpop.f32.mrf.mxu0
    %v1314 = vadd.f32 %v219, %v1313
    %v1315 = vpop.f32.mrf.mxu0
    %1316 = vdwg.mxu0
    %v1317 = vxor.u32 %v1314, 2147483648
    %v1318 = vmul.f32 %v1317, 1.442695
    %v1319 = vpow.pop %v1318
    %v1320 = vadd.f32 %v1319, 1.0
    %v1321 = vrcp.pop %v1320
    %v1322 = vmul.f32 1.0, %v1321
    %v1323 = vtanh.pop %v1314
    %v1324 = vmul.f32 %v1322, %v936
    %1326 = vrot.lane.b32.xlu0 %v1323, 64
    %v1327 = vpop.permute.xlu0 %1326
    %v1329 = vmul.f32 %v1322, %v1327
    %1331 = vrot.lane.b32.xlu0 %v1329, 32
    %v1332 = vpop.permute.xlu0 %1331
    %v1334 = vadd.f32 %v1324, %v1332
    %v1335 = vtanh.pop %v1334
    %1337 = vrot.lane.b32.xlu0 %v1335, 64
    %v1338 = vpop.permute.xlu0 %1337
    %v1340 = vmul.f32 %v1322, %v1338
    %1342 = vrot.lane.b32.xlu0 %v1340, 32
    %v1343 = vpop.permute.xlu0 %1342
    %v1344 = vsel %vm97, %v1343, 0
    %1346 = vmatprep.subr.mxu0 0.0
    %1347 = vmatpush1.msra.mxu0 0.0
    %1348 = vmatprep.subr.mxu0 0.0
    %1349 = vmatpush1.msra.mxu0 0.0
    %1350 = vmatprep.subr.mxu0 0.0
    %1351 = vmatpush1.msra.mxu0 0.0
    %1352 = vmatprep.subr.mxu0 0.0
    %1353 = vmatpush1.msra.mxu0 0.0
    %1354 = vmatprep.subr.mxu0 0.0
    %1355 = vmatpush1.msra.mxu0 0.0
    %1356 = vmatprep.subr.mxu0 0.0
    %1357 = vmatpush1.msra.mxu0 0.0
    %1358 = vmatprep.subr.mxu0 0.0
    %1359 = vmatpush1.msra.mxu0 0.0
    %1360 = vmatprep.subr.mxu0 0.0
    %1361 = vmatpush1.msra.mxu0 0.0
    %1362 = vmatprep.subr.mxu0 0.0
    %1363 = vmatpush1.msra.mxu0 0.0
    %1364 = vmatprep.subr.mxu0 0.0
    %1365 = vmatpush1.msra.mxu0 0.0
    %1366 = vmatprep.subr.mxu0 0.0
    %1367 = vmatpush1.msra.mxu0 0.0
    %1368 = vmatprep.subr.mxu0 0.0
    %1369 = vmatpush1.msra.mxu0 0.0
    %1370 = vmatprep.subr.mxu0 0.0
    %1371 = vmatpush1.msra.mxu0 %v224
    %1372 = vmatprep.subr.mxu0 0.0
    %1373 = vmatpush1.msra.mxu0 %v223
    %1374 = vmatprep.subr.mxu0 0.0
    %1375 = vmatpush1.msra.mxu0 %v222
    %1376 = vmatprep.subr.mxu0 0.0
    %1377 = vmatpush1.msra.mxu0 %v221
    %1378 = vmatprep.subr.mxu0 0.0
    %1379 = vmatpush2.msra.mxu0 0.0
    %1380 = vmatprep.subr.mxu0 0.0
    %1381 = vmatpush2.msra.mxu0 0.0
    %1382 = vmatprep.subr.mxu0 0.0
    %1383 = vmatpush2.msra.mxu0 0.0
    %1384 = vmatprep.subr.mxu0 0.0
    %1385 = vmatpush2.msra.mxu0 0.0
    %1386 = vmatprep.subr.mxu0 0.0
    %1387 = vmatpush2.msra.mxu0 0.0
    %1388 = vmatprep.subr.mxu0 0.0
    %1389 = vmatpush2.msra.mxu0 0.0
    %1390 = vmatprep.subr.mxu0 0.0
    %1391 = vmatpush2.msra.mxu0 0.0
    %1392 = vmatprep.subr.mxu0 0.0
    %1393 = vmatpush2.msra.mxu0 0.0
    %1394 = vmatprep.subr.mxu0 0.0
    %1395 = vmatpush2.msra.mxu0 0.0
    %1396 = vmatprep.subr.mxu0 0.0
    %1397 = vmatpush2.msra.mxu0 0.0
    %1398 = vmatprep.subr.mxu0 0.0
    %1399 = vmatpush2.msra.mxu0 0.0
    %1400 = vmatprep.subr.mxu0 0.0
    %1401 = vmatpush2.msra.mxu0 0.0
    %1402 = vmatprep.subr.mxu0 0.0
    %1403 = vmatpush2.msra.mxu0 0.0
    %1404 = vmatprep.subr.mxu0 0.0
    %1405 = vmatpush2.msra.mxu0 0.0
    %1406 = vmatprep.subr.mxu0 0.0
    %1407 = vmatpush2.msra.mxu0 0.0
    %1408 = vmatprep.subr.mxu0 0.0
    %1409 = vmatpush2.msra.mxu0 0.0
    %1410 = vmatprep.mubr.f32.mxu0 0.0
    %1411 = vmatmul.mubr.f32.gmra.mxu0 %v1344
    %v1412 = vpop.f32.mrf.mxu0
    %v1413 = vadd.f32 %v230, %v1412
    %v1414 = vpop.f32.mrf.mxu0
    %1415 = vdwg.mxu0
    %s1416 = scalar_lea.vmem %s15, 24
    %1417 = vst [vmem:[%s1416] sm:$0xff] %v1413
    %v1418 = vsel %vm235, %v1413, -1e+30
    %1419 = vmax.xlane.f32.xlu0 %v1418
    %v1420 = vpop.xlane.xlu0 %1419
    %vm1421 = vcmp.eq.f32.partialorder %v1418, %v1420
    %vm1422 = vmand %vm1421, %vm235
    %v1423 = vsel %vm1422, %v234, 128.0
    %1424 = vmin.xlane.f32.xlu0 %v1423
    %v1425 = vpop.xlane.xlu0 %1424
    %vm1426 = vcmp.eq.f32.partialorder %v234, %v1425
    %v1427 = vsel %vm1426, 1, 0
    %v1428 = vcvt.s32.f32 %v1427
    %s1429 = sld [smem:[#allocation3 + $0x3]]
    %p1430 = scmp.gt.s32.totalorder %s1429, 0
    %s1431 = scalar_select %p1430, 1, 0
    %s1432 = scvt.s32.f32 %s1431
    %s1433 = scalar_lea.vmem %s2, 24
    %v1434 = vld [vmem:[%s1433] sm:$0xff]
    %v1435 = vstv %s1432
    %v1436 = vmul.f32 %v1435, %v1434
    %s1437 = ssub.f32 1.0, %s1432
    %v1438 = vstv %s1437
    %v1439 = vmul.f32 %v1438, %v1428
    %v1440 = vadd.f32 %v1436, %v1439
    %v1441 = vmul.f32 %v1340, %v643
    %1443 = vrot.lane.b32.xlu0 %v1441, 32
    %v1444 = vpop.permute.xlu0 %1443
    %v1446 = vsel %vm97, %v1444, 0.0
    %1447 = vadd.xlane.f32.xlu0 %v1446
    %v1448 = vpop.xlane.xlu0 %1447
    %v1449 = vadd.f32 %v169, %v1448
    %v1450 = vadd.f32 %v170, %v1448
    %v1451 = vadd.f32 %v171, %v1448
    %v1452 = vadd.f32 %v172, %v1448
    %v1453 = vadd.f32 %v173, %v1448
    %v1454 = vadd.f32 %v174, %v1448
    %v1455 = vadd.f32 %v175, %v1448
    %v1456 = vadd.f32 %v176, %v1448
    %v1457 = vmax.f32 %v1449, 0.0
    %v1458 = vmax.f32 %v1450, 0.0
    %v1459 = vmax.f32 %v1451, 0.0
    %v1460 = vmax.f32 %v1452, 0.0
    %v1461 = vmax.f32 %v1453, 0.0
    %v1462 = vmax.f32 %v1454, 0.0
    %v1463 = vmax.f32 %v1455, 0.0
    %v1464 = vmax.f32 %v1456, 0.0
    %v1465 = vmax.f32 %v1457, %v1461
    %v1466 = vmax.f32 %v1458, %v1462
    %v1467 = vmax.f32 %v1459, %v1463
    %v1468 = vmax.f32 %v1460, %v1464
    %v1469 = vmax.f32 %v1465, %v1466
    %v1470 = vmax.f32 %v1467, %v1468
    %v1471 = vmax.f32 %v1469, %v1470
    %v1472 = vsub.f32 %v1457, %v1471
    %v1473 = vsub.f32 %v1458, %v1471
    %v1474 = vsub.f32 %v1459, %v1471
    %v1475 = vsub.f32 %v1460, %v1471
    %v1476 = vsub.f32 %v1461, %v1471
    %v1477 = vsub.f32 %v1462, %v1471
    %v1478 = vsub.f32 %v1463, %v1471
    %v1479 = vsub.f32 %v1464, %v1471
    %v1480 = vmul.f32 %v1472, 1.442695
    %v1481 = vpow.pop %v1480
    %v1482 = vmul.f32 %v1473, 1.442695
    %v1483 = vpow.pop %v1482
    %v1484 = vmul.f32 %v1474, 1.442695
    %v1485 = vpow.pop %v1484
    %v1486 = vmul.f32 %v1475, 1.442695
    %v1487 = vpow.pop %v1486
    %v1488 = vmul.f32 %v1476, 1.442695
    %v1489 = vpow.pop %v1488
    %v1490 = vmul.f32 %v1477, 1.442695
    %v1491 = vpow.pop %v1490
    %v1492 = vmul.f32 %v1478, 1.442695
    %v1493 = vpow.pop %v1492
    %v1494 = vmul.f32 %v1479, 1.442695
    %v1495 = vpow.pop %v1494
    %v1496 = vadd.f32 %v1481, %v1483
    %v1497 = vadd.f32 %v1496, %v1485
    %v1498 = vadd.f32 %v1497, %v1487
    %v1499 = vadd.f32 %v1498, %v1489
    %v1500 = vadd.f32 %v1499, %v1491
    %v1501 = vadd.f32 %v1500, %v1493
    %v1502 = vadd.f32 %v1501, %v1495
    %v1503 = vrcp.pop %v1502
    %v1504 = vmul.f32 %v1481, %v1503
    %v1505 = vmul.f32 %v1483, %v1503
    %v1506 = vmul.f32 %v1485, %v1503
    %v1507 = vmul.f32 %v1487, %v1503
    %v1508 = vmul.f32 %v1489, %v1503
    %v1509 = vmul.f32 %v1491, %v1503
    %v1510 = vmul.f32 %v1493, %v1503
    %v1511 = vmul.f32 %v1495, %v1503
    %v1512 = vmul.f32 %v1504, %v64
    %v1513 = vmul.f32 %v1505, %v65
    %v1514 = vmul.f32 %v1506, %v66
    %v1515 = vmul.f32 %v1507, %v67
    %v1516 = vmul.f32 %v1508, %v68
    %v1517 = vmul.f32 %v1509, %v69
    %v1518 = vmul.f32 %v1510, %v70
    %v1519 = vmul.f32 %v1511, %v71
    %v1520 = vsel %vm97, %v1512, 0.0
    %v1521 = vsel %vm97, %v1513, 0.0
    %v1522 = vadd.f32 %v1520, %v1521
    %v1523 = vsel %vm97, %v1514, 0.0
    %v1524 = vadd.f32 %v1522, %v1523
    %v1525 = vsel %vm97, %v1515, 0.0
    %v1526 = vadd.f32 %v1524, %v1525
    %v1527 = vsel %vm97, %v1516, 0.0
    %v1528 = vadd.f32 %v1526, %v1527
    %v1529 = vsel %vm97, %v1517, 0.0
    %v1530 = vadd.f32 %v1528, %v1529
    %v1531 = vsel %vm97, %v1518, 0.0
    %v1532 = vadd.f32 %v1530, %v1531
    %v1533 = vsel %vm97, %v1519, 0.0
    %v1534 = vadd.f32 %v1532, %v1533
    %v1535 = vmul.f32 %v1504, %v72
    %v1536 = vmul.f32 %v1505, %v73
    %v1537 = vmul.f32 %v1506, %v74
    %v1538 = vmul.f32 %v1507, %v75
    %v1539 = vmul.f32 %v1508, %v76
    %v1540 = vmul.f32 %v1509, %v77
    %v1541 = vmul.f32 %v1510, %v78
    %v1542 = vmul.f32 %v1511, %v79
    %v1543 = vsel %vm97, %v1535, 0.0
    %v1544 = vsel %vm97, %v1536, 0.0
    %v1545 = vadd.f32 %v1543, %v1544
    %v1546 = vsel %vm97, %v1537, 0.0
    %v1547 = vadd.f32 %v1545, %v1546
    %v1548 = vsel %vm97, %v1538, 0.0
    %v1549 = vadd.f32 %v1547, %v1548
    %v1550 = vsel %vm97, %v1539, 0.0
    %v1551 = vadd.f32 %v1549, %v1550
    %v1552 = vsel %vm97, %v1540, 0.0
    %v1553 = vadd.f32 %v1551, %v1552
    %v1554 = vsel %vm97, %v1541, 0.0
    %v1555 = vadd.f32 %v1553, %v1554
    %v1556 = vsel %vm97, %v1542, 0.0
    %v1557 = vadd.f32 %v1555, %v1556
    %1558 = vmatprep.subr.mxu0 0.0
    %1559 = vmatpush1.msra.mxu0 %v199
    %1560 = vmatprep.subr.mxu0 0.0
    %1561 = vmatpush1.msra.mxu0 %v198
    %1562 = vmatprep.subr.mxu0 0.0
    %1563 = vmatpush1.msra.mxu0 %v197
    %1564 = vmatprep.subr.mxu0 0.0
    %1565 = vmatpush1.msra.mxu0 %v196
    %1566 = vmatprep.subr.mxu0 0.0
    %1567 = vmatpush1.msra.mxu0 %v195
    %1568 = vmatprep.subr.mxu0 0.0
    %1569 = vmatpush1.msra.mxu0 %v194
    %1570 = vmatprep.subr.mxu0 0.0
    %1571 = vmatpush1.msra.mxu0 %v193
    %1572 = vmatprep.subr.mxu0 0.0
    %1573 = vmatpush1.msra.mxu0 %v192
    %1574 = vmatprep.subr.mxu0 0.0
    %1575 = vmatpush1.msra.mxu0 %v191
    %1576 = vmatprep.subr.mxu0 0.0
    %1577 = vmatpush1.msra.mxu0 %v190
    %1578 = vmatprep.subr.mxu0 0.0
    %1579 = vmatpush1.msra.mxu0 %v189
    %1580 = vmatprep.subr.mxu0 0.0
    %1581 = vmatpush1.msra.mxu0 %v188
    %1582 = vmatprep.subr.mxu0 0.0
    %1583 = vmatpush1.msra.mxu0 %v187
    %1584 = vmatprep.subr.mxu0 0.0
    %1585 = vmatpush1.msra.mxu0 %v186
    %1586 = vmatprep.subr.mxu0 0.0
    %1587 = vmatpush1.msra.mxu0 %v185
    %1588 = vmatprep.subr.mxu0 0.0
    %1589 = vmatpush1.msra.mxu0 %v184
    %1590 = vmatprep.subr.mxu0 0.0
    %1591 = vmatpush2.msra.mxu0 0.0
    %1592 = vmatprep.subr.mxu0 0.0
    %1593 = vmatpush2.msra.mxu0 0.0
    %1594 = vmatprep.subr.mxu0 0.0
    %1595 = vmatpush2.msra.mxu0 0.0
    %1596 = vmatprep.subr.mxu0 0.0
    %1597 = vmatpush2.msra.mxu0 0.0
    %1598 = vmatprep.subr.mxu0 0.0
    %1599 = vmatpush2.msra.mxu0 0.0
    %1600 = vmatprep.subr.mxu0 0.0
    %1601 = vmatpush2.msra.mxu0 0.0
    %1602 = vmatprep.subr.mxu0 0.0
    %1603 = vmatpush2.msra.mxu0 0.0
    %1604 = vmatprep.subr.mxu0 0.0
    %1605 = vmatpush2.msra.mxu0 0.0
    %1606 = vmatprep.subr.mxu0 0.0
    %1607 = vmatpush2.msra.mxu0 0.0
    %1608 = vmatprep.subr.mxu0 0.0
    %1609 = vmatpush2.msra.mxu0 0.0
    %1610 = vmatprep.subr.mxu0 0.0
    %1611 = vmatpush2.msra.mxu0 0.0
    %1612 = vmatprep.subr.mxu0 0.0
    %1613 = vmatpush2.msra.mxu0 0.0
    %1614 = vmatprep.subr.mxu0 0.0
    %1615 = vmatpush2.msra.mxu0 0.0
    %1616 = vmatprep.subr.mxu0 0.0
    %1617 = vmatpush2.msra.mxu0 0.0
    %1618 = vmatprep.subr.mxu0 0.0
    %1619 = vmatpush2.msra.mxu0 0.0
    %1620 = vmatprep.subr.mxu0 0.0
    %1621 = vmatpush2.msra.mxu0 0.0
    %1622 = vmatprep.mubr.f32.mxu0 0.0
    %1623 = vmatmul.mubr.f32.gmra.mxu0 %v1440
    %v1624 = vpop.f32.mrf.mxu0
    %v1625 = vadd.f32 0.0, %v1624
    %v1626 = vpop.f32.mrf.mxu0
    %1627 = vdwg.mxu0
    %1629 = vrot.lane.b32.xlu0 %v1557, 32
    %v1630 = vpop.permute.xlu0 %1629
    %1633 = vrot.lane.b32.xlu0 %v1625, 64
    %v1634 = vpop.permute.xlu0 %1633
    %1636 = vrot.lane.b32.xlu0 %v1340, 112
    %v1637 = vpop.permute.xlu0 %1636
    %v1639 = vsel %vm97, %v1534, %v1630
    %v1640 = vsel %vm436, %v1639, %v1634
    %v1641 = vsel %vm438, %v1640, %v1637
    %v1643 = vsel %vm440, %v1641, 0
    %1645 = vmatprep.subr.mxu0 0.0
    %1646 = vmatpush1.msra.mxu0 0.0
    %1647 = vmatprep.subr.mxu0 0.0
    %1648 = vmatpush1.msra.mxu0 0.0
    %1649 = vmatprep.subr.mxu0 0.0
    %1650 = vmatpush1.msra.mxu0 %v213
    %1651 = vmatprep.subr.mxu0 0.0
    %1652 = vmatpush1.msra.mxu0 %v212
    %1653 = vmatprep.subr.mxu0 0.0
    %1654 = vmatpush1.msra.mxu0 %v211
    %1655 = vmatprep.subr.mxu0 0.0
    %1656 = vmatpush1.msra.mxu0 %v210
    %1657 = vmatprep.subr.mxu0 0.0
    %1658 = vmatpush1.msra.mxu0 %v209
    %1659 = vmatprep.subr.mxu0 0.0
    %1660 = vmatpush1.msra.mxu0 %v208
    %1661 = vmatprep.subr.mxu0 0.0
    %1662 = vmatpush1.msra.mxu0 %v207
    %1663 = vmatprep.subr.mxu0 0.0
    %1664 = vmatpush1.msra.mxu0 %v206
    %1665 = vmatprep.subr.mxu0 0.0
    %1666 = vmatpush1.msra.mxu0 %v205
    %1667 = vmatprep.subr.mxu0 0.0
    %1668 = vmatpush1.msra.mxu0 %v204
    %1669 = vmatprep.subr.mxu0 0.0
    %1670 = vmatpush1.msra.mxu0 %v203
    %1671 = vmatprep.subr.mxu0 0.0
    %1672 = vmatpush1.msra.mxu0 %v202
    %1673 = vmatprep.subr.mxu0 0.0
    %1674 = vmatpush1.msra.mxu0 %v201
    %1675 = vmatprep.subr.mxu0 0.0
    %1676 = vmatpush1.msra.mxu0 %v200
    %1677 = vmatprep.subr.mxu0 0.0
    %1678 = vmatpush2.msra.mxu0 0.0
    %1679 = vmatprep.subr.mxu0 0.0
    %1680 = vmatpush2.msra.mxu0 0.0
    %1681 = vmatprep.subr.mxu0 0.0
    %1682 = vmatpush2.msra.mxu0 0.0
    %1683 = vmatprep.subr.mxu0 0.0
    %1684 = vmatpush2.msra.mxu0 0.0
    %1685 = vmatprep.subr.mxu0 0.0
    %1686 = vmatpush2.msra.mxu0 0.0
    %1687 = vmatprep.subr.mxu0 0.0
    %1688 = vmatpush2.msra.mxu0 0.0
    %1689 = vmatprep.subr.mxu0 0.0
    %1690 = vmatpush2.msra.mxu0 0.0
    %1691 = vmatprep.subr.mxu0 0.0
    %1692 = vmatpush2.msra.mxu0 0.0
    %1693 = vmatprep.subr.mxu0 0.0
    %1694 = vmatpush2.msra.mxu0 0.0
    %1695 = vmatprep.subr.mxu0 0.0
    %1696 = vmatpush2.msra.mxu0 0.0
    %1697 = vmatprep.subr.mxu0 0.0
    %1698 = vmatpush2.msra.mxu0 0.0
    %1699 = vmatprep.subr.mxu0 0.0
    %1700 = vmatpush2.msra.mxu0 0.0
    %1701 = vmatprep.subr.mxu0 0.0
    %1702 = vmatpush2.msra.mxu0 0.0
    %1703 = vmatprep.subr.mxu0 0.0
    %1704 = vmatpush2.msra.mxu0 0.0
    %1705 = vmatprep.subr.mxu0 0.0
    %1706 = vmatpush2.msra.mxu0 0.0
    %1707 = vmatprep.subr.mxu0 0.0
    %1708 = vmatpush2.msra.mxu0 0.0
    %1709 = vmatprep.mubr.f32.mxu0 0.0
    %1710 = vmatmul.mubr.f32.gmra.mxu0 %v1643
    %v1711 = vpop.f32.mrf.mxu0
    %v1712 = vadd.f32 %v219, %v1711
    %v1713 = vpop.f32.mrf.mxu0
    %1714 = vdwg.mxu0
    %v1715 = vxor.u32 %v1712, 2147483648
    %v1716 = vmul.f32 %v1715, 1.442695
    %v1717 = vpow.pop %v1716
    %v1718 = vadd.f32 %v1717, 1.0
    %v1719 = vrcp.pop %v1718
    %v1720 = vmul.f32 1.0, %v1719
    %v1721 = vtanh.pop %v1712
    %v1722 = vmul.f32 %v1720, %v1334
    %1724 = vrot.lane.b32.xlu0 %v1721, 64
    %v1725 = vpop.permute.xlu0 %1724
    %v1727 = vmul.f32 %v1720, %v1725
    %1729 = vrot.lane.b32.xlu0 %v1727, 32
    %v1730 = vpop.permute.xlu0 %1729
    %v1732 = vadd.f32 %v1722, %v1730
    %v1733 = vtanh.pop %v1732
    %1735 = vrot.lane.b32.xlu0 %v1733, 64
    %v1736 = vpop.permute.xlu0 %1735
    %v1738 = vmul.f32 %v1720, %v1736
    %1740 = vrot.lane.b32.xlu0 %v1738, 32
    %v1741 = vpop.permute.xlu0 %1740
    %v1742 = vsel %vm97, %v1741, 0
    %1744 = vmatprep.subr.mxu0 0.0
    %1745 = vmatpush1.msra.mxu0 0.0
    %1746 = vmatprep.subr.mxu0 0.0
    %1747 = vmatpush1.msra.mxu0 0.0
    %1748 = vmatprep.subr.mxu0 0.0
    %1749 = vmatpush1.msra.mxu0 0.0
    %1750 = vmatprep.subr.mxu0 0.0
    %1751 = vmatpush1.msra.mxu0 0.0
    %1752 = vmatprep.subr.mxu0 0.0
    %1753 = vmatpush1.msra.mxu0 0.0
    %1754 = vmatprep.subr.mxu0 0.0
    %1755 = vmatpush1.msra.mxu0 0.0
    %1756 = vmatprep.subr.mxu0 0.0
    %1757 = vmatpush1.msra.mxu0 0.0
    %1758 = vmatprep.subr.mxu0 0.0
    %1759 = vmatpush1.msra.mxu0 0.0
    %1760 = vmatprep.subr.mxu0 0.0
    %1761 = vmatpush1.msra.mxu0 0.0
    %1762 = vmatprep.subr.mxu0 0.0
    %1763 = vmatpush1.msra.mxu0 0.0
    %1764 = vmatprep.subr.mxu0 0.0
    %1765 = vmatpush1.msra.mxu0 0.0
    %1766 = vmatprep.subr.mxu0 0.0
    %1767 = vmatpush1.msra.mxu0 0.0
    %1768 = vmatprep.subr.mxu0 0.0
    %1769 = vmatpush1.msra.mxu0 %v224
    %1770 = vmatprep.subr.mxu0 0.0
    %1771 = vmatpush1.msra.mxu0 %v223
    %1772 = vmatprep.subr.mxu0 0.0
    %1773 = vmatpush1.msra.mxu0 %v222
    %1774 = vmatprep.subr.mxu0 0.0
    %1775 = vmatpush1.msra.mxu0 %v221
    %1776 = vmatprep.subr.mxu0 0.0
    %1777 = vmatpush2.msra.mxu0 0.0
    %1778 = vmatprep.subr.mxu0 0.0
    %1779 = vmatpush2.msra.mxu0 0.0
    %1780 = vmatprep.subr.mxu0 0.0
    %1781 = vmatpush2.msra.mxu0 0.0
    %1782 = vmatprep.subr.mxu0 0.0
    %1783 = vmatpush2.msra.mxu0 0.0
    %1784 = vmatprep.subr.mxu0 0.0
    %1785 = vmatpush2.msra.mxu0 0.0
    %1786 = vmatprep.subr.mxu0 0.0
    %1787 = vmatpush2.msra.mxu0 0.0
    %1788 = vmatprep.subr.mxu0 0.0
    %1789 = vmatpush2.msra.mxu0 0.0
    %1790 = vmatprep.subr.mxu0 0.0
    %1791 = vmatpush2.msra.mxu0 0.0
    %1792 = vmatprep.subr.mxu0 0.0
    %1793 = vmatpush2.msra.mxu0 0.0
    %1794 = vmatprep.subr.mxu0 0.0
    %1795 = vmatpush2.msra.mxu0 0.0
    %1796 = vmatprep.subr.mxu0 0.0
    %1797 = vmatpush2.msra.mxu0 0.0
    %1798 = vmatprep.subr.mxu0 0.0
    %1799 = vmatpush2.msra.mxu0 0.0
    %1800 = vmatprep.subr.mxu0 0.0
    %1801 = vmatpush2.msra.mxu0 0.0
    %1802 = vmatprep.subr.mxu0 0.0
    %1803 = vmatpush2.msra.mxu0 0.0
    %1804 = vmatprep.subr.mxu0 0.0
    %1805 = vmatpush2.msra.mxu0 0.0
    %1806 = vmatprep.subr.mxu0 0.0
    %1807 = vmatpush2.msra.mxu0 0.0
    %1808 = vmatprep.mubr.f32.mxu0 0.0
    %1809 = vmatmul.mubr.f32.gmra.mxu0 %v1742
    %v1810 = vpop.f32.mrf.mxu0
    %v1811 = vadd.f32 %v230, %v1810
    %v1812 = vpop.f32.mrf.mxu0
    %1813 = vdwg.mxu0
    %s1814 = scalar_lea.vmem %s15, 32
    %1815 = vst [vmem:[%s1814] sm:$0xff] %v1811
    %v1816 = vsel %vm235, %v1811, -1e+30
    %1817 = vmax.xlane.f32.xlu0 %v1816
    %v1818 = vpop.xlane.xlu0 %1817
    %vm1819 = vcmp.eq.f32.partialorder %v1816, %v1818
    %vm1820 = vmand %vm1819, %vm235
    %v1821 = vsel %vm1820, %v234, 128.0
    %1822 = vmin.xlane.f32.xlu0 %v1821
    %v1823 = vpop.xlane.xlu0 %1822
    %vm1824 = vcmp.eq.f32.partialorder %v234, %v1823
    %v1825 = vsel %vm1824, 1, 0
    %v1826 = vcvt.s32.f32 %v1825
    %s1827 = sld [smem:[#allocation3 + $0x4]]
    %p1828 = scmp.gt.s32.totalorder %s1827, 0
    %s1829 = scalar_select %p1828, 1, 0
    %s1830 = scvt.s32.f32 %s1829
    %s1831 = scalar_lea.vmem %s2, 32
    %v1832 = vld [vmem:[%s1831] sm:$0xff]
    %v1833 = vstv %s1830
    %v1834 = vmul.f32 %v1833, %v1832
    %s1835 = ssub.f32 1.0, %s1830
    %v1836 = vstv %s1835
    %v1837 = vmul.f32 %v1836, %v1826
    %v1838 = vadd.f32 %v1834, %v1837
    %v1839 = vmul.f32 %v1738, %v643
    %1841 = vrot.lane.b32.xlu0 %v1839, 32
    %v1842 = vpop.permute.xlu0 %1841
    %v1844 = vsel %vm97, %v1842, 0.0
    %1845 = vadd.xlane.f32.xlu0 %v1844
    %v1846 = vpop.xlane.xlu0 %1845
    %v1847 = vadd.f32 %v169, %v1846
    %v1848 = vadd.f32 %v170, %v1846
    %v1849 = vadd.f32 %v171, %v1846
    %v1850 = vadd.f32 %v172, %v1846
    %v1851 = vadd.f32 %v173, %v1846
    %v1852 = vadd.f32 %v174, %v1846
    %v1853 = vadd.f32 %v175, %v1846
    %v1854 = vadd.f32 %v176, %v1846
    %v1855 = vmax.f32 %v1847, 0.0
    %v1856 = vmax.f32 %v1848, 0.0
    %v1857 = vmax.f32 %v1849, 0.0
    %v1858 = vmax.f32 %v1850, 0.0
    %v1859 = vmax.f32 %v1851, 0.0
    %v1860 = vmax.f32 %v1852, 0.0
    %v1861 = vmax.f32 %v1853, 0.0
    %v1862 = vmax.f32 %v1854, 0.0
    %v1863 = vmax.f32 %v1855, %v1859
    %v1864 = vmax.f32 %v1856, %v1860
    %v1865 = vmax.f32 %v1857, %v1861
    %v1866 = vmax.f32 %v1858, %v1862
    %v1867 = vmax.f32 %v1863, %v1864
    %v1868 = vmax.f32 %v1865, %v1866
    %v1869 = vmax.f32 %v1867, %v1868
    %v1870 = vsub.f32 %v1855, %v1869
    %v1871 = vsub.f32 %v1856, %v1869
    %v1872 = vsub.f32 %v1857, %v1869
    %v1873 = vsub.f32 %v1858, %v1869
    %v1874 = vsub.f32 %v1859, %v1869
    %v1875 = vsub.f32 %v1860, %v1869
    %v1876 = vsub.f32 %v1861, %v1869
    %v1877 = vsub.f32 %v1862, %v1869
    %v1878 = vmul.f32 %v1870, 1.442695
    %v1879 = vpow.pop %v1878
    %v1880 = vmul.f32 %v1871, 1.442695
    %v1881 = vpow.pop %v1880
    %v1882 = vmul.f32 %v1872, 1.442695
    %v1883 = vpow.pop %v1882
    %v1884 = vmul.f32 %v1873, 1.442695
    %v1885 = vpow.pop %v1884
    %v1886 = vmul.f32 %v1874, 1.442695
    %v1887 = vpow.pop %v1886
    %v1888 = vmul.f32 %v1875, 1.442695
    %v1889 = vpow.pop %v1888
    %v1890 = vmul.f32 %v1876, 1.442695
    %v1891 = vpow.pop %v1890
    %v1892 = vmul.f32 %v1877, 1.442695
    %v1893 = vpow.pop %v1892
    %v1894 = vadd.f32 %v1879, %v1881
    %v1895 = vadd.f32 %v1894, %v1883
    %v1896 = vadd.f32 %v1895, %v1885
    %v1897 = vadd.f32 %v1896, %v1887
    %v1898 = vadd.f32 %v1897, %v1889
    %v1899 = vadd.f32 %v1898, %v1891
    %v1900 = vadd.f32 %v1899, %v1893
    %v1901 = vrcp.pop %v1900
    %v1902 = vmul.f32 %v1879, %v1901
    %v1903 = vmul.f32 %v1881, %v1901
    %v1904 = vmul.f32 %v1883, %v1901
    %v1905 = vmul.f32 %v1885, %v1901
    %v1906 = vmul.f32 %v1887, %v1901
    %v1907 = vmul.f32 %v1889, %v1901
    %v1908 = vmul.f32 %v1891, %v1901
    %v1909 = vmul.f32 %v1893, %v1901
    %v1910 = vmul.f32 %v1902, %v64
    %v1911 = vmul.f32 %v1903, %v65
    %v1912 = vmul.f32 %v1904, %v66
    %v1913 = vmul.f32 %v1905, %v67
    %v1914 = vmul.f32 %v1906, %v68
    %v1915 = vmul.f32 %v1907, %v69
    %v1916 = vmul.f32 %v1908, %v70
    %v1917 = vmul.f32 %v1909, %v71
    %v1918 = vsel %vm97, %v1910, 0.0
    %v1919 = vsel %vm97, %v1911, 0.0
    %v1920 = vadd.f32 %v1918, %v1919
    %v1921 = vsel %vm97, %v1912, 0.0
    %v1922 = vadd.f32 %v1920, %v1921
    %v1923 = vsel %vm97, %v1913, 0.0
    %v1924 = vadd.f32 %v1922, %v1923
    %v1925 = vsel %vm97, %v1914, 0.0
    %v1926 = vadd.f32 %v1924, %v1925
    %v1927 = vsel %vm97, %v1915, 0.0
    %v1928 = vadd.f32 %v1926, %v1927
    %v1929 = vsel %vm97, %v1916, 0.0
    %v1930 = vadd.f32 %v1928, %v1929
    %v1931 = vsel %vm97, %v1917, 0.0
    %v1932 = vadd.f32 %v1930, %v1931
    %v1933 = vmul.f32 %v1902, %v72
    %v1934 = vmul.f32 %v1903, %v73
    %v1935 = vmul.f32 %v1904, %v74
    %v1936 = vmul.f32 %v1905, %v75
    %v1937 = vmul.f32 %v1906, %v76
    %v1938 = vmul.f32 %v1907, %v77
    %v1939 = vmul.f32 %v1908, %v78
    %v1940 = vmul.f32 %v1909, %v79
    %v1941 = vsel %vm97, %v1933, 0.0
    %v1942 = vsel %vm97, %v1934, 0.0
    %v1943 = vadd.f32 %v1941, %v1942
    %v1944 = vsel %vm97, %v1935, 0.0
    %v1945 = vadd.f32 %v1943, %v1944
    %v1946 = vsel %vm97, %v1936, 0.0
    %v1947 = vadd.f32 %v1945, %v1946
    %v1948 = vsel %vm97, %v1937, 0.0
    %v1949 = vadd.f32 %v1947, %v1948
    %v1950 = vsel %vm97, %v1938, 0.0
    %v1951 = vadd.f32 %v1949, %v1950
    %v1952 = vsel %vm97, %v1939, 0.0
    %v1953 = vadd.f32 %v1951, %v1952
    %v1954 = vsel %vm97, %v1940, 0.0
    %v1955 = vadd.f32 %v1953, %v1954
    %1956 = vmatprep.subr.mxu0 0.0
    %1957 = vmatpush1.msra.mxu0 %v199
    %1958 = vmatprep.subr.mxu0 0.0
    %1959 = vmatpush1.msra.mxu0 %v198
    %1960 = vmatprep.subr.mxu0 0.0
    %1961 = vmatpush1.msra.mxu0 %v197
    %1962 = vmatprep.subr.mxu0 0.0
    %1963 = vmatpush1.msra.mxu0 %v196
    %1964 = vmatprep.subr.mxu0 0.0
    %1965 = vmatpush1.msra.mxu0 %v195
    %1966 = vmatprep.subr.mxu0 0.0
    %1967 = vmatpush1.msra.mxu0 %v194
    %1968 = vmatprep.subr.mxu0 0.0
    %1969 = vmatpush1.msra.mxu0 %v193
    %1970 = vmatprep.subr.mxu0 0.0
    %1971 = vmatpush1.msra.mxu0 %v192
    %1972 = vmatprep.subr.mxu0 0.0
    %1973 = vmatpush1.msra.mxu0 %v191
    %1974 = vmatprep.subr.mxu0 0.0
    %1975 = vmatpush1.msra.mxu0 %v190
    %1976 = vmatprep.subr.mxu0 0.0
    %1977 = vmatpush1.msra.mxu0 %v189
    %1978 = vmatprep.subr.mxu0 0.0
    %1979 = vmatpush1.msra.mxu0 %v188
    %1980 = vmatprep.subr.mxu0 0.0
    %1981 = vmatpush1.msra.mxu0 %v187
    %1982 = vmatprep.subr.mxu0 0.0
    %1983 = vmatpush1.msra.mxu0 %v186
    %1984 = vmatprep.subr.mxu0 0.0
    %1985 = vmatpush1.msra.mxu0 %v185
    %1986 = vmatprep.subr.mxu0 0.0
    %1987 = vmatpush1.msra.mxu0 %v184
    %1988 = vmatprep.subr.mxu0 0.0
    %1989 = vmatpush2.msra.mxu0 0.0
    %1990 = vmatprep.subr.mxu0 0.0
    %1991 = vmatpush2.msra.mxu0 0.0
    %1992 = vmatprep.subr.mxu0 0.0
    %1993 = vmatpush2.msra.mxu0 0.0
    %1994 = vmatprep.subr.mxu0 0.0
    %1995 = vmatpush2.msra.mxu0 0.0
    %1996 = vmatprep.subr.mxu0 0.0
    %1997 = vmatpush2.msra.mxu0 0.0
    %1998 = vmatprep.subr.mxu0 0.0
    %1999 = vmatpush2.msra.mxu0 0.0
    %2000 = vmatprep.subr.mxu0 0.0
    %2001 = vmatpush2.msra.mxu0 0.0
    %2002 = vmatprep.subr.mxu0 0.0
    %2003 = vmatpush2.msra.mxu0 0.0
    %2004 = vmatprep.subr.mxu0 0.0
    %2005 = vmatpush2.msra.mxu0 0.0
    %2006 = vmatprep.subr.mxu0 0.0
    %2007 = vmatpush2.msra.mxu0 0.0
    %2008 = vmatprep.subr.mxu0 0.0
    %2009 = vmatpush2.msra.mxu0 0.0
    %2010 = vmatprep.subr.mxu0 0.0
    %2011 = vmatpush2.msra.mxu0 0.0
    %2012 = vmatprep.subr.mxu0 0.0
    %2013 = vmatpush2.msra.mxu0 0.0
    %2014 = vmatprep.subr.mxu0 0.0
    %2015 = vmatpush2.msra.mxu0 0.0
    %2016 = vmatprep.subr.mxu0 0.0
    %2017 = vmatpush2.msra.mxu0 0.0
    %2018 = vmatprep.subr.mxu0 0.0
    %2019 = vmatpush2.msra.mxu0 0.0
    %2020 = vmatprep.mubr.f32.mxu0 0.0
    %2021 = vmatmul.mubr.f32.gmra.mxu0 %v1838
    %v2022 = vpop.f32.mrf.mxu0
    %v2023 = vadd.f32 0.0, %v2022
    %v2024 = vpop.f32.mrf.mxu0
    %2025 = vdwg.mxu0
    %2027 = vrot.lane.b32.xlu0 %v1955, 32
    %v2028 = vpop.permute.xlu0 %2027
    %2031 = vrot.lane.b32.xlu0 %v2023, 64
    %v2032 = vpop.permute.xlu0 %2031
    %2034 = vrot.lane.b32.xlu0 %v1738, 112
    %v2035 = vpop.permute.xlu0 %2034
    %v2037 = vsel %vm97, %v1932, %v2028
    %v2038 = vsel %vm436, %v2037, %v2032
    %v2039 = vsel %vm438, %v2038, %v2035
    %v2041 = vsel %vm440, %v2039, 0
    %2043 = vmatprep.subr.mxu0 0.0
    %2044 = vmatpush1.msra.mxu0 0.0
    %2045 = vmatprep.subr.mxu0 0.0
    %2046 = vmatpush1.msra.mxu0 0.0
    %2047 = vmatprep.subr.mxu0 0.0
    %2048 = vmatpush1.msra.mxu0 %v213
    %2049 = vmatprep.subr.mxu0 0.0
    %2050 = vmatpush1.msra.mxu0 %v212
    %2051 = vmatprep.subr.mxu0 0.0
    %2052 = vmatpush1.msra.mxu0 %v211
    %2053 = vmatprep.subr.mxu0 0.0
    %2054 = vmatpush1.msra.mxu0 %v210
    %2055 = vmatprep.subr.mxu0 0.0
    %2056 = vmatpush1.msra.mxu0 %v209
    %2057 = vmatprep.subr.mxu0 0.0
    %2058 = vmatpush1.msra.mxu0 %v208
    %2059 = vmatprep.subr.mxu0 0.0
    %2060 = vmatpush1.msra.mxu0 %v207
    %2061 = vmatprep.subr.mxu0 0.0
    %2062 = vmatpush1.msra.mxu0 %v206
    %2063 = vmatprep.subr.mxu0 0.0
    %2064 = vmatpush1.msra.mxu0 %v205
    %2065 = vmatprep.subr.mxu0 0.0
    %2066 = vmatpush1.msra.mxu0 %v204
    %2067 = vmatprep.subr.mxu0 0.0
    %2068 = vmatpush1.msra.mxu0 %v203
    %2069 = vmatprep.subr.mxu0 0.0
    %2070 = vmatpush1.msra.mxu0 %v202
    %2071 = vmatprep.subr.mxu0 0.0
    %2072 = vmatpush1.msra.mxu0 %v201
    %2073 = vmatprep.subr.mxu0 0.0
    %2074 = vmatpush1.msra.mxu0 %v200
    %2075 = vmatprep.subr.mxu0 0.0
    %2076 = vmatpush2.msra.mxu0 0.0
    %2077 = vmatprep.subr.mxu0 0.0
    %2078 = vmatpush2.msra.mxu0 0.0
    %2079 = vmatprep.subr.mxu0 0.0
    %2080 = vmatpush2.msra.mxu0 0.0
    %2081 = vmatprep.subr.mxu0 0.0
    %2082 = vmatpush2.msra.mxu0 0.0
    %2083 = vmatprep.subr.mxu0 0.0
    %2084 = vmatpush2.msra.mxu0 0.0
    %2085 = vmatprep.subr.mxu0 0.0
    %2086 = vmatpush2.msra.mxu0 0.0
    %2087 = vmatprep.subr.mxu0 0.0
    %2088 = vmatpush2.msra.mxu0 0.0
    %2089 = vmatprep.subr.mxu0 0.0
    %2090 = vmatpush2.msra.mxu0 0.0
    %2091 = vmatprep.subr.mxu0 0.0
    %2092 = vmatpush2.msra.mxu0 0.0
    %2093 = vmatprep.subr.mxu0 0.0
    %2094 = vmatpush2.msra.mxu0 0.0
    %2095 = vmatprep.subr.mxu0 0.0
    %2096 = vmatpush2.msra.mxu0 0.0
    %2097 = vmatprep.subr.mxu0 0.0
    %2098 = vmatpush2.msra.mxu0 0.0
    %2099 = vmatprep.subr.mxu0 0.0
    %2100 = vmatpush2.msra.mxu0 0.0
    %2101 = vmatprep.subr.mxu0 0.0
    %2102 = vmatpush2.msra.mxu0 0.0
    %2103 = vmatprep.subr.mxu0 0.0
    %2104 = vmatpush2.msra.mxu0 0.0
    %2105 = vmatprep.subr.mxu0 0.0
    %2106 = vmatpush2.msra.mxu0 0.0
    %2107 = vmatprep.mubr.f32.mxu0 0.0
    %2108 = vmatmul.mubr.f32.gmra.mxu0 %v2041
    %v2109 = vpop.f32.mrf.mxu0
    %v2110 = vadd.f32 %v219, %v2109
    %v2111 = vpop.f32.mrf.mxu0
    %2112 = vdwg.mxu0
    %v2113 = vxor.u32 %v2110, 2147483648
    %v2114 = vmul.f32 %v2113, 1.442695
    %v2115 = vpow.pop %v2114
    %v2116 = vadd.f32 %v2115, 1.0
    %v2117 = vrcp.pop %v2116
    %v2118 = vmul.f32 1.0, %v2117
    %v2119 = vtanh.pop %v2110
    %v2120 = vmul.f32 %v2118, %v1732
    %2122 = vrot.lane.b32.xlu0 %v2119, 64
    %v2123 = vpop.permute.xlu0 %2122
    %v2125 = vmul.f32 %v2118, %v2123
    %2127 = vrot.lane.b32.xlu0 %v2125, 32
    %v2128 = vpop.permute.xlu0 %2127
    %v2130 = vadd.f32 %v2120, %v2128
    %v2131 = vtanh.pop %v2130
    %2133 = vrot.lane.b32.xlu0 %v2131, 64
    %v2134 = vpop.permute.xlu0 %2133
    %v2136 = vmul.f32 %v2118, %v2134
    %2138 = vrot.lane.b32.xlu0 %v2136, 32
    %v2139 = vpop.permute.xlu0 %2138
    %v2140 = vsel %vm97, %v2139, 0
    %2142 = vmatprep.subr.mxu0 0.0
    %2143 = vmatpush1.msra.mxu0 0.0
    %2144 = vmatprep.subr.mxu0 0.0
    %2145 = vmatpush1.msra.mxu0 0.0
    %2146 = vmatprep.subr.mxu0 0.0
    %2147 = vmatpush1.msra.mxu0 0.0
    %2148 = vmatprep.subr.mxu0 0.0
    %2149 = vmatpush1.msra.mxu0 0.0
    %2150 = vmatprep.subr.mxu0 0.0
    %2151 = vmatpush1.msra.mxu0 0.0
    %2152 = vmatprep.subr.mxu0 0.0
    %2153 = vmatpush1.msra.mxu0 0.0
    %2154 = vmatprep.subr.mxu0 0.0
    %2155 = vmatpush1.msra.mxu0 0.0
    %2156 = vmatprep.subr.mxu0 0.0
    %2157 = vmatpush1.msra.mxu0 0.0
    %2158 = vmatprep.subr.mxu0 0.0
    %2159 = vmatpush1.msra.mxu0 0.0
    %2160 = vmatprep.subr.mxu0 0.0
    %2161 = vmatpush1.msra.mxu0 0.0
    %2162 = vmatprep.subr.mxu0 0.0
    %2163 = vmatpush1.msra.mxu0 0.0
    %2164 = vmatprep.subr.mxu0 0.0
    %2165 = vmatpush1.msra.mxu0 0.0
    %2166 = vmatprep.subr.mxu0 0.0
    %2167 = vmatpush1.msra.mxu0 %v224
    %2168 = vmatprep.subr.mxu0 0.0
    %2169 = vmatpush1.msra.mxu0 %v223
    %2170 = vmatprep.subr.mxu0 0.0
    %2171 = vmatpush1.msra.mxu0 %v222
    %2172 = vmatprep.subr.mxu0 0.0
    %2173 = vmatpush1.msra.mxu0 %v221
    %2174 = vmatprep.subr.mxu0 0.0
    %2175 = vmatpush2.msra.mxu0 0.0
    %2176 = vmatprep.subr.mxu0 0.0
    %2177 = vmatpush2.msra.mxu0 0.0
    %2178 = vmatprep.subr.mxu0 0.0
    %2179 = vmatpush2.msra.mxu0 0.0
    %2180 = vmatprep.subr.mxu0 0.0
    %2181 = vmatpush2.msra.mxu0 0.0
    %2182 = vmatprep.subr.mxu0 0.0
    %2183 = vmatpush2.msra.mxu0 0.0
    %2184 = vmatprep.subr.mxu0 0.0
    %2185 = vmatpush2.msra.mxu0 0.0
    %2186 = vmatprep.subr.mxu0 0.0
    %2187 = vmatpush2.msra.mxu0 0.0
    %2188 = vmatprep.subr.mxu0 0.0
    %2189 = vmatpush2.msra.mxu0 0.0
    %2190 = vmatprep.subr.mxu0 0.0
    %2191 = vmatpush2.msra.mxu0 0.0
    %2192 = vmatprep.subr.mxu0 0.0
    %2193 = vmatpush2.msra.mxu0 0.0
    %2194 = vmatprep.subr.mxu0 0.0
    %2195 = vmatpush2.msra.mxu0 0.0
    %2196 = vmatprep.subr.mxu0 0.0
    %2197 = vmatpush2.msra.mxu0 0.0
    %2198 = vmatprep.subr.mxu0 0.0
    %2199 = vmatpush2.msra.mxu0 0.0
    %2200 = vmatprep.subr.mxu0 0.0
    %2201 = vmatpush2.msra.mxu0 0.0
    %2202 = vmatprep.subr.mxu0 0.0
    %2203 = vmatpush2.msra.mxu0 0.0
    %2204 = vmatprep.subr.mxu0 0.0
    %2205 = vmatpush2.msra.mxu0 0.0
    %2206 = vmatprep.mubr.f32.mxu0 0.0
    %2207 = vmatmul.mubr.f32.gmra.mxu0 %v2140
    %v2208 = vpop.f32.mrf.mxu0
    %v2209 = vadd.f32 %v230, %v2208
    %v2210 = vpop.f32.mrf.mxu0
    %2211 = vdwg.mxu0
    %s2212 = scalar_lea.vmem %s15, 40
    %2213 = vst [vmem:[%s2212] sm:$0xff] %v2209
    // Predicated region
    $region66: #{seq2seq_forward.3} parent=1 // pred_check
      _
    $region67: #{seq2seq_forward.3} parent=1 // pred_check_branch
      %2215 = sbr.rel (0) target = $region69
    $region68: #{seq2seq_forward.3} parent=1 // pred_region
      _
    $region69: #{seq2seq_forward.3} parent=1 // pred_fallthru
      _
    // Predicated region
    $region70: #{seq2seq_forward.3} parent=1 // pred_check
      _
    $region71: #{seq2seq_forward.3} parent=1 // pred_check_branch
      %2217 = sbr.rel (0) target = $region73
    $region72: #{seq2seq_forward.3} parent=1 // pred_region
      _
    $region73: #{seq2seq_forward.3} parent=1 // pred_fallthru
      _
    %2218 = vsyncpa [#allocation4], 1

</llo_original>
